<compile_context>
chip_gen: v7x
topology: tpu7x:2x2x1
jax: 0.10.0
libtpu: 0.0.40
codegen_flags: <defaults>
</compile_context>

<pallas_src>
import jax
import jax.numpy as jnp
from jax.experimental import pallas as pl
from jax.experimental.pallas import tpu as pltpu


def _round_up(x, m):
    return ((x + m - 1) // m) * m


def _encoder_gru_kernel(tok_ref, emb_ref, h0_ref, w_ref, b_ref, out_ref, lhs_ref):
    """Whole encoder pass in one invocation: in-kernel time loop, hidden in vregs."""
    T = out_ref.shape[0]
    Hp = h0_ref.shape[-1]

    def step(t, h):
        tok = tok_ref[t]                              # scalar token id from SMEM
        # Fixed 2-half LHS buffer: row-packed [x | h], no per-step concat.
        lhs_ref[:, :Hp] = emb_ref[tok]                # (1, Hp) bf16 embedded token
        lhs_ref[:, Hp:] = h.astype(jnp.bfloat16)      # carried hidden (bf16 for MXU)
        # One MXU call: (1, 2Hp) @ (2Hp, 4Hp) -> (1, 4Hp) f32 accumulate.
        g = jnp.dot(lhs_ref[...], w_ref[...],
                    preferred_element_type=jnp.float32) + b_ref[...]
        r = jax.nn.sigmoid(g[:, :Hp])                 # pre_r already = x-part + h-part
        z = jax.nn.sigmoid(g[:, Hp:2 * Hp])
        n = jnp.tanh(g[:, 2 * Hp:3 * Hp] + r * g[:, 3 * Hp:])
        h_new = (1.0 - z) * n + z * h
        out_ref[t] = h_new                            # VMEM write; HBM writeback once at end
        return h_new

    # TODO(synk): on v6e/v7x the bf16 RHS could additionally be pinned in MXU
    # weight staging (pltpu.matmul_push_rhs once before the loop); kept as
    # jnp.dot for portability / lowering robustness.
    _ = jax.lax.fori_loop(0, T, step, h0_ref[...], unroll=True)


def encoder_rnn_forward(tokens, hidden, params):
    """tokens: (T,) int32 token ids; hidden: (1, 1, H) f32.

    Returns (outputs (T, 1, H), hidden (1, 1, H)).  With T == 1 this matches
    PyTorch EncoderRNN.forward(input, hidden) exactly (output == hidden for a
    single-layer GRU step)."""
    H = params["hidden_size"]
    Hp = params["hidden_pad"]
    V = params["input_size"]
    T = int(tokens.shape[0])

    # Zero-padded lanes of h0 are required for the padded-lane-stays-zero invariant.
    h0 = jnp.zeros((1, Hp), jnp.float32).at[:, :H].set(
        hidden.reshape(1, H).astype(jnp.float32))

    grid_spec = pltpu.PrefetchScalarGridSpec(
        num_scalar_prefetch=1,          # token ids -> SMEM, read inside the loop
        grid=(1,),
        in_specs=[
            # Whole padded embedding table, VMEM-resident for the entire pass.
            pl.BlockSpec((V, 1, Hp), lambda i, tok: (0, 0, 0)),
            # Initial hidden.
            pl.BlockSpec((1, Hp), lambda i, tok: (0, 0)),
            # Fused GRU weights / biases, VMEM-resident.
            pl.BlockSpec((2 * Hp, 4 * Hp), lambda i, tok: (0, 0)),
            pl.BlockSpec((1, 4 * Hp), lambda i, tok: (0, 0)),
        ],
        out_specs=pl.BlockSpec((T, 1, Hp), lambda i, tok: (0, 0, 0)),
        scratch_shapes=[pltpu.VMEM((1, 2 * Hp), jnp.bfloat16)],   # [x | h] LHS buffer
    )

    out = pl.pallas_call(
        _encoder_gru_kernel,
        out_shape=jax.ShapeDtypeStruct((T, 1, Hp), jnp.float32),
        grid_spec=grid_spec,
        compiler_params=pltpu.CompilerParams(dimension_semantics=("arbitrary",)),
    )(tokens.astype(jnp.int32), params["embedding_pad"], h0,
      params["w_cat"], params["b_cat"])

    outputs = out[:, :, :H]                       # strip lane padding
    hidden_new = outputs[T - 1].reshape(1, 1, H)  # final hidden == last output
    return outputs, hidden_new


def init_params(key, input_size, hidden_size):
    H = hidden_size
    Hp = _round_up(H, 128)
    ks = jax.random.split(key, 5)
    bound = 1.0 / jnp.sqrt(jnp.float32(H))
    u = lambda k, shape: jax.random.uniform(k, shape, jnp.float32, -bound, bound)

    # Canonical module parameters.  Weights / embedding are bf16-quantized once
    # here so the kernel's bf16-resident copies and the f32 reference share the
    # exact same values; biases stay f32 (added post-matmul in f32).
    q = lambda a: a.astype(jnp.bfloat16).astype(jnp.float32)
    embedding = q(jax.random.normal(ks[0], (input_size, H), jnp.float32))  # nn.Embedding
    w_ih = q(u(ks[1], (3 * H, H)))   # torch weight_ih_l0, rows stacked (r, z, n)
    w_hh = q(u(ks[2], (3 * H, H)))   # torch weight_hh_l0
    b_ih = u(ks[3], (3 * H,))
    b_hh = u(ks[4], (3 * H,))

    # Lane-padded bf16 embedding table as (V, 1, Hp): each gathered row is a
    # lane-dense (1, Hp) tile with zeros beyond H.
    emb_pad = (jnp.zeros((input_size, 1, Hp), jnp.float32)
               .at[:, 0, :H].set(embedding).astype(jnp.bfloat16))

    # Fused, pre-transposed, zero-padded RHS (2Hp, 4Hp) and lane-dense bias
    # (1, 4Hp).  LHS is [x | h]; result columns are [pre_r | pre_z | gi_n | gh_n]:
    #   cols [0,Hp)    : Wir^T in x-rows and Whr^T in h-rows  (sums fuse) + bir+bhr
    #   cols [Hp,2Hp)  : Wiz^T / Whz^T                        + biz+bhz
    #   cols [2Hp,3Hp) : Win^T only (x-rows)                  + bin
    #   cols [3Hp,4Hp) : Whn^T only (h-rows)                  + bhn
    # All padded rows/cols are zero (padded-lane invariant).
    w_cat = jnp.zeros((2 * Hp, 4 * Hp), jnp.float32)
    b_cat = jnp.zeros((1, 4 * Hp), jnp.float32)
    wi = lambda g: w_ih[g * H:(g + 1) * H].T
    wh = lambda g: w_hh[g * H:(g + 1) * H].T
    for g in range(2):  # r, z gates: x-part and h-part share output columns
        w_cat = w_cat.at[:H, g * Hp: g * Hp + H].set(wi(g))
        w_cat = w_cat.at[Hp:Hp + H, g * Hp: g * Hp + H].set(wh(g))
        b_cat = b_cat.at[0, g * Hp: g * Hp + H].set(
            b_ih[g * H:(g + 1) * H] + b_hh[g * H:(g + 1) * H])
    # n gate: gi_n and gh_n must stay separate (bhn sits inside r * (...)).
    w_cat = w_cat.at[:H, 2 * Hp: 2 * Hp + H].set(wi(2))
    w_cat = w_cat.at[Hp:Hp + H, 3 * Hp: 3 * Hp + H].set(wh(2))
    b_cat = b_cat.at[0, 2 * Hp: 2 * Hp + H].set(b_ih[2 * H:3 * H])
    b_cat = b_cat.at[0, 3 * Hp: 3 * Hp + H].set(b_hh[2 * H:3 * H])

    # TODO(synk): batching independent sequences along the LHS sublane dim is
    # the only lever that raises MXU utilization / uses v7x's 2nd TC; out of
    # scope for this module's single-sequence forward() contract.
    return {
        "hidden_size": H,
        "hidden_pad": Hp,
        "input_size": input_size,
        "embedding": embedding,
        "w_ih": w_ih, "w_hh": w_hh, "b_ih": b_ih, "b_hh": b_hh,
        "embedding_pad": emb_pad,
        "w_cat": w_cat.astype(jnp.bfloat16),
        "b_cat": b_cat,
    }


# ---------------- pure-JAX reference mirroring torch.nn.GRU -----------------
def _reference_step(token, h, p):
    H = p["hidden_size"]
    x = p["embedding"][token].reshape(1, H)
    gi = x @ p["w_ih"].T + p["b_ih"]     # (1, 3H) in (r, z, n) order
    gh = h @ p["w_hh"].T + p["b_hh"]
    r = jax.nn.sigmoid(gi[:, :H] + gh[:, :H])
    z = jax.nn.sigmoid(gi[:, H:2 * H] + gh[:, H:2 * H])
    n = jnp.tanh(gi[:, 2 * H:] + r * gh[:, 2 * H:])
    return (1.0 - z) * n + z * h


def _reference_forward(tokens, hidden, p):
    H = p["hidden_size"]
    h = hidden.reshape(1, H)
    outs = []
    for t in range(int(tokens.shape[0])):
        h = _reference_step(int(tokens[t]), h, p)
        outs.append(h)
    return jnp.stack(outs).reshape(-1, 1, H), h.reshape(1, 1, H)


if __name__ == "__main__":
    input_size = 64     # vocab
    hidden_size = 32
    seq_len = 8

    key = jax.random.PRNGKey(0)
    pkey, tkey, hkey = jax.random.split(key, 3)
    params = init_params(pkey, input_size, hidden_size)

    tokens = jax.random.randint(tkey, (seq_len,), 0, input_size, jnp.int32)
    hidden0 = jax.random.normal(hkey, (1, 1, hidden_size), jnp.float32)

    # Multi-step encoder pass: whole token sequence inside one pallas_call.
    outputs, hidden_n = encoder_rnn_forward(tokens, hidden0, params)
    outputs = jax.block_until_ready(outputs)
    hidden_n = jax.block_until_ready(hidden_n)

    ref_out, ref_h = _reference_forward(tokens, hidden0, params)
    assert outputs.shape == (seq_len, 1, hidden_size)
    assert hidden_n.shape == (1, 1, hidden_size)
    assert jnp.allclose(outputs, ref_out, atol=1e-2, rtol=1e-2)
    assert jnp.allclose(hidden_n, ref_h, atol=1e-2, rtol=1e-2)

    # Single-token call == the original EncoderRNN.forward(input, hidden).
    out1, h1 = encoder_rnn_forward(tokens[:1], hidden0, params)
    out1 = jax.block_until_ready(out1)
    h1 = jax.block_until_ready(h1)
    ref_h1 = _reference_step(int(tokens[0]), hidden0.reshape(1, hidden_size), params)
    assert out1.shape == (1, 1, hidden_size) and h1.shape == (1, 1, hidden_size)
    assert jnp.allclose(out1.reshape(1, hidden_size), ref_h1, atol=1e-2, rtol=1e-2)
    assert jnp.allclose(h1.reshape(1, hidden_size), ref_h1, atol=1e-2, rtol=1e-2)

    print("KERNEL_OK")
</pallas_src>

<mosaic_0001>
module attributes {stable_mosaic.version = 11 : i64} {
  func.func @_encoder_gru_kernel(%arg0: i32, %arg1: memref<8xi32, #tpu.memory_space<smem>>, %arg2: memref<64x1x128xbf16, #tpu.memory_space<vmem>>, %arg3: memref<1x128xf32, #tpu.memory_space<vmem>>, %arg4: memref<256x512xbf16, #tpu.memory_space<vmem>>, %arg5: memref<1x512xf32, #tpu.memory_space<vmem>>, %arg6: memref<8x1x128xf32, #tpu.memory_space<vmem>>, %arg7: memref<1x256xbf16, #tpu.memory_space<vmem>>) attributes {dimension_semantics = [#tpu.dimension_semantics<arbitrary>], iteration_bounds = array<i64: 1>, scalar_prefetch = 1 : i64, scratch_operands = 1 : i64, tpu.core_type = #tpu.core_type<tc>, window_params = [{pipeline_mode = #tpu.pipeline_mode<synchronous>, transform_indices = @transform_0, window_bounds = array<i64: 64, 1, 128>}, {pipeline_mode = #tpu.pipeline_mode<synchronous>, transform_indices = @transform_1, window_bounds = array<i64: 1, 128>}, {pipeline_mode = #tpu.pipeline_mode<synchronous>, transform_indices = @transform_2, window_bounds = array<i64: 256, 512>}, {pipeline_mode = #tpu.pipeline_mode<synchronous>, transform_indices = @transform_3, window_bounds = array<i64: 1, 512>}, {pipeline_mode = #tpu.pipeline_mode<synchronous>, transform_indices = @transform_4, window_bounds = array<i64: 8, 1, 128>}]} {
    %c0 = arith.constant 0 : index
    %c0_0 = arith.constant 0 : index
    %0 = vector.load %arg3[%c0, %c0_0] : memref<1x128xf32, #tpu.memory_space<vmem>>, vector<1x128xf32>
    %c0_i32 = arith.constant 0 : i32
    %1 = arith.index_cast %c0_i32 : i32 to index
    %2 = memref.load %arg1[%1] : memref<8xi32, #tpu.memory_space<smem>>
    %3 = arith.index_cast %2 : i32 to index
    %c0_1 = arith.constant 0 : index
    %c0_2 = arith.constant 0 : index
    %4 = vector.load %arg2[%3, %c0_1, %c0_2] : memref<64x1x128xbf16, #tpu.memory_space<vmem>>, vector<1x1x128xbf16>
    %5 = vector.shape_cast %4 : vector<1x1x128xbf16> to vector<1x128xbf16>
    %c0_3 = arith.constant 0 : index
    %c0_4 = arith.constant 0 : index
    %6 = vector.load %arg7[%c0_3, %c0_4] : memref<1x256xbf16, #tpu.memory_space<vmem>>, vector<1x128xbf16>
    tpu.vector_store %arg7[%c0_3, %c0_4], %5 {strides = array<i32>} : memref<1x256xbf16, #tpu.memory_space<vmem>>, vector<1x128xbf16>,
    %7 = arith.truncf %0 : vector<1x128xf32> to vector<1x128xbf16>
    %c0_5 = arith.constant 0 : index
    %c128 = arith.constant 128 : index
    %8 = vector.load %arg7[%c0_5, %c128] : memref<1x256xbf16, #tpu.memory_space<vmem>>, vector<1x128xbf16>
    tpu.vector_store %arg7[%c0_5, %c128], %7 {strides = array<i32>} : memref<1x256xbf16, #tpu.memory_space<vmem>>, vector<1x128xbf16>,
    %c0_6 = arith.constant 0 : index
    %c0_7 = arith.constant 0 : index
    %9 = vector.load %arg7[%c0_6, %c0_7] : memref<1x256xbf16, #tpu.memory_space<vmem>>, vector<1x256xbf16>
    %c0_8 = arith.constant 0 : index
    %c0_9 = arith.constant 0 : index
    %10 = vector.load %arg4[%c0_8, %c0_9] : memref<256x512xbf16, #tpu.memory_space<vmem>>, vector<256x512xbf16>
    %cst = arith.constant dense<0.000000e+00> : vector<1x512xf32>
    %11 = tpu.matmul %9, %10, %cst {dimension_numbers = #tpu.dot_dimension_numbers<[1], [0], [0], [1], [0, 0, 1, 1], [], []>} : vector<1x256xbf16>, vector<256x512xbf16>, vector<1x512xf32> -> vector<1x512xf32>
    %c0_10 = arith.constant 0 : index
    %c0_11 = arith.constant 0 : index
    %12 = vector.load %arg5[%c0_10, %c0_11] : memref<1x512xf32, #tpu.memory_space<vmem>>, vector<1x512xf32>
    %13 = arith.addf %11, %12 : vector<1x512xf32>
    %14 = vector.extract_strided_slice %13 {offsets = [0, 0], sizes = [1, 128], strides = [1, 1]} : vector<1x512xf32> to vector<1x128xf32>
    %15 = arith.negf %14 : vector<1x128xf32>
    %16 = math.exp %15 : vector<1x128xf32>
    %cst_12 = arith.constant 1.000000e+00 : f32
    %17 = vector.broadcast %cst_12 : f32 to vector<1x128xf32>
    %18 = arith.addf %17, %16 : vector<1x128xf32>
    %19 = arith.divf %17, %18 : vector<1x128xf32>
    %20 = vector.extract_strided_slice %13 {offsets = [0, 128], sizes = [1, 128], strides = [1, 1]} : vector<1x512xf32> to vector<1x128xf32>
    %21 = arith.negf %20 : vector<1x128xf32>
    %22 = math.exp %21 : vector<1x128xf32>
    %cst_13 = arith.constant 1.000000e+00 : f32
    %23 = vector.broadcast %cst_13 : f32 to vector<1x128xf32>
    %24 = arith.addf %23, %22 : vector<1x128xf32>
    %25 = arith.divf %23, %24 : vector<1x128xf32>
    %26 = vector.extract_strided_slice %13 {offsets = [0, 256], sizes = [1, 128], strides = [1, 1]} : vector<1x512xf32> to vector<1x128xf32>
    %27 = vector.extract_strided_slice %13 {offsets = [0, 384], sizes = [1, 128], strides = [1, 1]} : vector<1x512xf32> to vector<1x128xf32>
    %28 = arith.mulf %19, %27 : vector<1x128xf32>
    %29 = arith.addf %26, %28 : vector<1x128xf32>
    %30 = math.tanh %29 : vector<1x128xf32>
    %cst_14 = arith.constant 1.000000e+00 : f32
    %31 = vector.broadcast %cst_14 : f32 to vector<1x128xf32>
    %32 = arith.subf %31, %25 : vector<1x128xf32>
    %33 = arith.mulf %32, %30 : vector<1x128xf32>
    %34 = arith.mulf %25, %0 : vector<1x128xf32>
    %35 = arith.addf %33, %34 : vector<1x128xf32>
    %36 = arith.index_cast %c0_i32 : i32 to index
    %c0_15 = arith.constant 0 : index
    %c0_16 = arith.constant 0 : index
    %37 = vector.load %arg6[%36, %c0_15, %c0_16] : memref<8x1x128xf32, #tpu.memory_space<vmem>>, vector<1x1x128xf32>
    %38 = vector.shape_cast %37 : vector<1x1x128xf32> to vector<1x128xf32>
    %39 = vector.shape_cast %35 : vector<1x128xf32> to vector<1x1x128xf32>
    tpu.vector_store %arg6[%36, %c0_15, %c0_16], %39 {strides = array<i32>} : memref<8x1x128xf32, #tpu.memory_space<vmem>>, vector<1x1x128xf32>,
    %c1_i32 = arith.constant 1 : i32
    %40 = arith.index_cast %c1_i32 : i32 to index
    %41 = memref.load %arg1[%40] : memref<8xi32, #tpu.memory_space<smem>>
    %42 = arith.index_cast %41 : i32 to index
    %c0_17 = arith.constant 0 : index
    %c0_18 = arith.constant 0 : index
    %43 = vector.load %arg2[%42, %c0_17, %c0_18] : memref<64x1x128xbf16, #tpu.memory_space<vmem>>, vector<1x1x128xbf16>
    %44 = vector.shape_cast %43 : vector<1x1x128xbf16> to vector<1x128xbf16>
    %c0_19 = arith.constant 0 : index
    %c0_20 = arith.constant 0 : index
    %45 = vector.load %arg7[%c0_19, %c0_20] : memref<1x256xbf16, #tpu.memory_space<vmem>>, vector<1x128xbf16>
    tpu.vector_store %arg7[%c0_19, %c0_20], %44 {strides = array<i32>} : memref<1x256xbf16, #tpu.memory_space<vmem>>, vector<1x128xbf16>,
    %46 = arith.truncf %35 : vector<1x128xf32> to vector<1x128xbf16>
    %c0_21 = arith.constant 0 : index
    %c128_22 = arith.constant 128 : index
    %47 = vector.load %arg7[%c0_21, %c128_22] : memref<1x256xbf16, #tpu.memory_space<vmem>>, vector<1x128xbf16>
    tpu.vector_store %arg7[%c0_21, %c128_22], %46 {strides = array<i32>} : memref<1x256xbf16, #tpu.memory_space<vmem>>, vector<1x128xbf16>,
    %c0_23 = arith.constant 0 : index
    %c0_24 = arith.constant 0 : index
    %48 = vector.load %arg7[%c0_23, %c0_24] : memref<1x256xbf16, #tpu.memory_space<vmem>>, vector<1x256xbf16>
    %c0_25 = arith.constant 0 : index
    %c0_26 = arith.constant 0 : index
    %49 = vector.load %arg4[%c0_25, %c0_26] : memref<256x512xbf16, #tpu.memory_space<vmem>>, vector<256x512xbf16>
    %cst_27 = arith.constant dense<0.000000e+00> : vector<1x512xf32>
    %50 = tpu.matmul %48, %49, %cst_27 {dimension_numbers = #tpu.dot_dimension_numbers<[1], [0], [0], [1], [0, 0, 1, 1], [], []>} : vector<1x256xbf16>, vector<256x512xbf16>, vector<1x512xf32> -> vector<1x512xf32>
    %c0_28 = arith.constant 0 : index
    %c0_29 = arith.constant 0 : index
    %51 = vector.load %arg5[%c0_28, %c0_29] : memref<1x512xf32, #tpu.memory_space<vmem>>, vector<1x512xf32>
    %52 = arith.addf %50, %51 : vector<1x512xf32>
    %53 = vector.extract_strided_slice %52 {offsets = [0, 0], sizes = [1, 128], strides = [1, 1]} : vector<1x512xf32> to vector<1x128xf32>
    %54 = arith.negf %53 : vector<1x128xf32>
    %55 = math.exp %54 : vector<1x128xf32>
    %cst_30 = arith.constant 1.000000e+00 : f32
    %56 = vector.broadcast %cst_30 : f32 to vector<1x128xf32>
    %57 = arith.addf %56, %55 : vector<1x128xf32>
    %58 = arith.divf %56, %57 : vector<1x128xf32>
    %59 = vector.extract_strided_slice %52 {offsets = [0, 128], sizes = [1, 128], strides = [1, 1]} : vector<1x512xf32> to vector<1x128xf32>
    %60 = arith.negf %59 : vector<1x128xf32>
    %61 = math.exp %60 : vector<1x128xf32>
    %cst_31 = arith.constant 1.000000e+00 : f32
    %62 = vector.broadcast %cst_31 : f32 to vector<1x128xf32>
    %63 = arith.addf %62, %61 : vector<1x128xf32>
    %64 = arith.divf %62, %63 : vector<1x128xf32>
    %65 = vector.extract_strided_slice %52 {offsets = [0, 256], sizes = [1, 128], strides = [1, 1]} : vector<1x512xf32> to vector<1x128xf32>
    %66 = vector.extract_strided_slice %52 {offsets = [0, 384], sizes = [1, 128], strides = [1, 1]} : vector<1x512xf32> to vector<1x128xf32>
    %67 = arith.mulf %58, %66 : vector<1x128xf32>
    %68 = arith.addf %65, %67 : vector<1x128xf32>
    %69 = math.tanh %68 : vector<1x128xf32>
    %cst_32 = arith.constant 1.000000e+00 : f32
    %70 = vector.broadcast %cst_32 : f32 to vector<1x128xf32>
    %71 = arith.subf %70, %64 : vector<1x128xf32>
    %72 = arith.mulf %71, %69 : vector<1x128xf32>
    %73 = arith.mulf %64, %35 : vector<1x128xf32>
    %74 = arith.addf %72, %73 : vector<1x128xf32>
    %75 = arith.index_cast %c1_i32 : i32 to index
    %c0_33 = arith.constant 0 : index
    %c0_34 = arith.constant 0 : index
    %76 = vector.load %arg6[%75, %c0_33, %c0_34] : memref<8x1x128xf32, #tpu.memory_space<vmem>>, vector<1x1x128xf32>
    %77 = vector.shape_cast %76 : vector<1x1x128xf32> to vector<1x128xf32>
    %78 = vector.shape_cast %74 : vector<1x128xf32> to vector<1x1x128xf32>
    tpu.vector_store %arg6[%75, %c0_33, %c0_34], %78 {strides = array<i32>} : memref<8x1x128xf32, #tpu.memory_space<vmem>>, vector<1x1x128xf32>,
    %c2_i32 = arith.constant 2 : i32
    %79 = arith.index_cast %c2_i32 : i32 to index
    %80 = memref.load %arg1[%79] : memref<8xi32, #tpu.memory_space<smem>>
    %81 = arith.index_cast %80 : i32 to index
    %c0_35 = arith.constant 0 : index
    %c0_36 = arith.constant 0 : index
    %82 = vector.load %arg2[%81, %c0_35, %c0_36] : memref<64x1x128xbf16, #tpu.memory_space<vmem>>, vector<1x1x128xbf16>
    %83 = vector.shape_cast %82 : vector<1x1x128xbf16> to vector<1x128xbf16>
    %c0_37 = arith.constant 0 : index
    %c0_38 = arith.constant 0 : index
    %84 = vector.load %arg7[%c0_37, %c0_38] : memref<1x256xbf16, #tpu.memory_space<vmem>>, vector<1x128xbf16>
    tpu.vector_store %arg7[%c0_37, %c0_38], %83 {strides = array<i32>} : memref<1x256xbf16, #tpu.memory_space<vmem>>, vector<1x128xbf16>,
    %85 = arith.truncf %74 : vector<1x128xf32> to vector<1x128xbf16>
    %c0_39 = arith.constant 0 : index
    %c128_40 = arith.constant 128 : index
    %86 = vector.load %arg7[%c0_39, %c128_40] : memref<1x256xbf16, #tpu.memory_space<vmem>>, vector<1x128xbf16>
    tpu.vector_store %arg7[%c0_39, %c128_40], %85 {strides = array<i32>} : memref<1x256xbf16, #tpu.memory_space<vmem>>, vector<1x128xbf16>,
    %c0_41 = arith.constant 0 : index
    %c0_42 = arith.constant 0 : index
    %87 = vector.load %arg7[%c0_41, %c0_42] : memref<1x256xbf16, #tpu.memory_space<vmem>>, vector<1x256xbf16>
    %c0_43 = arith.constant 0 : index
    %c0_44 = arith.constant 0 : index
    %88 = vector.load %arg4[%c0_43, %c0_44] : memref<256x512xbf16, #tpu.memory_space<vmem>>, vector<256x512xbf16>
    %cst_45 = arith.constant dense<0.000000e+00> : vector<1x512xf32>
    %89 = tpu.matmul %87, %88, %cst_45 {dimension_numbers = #tpu.dot_dimension_numbers<[1], [0], [0], [1], [0, 0, 1, 1], [], []>} : vector<1x256xbf16>, vector<256x512xbf16>, vector<1x512xf32> -> vector<1x512xf32>
    %c0_46 = arith.constant 0 : index
    %c0_47 = arith.constant 0 : index
    %90 = vector.load %arg5[%c0_46, %c0_47] : memref<1x512xf32, #tpu.memory_space<vmem>>, vector<1x512xf32>
    %91 = arith.addf %89, %90 : vector<1x512xf32>
    %92 = vector.extract_strided_slice %91 {offsets = [0, 0], sizes = [1, 128], strides = [1, 1]} : vector<1x512xf32> to vector<1x128xf32>
    %93 = arith.negf %92 : vector<1x128xf32>
    %94 = math.exp %93 : vector<1x128xf32>
    %cst_48 = arith.constant 1.000000e+00 : f32
    %95 = vector.broadcast %cst_48 : f32 to vector<1x128xf32>
    %96 = arith.addf %95, %94 : vector<1x128xf32>
    %97 = arith.divf %95, %96 : vector<1x128xf32>
    %98 = vector.extract_strided_slice %91 {offsets = [0, 128], sizes = [1, 128], strides = [1, 1]} : vector<1x512xf32> to vector<1x128xf32>
    %99 = arith.negf %98 : vector<1x128xf32>
    %100 = math.exp %99 : vector<1x128xf32>
    %cst_49 = arith.constant 1.000000e+00 : f32
    %101 = vector.broadcast %cst_49 : f32 to vector<1x128xf32>
    %102 = arith.addf %101, %100 : vector<1x128xf32>
    %103 = arith.divf %101, %102 : vector<1x128xf32>
    %104 = vector.extract_strided_slice %91 {offsets = [0, 256], sizes = [1, 128], strides = [1, 1]} : vector<1x512xf32> to vector<1x128xf32>
    %105 = vector.extract_strided_slice %91 {offsets = [0, 384], sizes = [1, 128], strides = [1, 1]} : vector<1x512xf32> to vector<1x128xf32>
    %106 = arith.mulf %97, %105 : vector<1x128xf32>
    %107 = arith.addf %104, %106 : vector<1x128xf32>
    %108 = math.tanh %107 : vector<1x128xf32>
    %cst_50 = arith.constant 1.000000e+00 : f32
    %109 = vector.broadcast %cst_50 : f32 to vector<1x128xf32>
    %110 = arith.subf %109, %103 : vector<1x128xf32>
    %111 = arith.mulf %110, %108 : vector<1x128xf32>
    %112 = arith.mulf %103, %74 : vector<1x128xf32>
    %113 = arith.addf %111, %112 : vector<1x128xf32>
    %114 = arith.index_cast %c2_i32 : i32 to index
    %c0_51 = arith.constant 0 : index
    %c0_52 = arith.constant 0 : index
    %115 = vector.load %arg6[%114, %c0_51, %c0_52] : memref<8x1x128xf32, #tpu.memory_space<vmem>>, vector<1x1x128xf32>
    %116 = vector.shape_cast %115 : vector<1x1x128xf32> to vector<1x128xf32>
    %117 = vector.shape_cast %113 : vector<1x128xf32> to vector<1x1x128xf32>
    tpu.vector_store %arg6[%114, %c0_51, %c0_52], %117 {strides = array<i32>} : memref<8x1x128xf32, #tpu.memory_space<vmem>>, vector<1x1x128xf32>,
    %c3_i32 = arith.constant 3 : i32
    %118 = arith.index_cast %c3_i32 : i32 to index
    %119 = memref.load %arg1[%118] : memref<8xi32, #tpu.memory_space<smem>>
    %120 = arith.index_cast %119 : i32 to index
    %c0_53 = arith.constant 0 : index
    %c0_54 = arith.constant 0 : index
    %121 = vector.load %arg2[%120, %c0_53, %c0_54] : memref<64x1x128xbf16, #tpu.memory_space<vmem>>, vector<1x1x128xbf16>
    %122 = vector.shape_cast %121 : vector<1x1x128xbf16> to vector<1x128xbf16>
    %c0_55 = arith.constant 0 : index
    %c0_56 = arith.constant 0 : index
    %123 = vector.load %arg7[%c0_55, %c0_56] : memref<1x256xbf16, #tpu.memory_space<vmem>>, vector<1x128xbf16>
    tpu.vector_store %arg7[%c0_55, %c0_56], %122 {strides = array<i32>} : memref<1x256xbf16, #tpu.memory_space<vmem>>, vector<1x128xbf16>,
    %124 = arith.truncf %113 : vector<1x128xf32> to vector<1x128xbf16>
    %c0_57 = arith.constant 0 : index
    %c128_58 = arith.constant 128 : index
    %125 = vector.load %arg7[%c0_57, %c128_58] : memref<1x256xbf16, #tpu.memory_space<vmem>>, vector<1x128xbf16>
    tpu.vector_store %arg7[%c0_57, %c128_58], %124 {strides = array<i32>} : memref<1x256xbf16, #tpu.memory_space<vmem>>, vector<1x128xbf16>,
    %c0_59 = arith.constant 0 : index
    %c0_60 = arith.constant 0 : index
    %126 = vector.load %arg7[%c0_59, %c0_60] : memref<1x256xbf16, #tpu.memory_space<vmem>>, vector<1x256xbf16>
    %c0_61 = arith.constant 0 : index
    %c0_62 = arith.constant 0 : index
    %127 = vector.load %arg4[%c0_61, %c0_62] : memref<256x512xbf16, #tpu.memory_space<vmem>>, vector<256x512xbf16>
    %cst_63 = arith.constant dense<0.000000e+00> : vector<1x512xf32>
    %128 = tpu.matmul %126, %127, %cst_63 {dimension_numbers = #tpu.dot_dimension_numbers<[1], [0], [0], [1], [0, 0, 1, 1], [], []>} : vector<1x256xbf16>, vector<256x512xbf16>, vector<1x512xf32> -> vector<1x512xf32>
    %c0_64 = arith.constant 0 : index
    %c0_65 = arith.constant 0 : index
    %129 = vector.load %arg5[%c0_64, %c0_65] : memref<1x512xf32, #tpu.memory_space<vmem>>, vector<1x512xf32>
    %130 = arith.addf %128, %129 : vector<1x512xf32>
    %131 = vector.extract_strided_slice %130 {offsets = [0, 0], sizes = [1, 128], strides = [1, 1]} : vector<1x512xf32> to vector<1x128xf32>
    %132 = arith.negf %131 : vector<1x128xf32>
    %133 = math.exp %132 : vector<1x128xf32>
    %cst_66 = arith.constant 1.000000e+00 : f32
    %134 = vector.broadcast %cst_66 : f32 to vector<1x128xf32>
    %135 = arith.addf %134, %133 : vector<1x128xf32>
    %136 = arith.divf %134, %135 : vector<1x128xf32>
    %137 = vector.extract_strided_slice %130 {offsets = [0, 128], sizes = [1, 128], strides = [1, 1]} : vector<1x512xf32> to vector<1x128xf32>
    %138 = arith.negf %137 : vector<1x128xf32>
    %139 = math.exp %138 : vector<1x128xf32>
    %cst_67 = arith.constant 1.000000e+00 : f32
    %140 = vector.broadcast %cst_67 : f32 to vector<1x128xf32>
    %141 = arith.addf %140, %139 : vector<1x128xf32>
    %142 = arith.divf %140, %141 : vector<1x128xf32>
    %143 = vector.extract_strided_slice %130 {offsets = [0, 256], sizes = [1, 128], strides = [1, 1]} : vector<1x512xf32> to vector<1x128xf32>
    %144 = vector.extract_strided_slice %130 {offsets = [0, 384], sizes = [1, 128], strides = [1, 1]} : vector<1x512xf32> to vector<1x128xf32>
    %145 = arith.mulf %136, %144 : vector<1x128xf32>
    %146 = arith.addf %143, %145 : vector<1x128xf32>
    %147 = math.tanh %146 : vector<1x128xf32>
    %cst_68 = arith.constant 1.000000e+00 : f32
    %148 = vector.broadcast %cst_68 : f32 to vector<1x128xf32>
    %149 = arith.subf %148, %142 : vector<1x128xf32>
    %150 = arith.mulf %149, %147 : vector<1x128xf32>
    %151 = arith.mulf %142, %113 : vector<1x128xf32>
    %152 = arith.addf %150, %151 : vector<1x128xf32>
    %153 = arith.index_cast %c3_i32 : i32 to index
    %c0_69 = arith.constant 0 : index
    %c0_70 = arith.constant 0 : index
    %154 = vector.load %arg6[%153, %c0_69, %c0_70] : memref<8x1x128xf32, #tpu.memory_space<vmem>>, vector<1x1x128xf32>
    %155 = vector.shape_cast %154 : vector<1x1x128xf32> to vector<1x128xf32>
    %156 = vector.shape_cast %152 : vector<1x128xf32> to vector<1x1x128xf32>
    tpu.vector_store %arg6[%153, %c0_69, %c0_70], %156 {strides = array<i32>} : memref<8x1x128xf32, #tpu.memory_space<vmem>>, vector<1x1x128xf32>,
    %c4_i32 = arith.constant 4 : i32
    %157 = arith.index_cast %c4_i32 : i32 to index
    %158 = memref.load %arg1[%157] : memref<8xi32, #tpu.memory_space<smem>>
    %159 = arith.index_cast %158 : i32 to index
    %c0_71 = arith.constant 0 : index
    %c0_72 = arith.constant 0 : index
    %160 = vector.load %arg2[%159, %c0_71, %c0_72] : memref<64x1x128xbf16, #tpu.memory_space<vmem>>, vector<1x1x128xbf16>
    %161 = vector.shape_cast %160 : vector<1x1x128xbf16> to vector<1x128xbf16>
    %c0_73 = arith.constant 0 : index
    %c0_74 = arith.constant 0 : index
    %162 = vector.load %arg7[%c0_73, %c0_74] : memref<1x256xbf16, #tpu.memory_space<vmem>>, vector<1x128xbf16>
    tpu.vector_store %arg7[%c0_73, %c0_74], %161 {strides = array<i32>} : memref<1x256xbf16, #tpu.memory_space<vmem>>, vector<1x128xbf16>,
    %163 = arith.truncf %152 : vector<1x128xf32> to vector<1x128xbf16>
    %c0_75 = arith.constant 0 : index
    %c128_76 = arith.constant 128 : index
    %164 = vector.load %arg7[%c0_75, %c128_76] : memref<1x256xbf16, #tpu.memory_space<vmem>>, vector<1x128xbf16>
    tpu.vector_store %arg7[%c0_75, %c128_76], %163 {strides = array<i32>} : memref<1x256xbf16, #tpu.memory_space<vmem>>, vector<1x128xbf16>,
    %c0_77 = arith.constant 0 : index
    %c0_78 = arith.constant 0 : index
    %165 = vector.load %arg7[%c0_77, %c0_78] : memref<1x256xbf16, #tpu.memory_space<vmem>>, vector<1x256xbf16>
    %c0_79 = arith.constant 0 : index
    %c0_80 = arith.constant 0 : index
    %166 = vector.load %arg4[%c0_79, %c0_80] : memref<256x512xbf16, #tpu.memory_space<vmem>>, vector<256x512xbf16>
    %cst_81 = arith.constant dense<0.000000e+00> : vector<1x512xf32>
    %167 = tpu.matmul %165, %166, %cst_81 {dimension_numbers = #tpu.dot_dimension_numbers<[1], [0], [0], [1], [0, 0, 1, 1], [], []>} : vector<1x256xbf16>, vector<256x512xbf16>, vector<1x512xf32> -> vector<1x512xf32>
    %c0_82 = arith.constant 0 : index
    %c0_83 = arith.constant 0 : index
    %168 = vector.load %arg5[%c0_82, %c0_83] : memref<1x512xf32, #tpu.memory_space<vmem>>, vector<1x512xf32>
    %169 = arith.addf %167, %168 : vector<1x512xf32>
    %170 = vector.extract_strided_slice %169 {offsets = [0, 0], sizes = [1, 128], strides = [1, 1]} : vector<1x512xf32> to vector<1x128xf32>
    %171 = arith.negf %170 : vector<1x128xf32>
    %172 = math.exp %171 : vector<1x128xf32>
    %cst_84 = arith.constant 1.000000e+00 : f32
    %173 = vector.broadcast %cst_84 : f32 to vector<1x128xf32>
    %174 = arith.addf %173, %172 : vector<1x128xf32>
    %175 = arith.divf %173, %174 : vector<1x128xf32>
    %176 = vector.extract_strided_slice %169 {offsets = [0, 128], sizes = [1, 128], strides = [1, 1]} : vector<1x512xf32> to vector<1x128xf32>
    %177 = arith.negf %176 : vector<1x128xf32>
    %178 = math.exp %177 : vector<1x128xf32>
    %cst_85 = arith.constant 1.000000e+00 : f32
    %179 = vector.broadcast %cst_85 : f32 to vector<1x128xf32>
    %180 = arith.addf %179, %178 : vector<1x128xf32>
    %181 = arith.divf %179, %180 : vector<1x128xf32>
    %182 = vector.extract_strided_slice %169 {offsets = [0, 256], sizes = [1, 128], strides = [1, 1]} : vector<1x512xf32> to vector<1x128xf32>
    %183 = vector.extract_strided_slice %169 {offsets = [0, 384], sizes = [1, 128], strides = [1, 1]} : vector<1x512xf32> to vector<1x128xf32>
    %184 = arith.mulf %175, %183 : vector<1x128xf32>
    %185 = arith.addf %182, %184 : vector<1x128xf32>
    %186 = math.tanh %185 : vector<1x128xf32>
    %cst_86 = arith.constant 1.000000e+00 : f32
    %187 = vector.broadcast %cst_86 : f32 to vector<1x128xf32>
    %188 = arith.subf %187, %181 : vector<1x128xf32>
    %189 = arith.mulf %188, %186 : vector<1x128xf32>
    %190 = arith.mulf %181, %152 : vector<1x128xf32>
    %191 = arith.addf %189, %190 : vector<1x128xf32>
    %192 = arith.index_cast %c4_i32 : i32 to index
    %c0_87 = arith.constant 0 : index
    %c0_88 = arith.constant 0 : index
    %193 = vector.load %arg6[%192, %c0_87, %c0_88] : memref<8x1x128xf32, #tpu.memory_space<vmem>>, vector<1x1x128xf32>
    %194 = vector.shape_cast %193 : vector<1x1x128xf32> to vector<1x128xf32>
    %195 = vector.shape_cast %191 : vector<1x128xf32> to vector<1x1x128xf32>
    tpu.vector_store %arg6[%192, %c0_87, %c0_88], %195 {strides = array<i32>} : memref<8x1x128xf32, #tpu.memory_space<vmem>>, vector<1x1x128xf32>,
    %c5_i32 = arith.constant 5 : i32
    %196 = arith.index_cast %c5_i32 : i32 to index
    %197 = memref.load %arg1[%196] : memref<8xi32, #tpu.memory_space<smem>>
    %198 = arith.index_cast %197 : i32 to index
    %c0_89 = arith.constant 0 : index
    %c0_90 = arith.constant 0 : index
    %199 = vector.load %arg2[%198, %c0_89, %c0_90] : memref<64x1x128xbf16, #tpu.memory_space<vmem>>, vector<1x1x128xbf16>
    %200 = vector.shape_cast %199 : vector<1x1x128xbf16> to vector<1x128xbf16>
    %c0_91 = arith.constant 0 : index
    %c0_92 = arith.constant 0 : index
    %201 = vector.load %arg7[%c0_91, %c0_92] : memref<1x256xbf16, #tpu.memory_space<vmem>>, vector<1x128xbf16>
    tpu.vector_store %arg7[%c0_91, %c0_92], %200 {strides = array<i32>} : memref<1x256xbf16, #tpu.memory_space<vmem>>, vector<1x128xbf16>,
    %202 = arith.truncf %191 : vector<1x128xf32> to vector<1x128xbf16>
    %c0_93 = arith.constant 0 : index
    %c128_94 = arith.constant 128 : index
    %203 = vector.load %arg7[%c0_93, %c128_94] : memref<1x256xbf16, #tpu.memory_space<vmem>>, vector<1x128xbf16>
    tpu.vector_store %arg7[%c0_93, %c128_94], %202 {strides = array<i32>} : memref<1x256xbf16, #tpu.memory_space<vmem>>, vector<1x128xbf16>,
    %c0_95 = arith.constant 0 : index
    %c0_96 = arith.constant 0 : index
    %204 = vector.load %arg7[%c0_95, %c0_96] : memref<1x256xbf16, #tpu.memory_space<vmem>>, vector<1x256xbf16>
    %c0_97 = arith.constant 0 : index
    %c0_98 = arith.constant 0 : index
    %205 = vector.load %arg4[%c0_97, %c0_98] : memref<256x512xbf16, #tpu.memory_space<vmem>>, vector<256x512xbf16>
    %cst_99 = arith.constant dense<0.000000e+00> : vector<1x512xf32>
    %206 = tpu.matmul %204, %205, %cst_99 {dimension_numbers = #tpu.dot_dimension_numbers<[1], [0], [0], [1], [0, 0, 1, 1], [], []>} : vector<1x256xbf16>, vector<256x512xbf16>, vector<1x512xf32> -> vector<1x512xf32>
    %c0_100 = arith.constant 0 : index
    %c0_101 = arith.constant 0 : index
    %207 = vector.load %arg5[%c0_100, %c0_101] : memref<1x512xf32, #tpu.memory_space<vmem>>, vector<1x512xf32>
    %208 = arith.addf %206, %207 : vector<1x512xf32>
    %209 = vector.extract_strided_slice %208 {offsets = [0, 0], sizes = [1, 128], strides = [1, 1]} : vector<1x512xf32> to vector<1x128xf32>
    %210 = arith.negf %209 : vector<1x128xf32>
    %211 = math.exp %210 : vector<1x128xf32>
    %cst_102 = arith.constant 1.000000e+00 : f32
    %212 = vector.broadcast %cst_102 : f32 to vector<1x128xf32>
    %213 = arith.addf %212, %211 : vector<1x128xf32>
    %214 = arith.divf %212, %213 : vector<1x128xf32>
    %215 = vector.extract_strided_slice %208 {offsets = [0, 128], sizes = [1, 128], strides = [1, 1]} : vector<1x512xf32> to vector<1x128xf32>
    %216 = arith.negf %215 : vector<1x128xf32>
    %217 = math.exp %216 : vector<1x128xf32>
    %cst_103 = arith.constant 1.000000e+00 : f32
    %218 = vector.broadcast %cst_103 : f32 to vector<1x128xf32>
    %219 = arith.addf %218, %217 : vector<1x128xf32>
    %220 = arith.divf %218, %219 : vector<1x128xf32>
    %221 = vector.extract_strided_slice %208 {offsets = [0, 256], sizes = [1, 128], strides = [1, 1]} : vector<1x512xf32> to vector<1x128xf32>
    %222 = vector.extract_strided_slice %208 {offsets = [0, 384], sizes = [1, 128], strides = [1, 1]} : vector<1x512xf32> to vector<1x128xf32>
    %223 = arith.mulf %214, %222 : vector<1x128xf32>
    %224 = arith.addf %221, %223 : vector<1x128xf32>
    %225 = math.tanh %224 : vector<1x128xf32>
    %cst_104 = arith.constant 1.000000e+00 : f32
    %226 = vector.broadcast %cst_104 : f32 to vector<1x128xf32>
    %227 = arith.subf %226, %220 : vector<1x128xf32>
    %228 = arith.mulf %227, %225 : vector<1x128xf32>
    %229 = arith.mulf %220, %191 : vector<1x128xf32>
    %230 = arith.addf %228, %229 : vector<1x128xf32>
    %231 = arith.index_cast %c5_i32 : i32 to index
    %c0_105 = arith.constant 0 : index
    %c0_106 = arith.constant 0 : index
    %232 = vector.load %arg6[%231, %c0_105, %c0_106] : memref<8x1x128xf32, #tpu.memory_space<vmem>>, vector<1x1x128xf32>
    %233 = vector.shape_cast %232 : vector<1x1x128xf32> to vector<1x128xf32>
    %234 = vector.shape_cast %230 : vector<1x128xf32> to vector<1x1x128xf32>
    tpu.vector_store %arg6[%231, %c0_105, %c0_106], %234 {strides = array<i32>} : memref<8x1x128xf32, #tpu.memory_space<vmem>>, vector<1x1x128xf32>,
    %c6_i32 = arith.constant 6 : i32
    %235 = arith.index_cast %c6_i32 : i32 to index
    %236 = memref.load %arg1[%235] : memref<8xi32, #tpu.memory_space<smem>>
    %237 = arith.index_cast %236 : i32 to index
    %c0_107 = arith.constant 0 : index
    %c0_108 = arith.constant 0 : index
    %238 = vector.load %arg2[%237, %c0_107, %c0_108] : memref<64x1x128xbf16, #tpu.memory_space<vmem>>, vector<1x1x128xbf16>
    %239 = vector.shape_cast %238 : vector<1x1x128xbf16> to vector<1x128xbf16>
    %c0_109 = arith.constant 0 : index
    %c0_110 = arith.constant 0 : index
    %240 = vector.load %arg7[%c0_109, %c0_110] : memref<1x256xbf16, #tpu.memory_space<vmem>>, vector<1x128xbf16>
    tpu.vector_store %arg7[%c0_109, %c0_110], %239 {strides = array<i32>} : memref<1x256xbf16, #tpu.memory_space<vmem>>, vector<1x128xbf16>,
    %241 = arith.truncf %230 : vector<1x128xf32> to vector<1x128xbf16>
    %c0_111 = arith.constant 0 : index
    %c128_112 = arith.constant 128 : index
    %242 = vector.load %arg7[%c0_111, %c128_112] : memref<1x256xbf16, #tpu.memory_space<vmem>>, vector<1x128xbf16>
    tpu.vector_store %arg7[%c0_111, %c128_112], %241 {strides = array<i32>} : memref<1x256xbf16, #tpu.memory_space<vmem>>, vector<1x128xbf16>,
    %c0_113 = arith.constant 0 : index
    %c0_114 = arith.constant 0 : index
    %243 = vector.load %arg7[%c0_113, %c0_114] : memref<1x256xbf16, #tpu.memory_space<vmem>>, vector<1x256xbf16>
    %c0_115 = arith.constant 0 : index
    %c0_116 = arith.constant 0 : index
    %244 = vector.load %arg4[%c0_115, %c0_116] : memref<256x512xbf16, #tpu.memory_space<vmem>>, vector<256x512xbf16>
    %cst_117 = arith.constant dense<0.000000e+00> : vector<1x512xf32>
    %245 = tpu.matmul %243, %244, %cst_117 {dimension_numbers = #tpu.dot_dimension_numbers<[1], [0], [0], [1], [0, 0, 1, 1], [], []>} : vector<1x256xbf16>, vector<256x512xbf16>, vector<1x512xf32> -> vector<1x512xf32>
    %c0_118 = arith.constant 0 : index
    %c0_119 = arith.constant 0 : index
    %246 = vector.load %arg5[%c0_118, %c0_119] : memref<1x512xf32, #tpu.memory_space<vmem>>, vector<1x512xf32>
    %247 = arith.addf %245, %246 : vector<1x512xf32>
    %248 = vector.extract_strided_slice %247 {offsets = [0, 0], sizes = [1, 128], strides = [1, 1]} : vector<1x512xf32> to vector<1x128xf32>
    %249 = arith.negf %248 : vector<1x128xf32>
    %250 = math.exp %249 : vector<1x128xf32>
    %cst_120 = arith.constant 1.000000e+00 : f32
    %251 = vector.broadcast %cst_120 : f32 to vector<1x128xf32>
    %252 = arith.addf %251, %250 : vector<1x128xf32>
    %253 = arith.divf %251, %252 : vector<1x128xf32>
    %254 = vector.extract_strided_slice %247 {offsets = [0, 128], sizes = [1, 128], strides = [1, 1]} : vector<1x512xf32> to vector<1x128xf32>
    %255 = arith.negf %254 : vector<1x128xf32>
    %256 = math.exp %255 : vector<1x128xf32>
    %cst_121 = arith.constant 1.000000e+00 : f32
    %257 = vector.broadcast %cst_121 : f32 to vector<1x128xf32>
    %258 = arith.addf %257, %256 : vector<1x128xf32>
    %259 = arith.divf %257, %258 : vector<1x128xf32>
    %260 = vector.extract_strided_slice %247 {offsets = [0, 256], sizes = [1, 128], strides = [1, 1]} : vector<1x512xf32> to vector<1x128xf32>
    %261 = vector.extract_strided_slice %247 {offsets = [0, 384], sizes = [1, 128], strides = [1, 1]} : vector<1x512xf32> to vector<1x128xf32>
    %262 = arith.mulf %253, %261 : vector<1x128xf32>
    %263 = arith.addf %260, %262 : vector<1x128xf32>
    %264 = math.tanh %263 : vector<1x128xf32>
    %cst_122 = arith.constant 1.000000e+00 : f32
    %265 = vector.broadcast %cst_122 : f32 to vector<1x128xf32>
    %266 = arith.subf %265, %259 : vector<1x128xf32>
    %267 = arith.mulf %266, %264 : vector<1x128xf32>
    %268 = arith.mulf %259, %230 : vector<1x128xf32>
    %269 = arith.addf %267, %268 : vector<1x128xf32>
    %270 = arith.index_cast %c6_i32 : i32 to index
    %c0_123 = arith.constant 0 : index
    %c0_124 = arith.constant 0 : index
    %271 = vector.load %arg6[%270, %c0_123, %c0_124] : memref<8x1x128xf32, #tpu.memory_space<vmem>>, vector<1x1x128xf32>
    %272 = vector.shape_cast %271 : vector<1x1x128xf32> to vector<1x128xf32>
    %273 = vector.shape_cast %269 : vector<1x128xf32> to vector<1x1x128xf32>
    tpu.vector_store %arg6[%270, %c0_123, %c0_124], %273 {strides = array<i32>} : memref<8x1x128xf32, #tpu.memory_space<vmem>>, vector<1x1x128xf32>,
    %c7_i32 = arith.constant 7 : i32
    %274 = arith.index_cast %c7_i32 : i32 to index
    %275 = memref.load %arg1[%274] : memref<8xi32, #tpu.memory_space<smem>>
    %276 = arith.index_cast %275 : i32 to index
    %c0_125 = arith.constant 0 : index
    %c0_126 = arith.constant 0 : index
    %277 = vector.load %arg2[%276, %c0_125, %c0_126] : memref<64x1x128xbf16, #tpu.memory_space<vmem>>, vector<1x1x128xbf16>
    %278 = vector.shape_cast %277 : vector<1x1x128xbf16> to vector<1x128xbf16>
    %c0_127 = arith.constant 0 : index
    %c0_128 = arith.constant 0 : index
    %279 = vector.load %arg7[%c0_127, %c0_128] : memref<1x256xbf16, #tpu.memory_space<vmem>>, vector<1x128xbf16>
    tpu.vector_store %arg7[%c0_127, %c0_128], %278 {strides = array<i32>} : memref<1x256xbf16, #tpu.memory_space<vmem>>, vector<1x128xbf16>,
    %280 = arith.truncf %269 : vector<1x128xf32> to vector<1x128xbf16>
    %c0_129 = arith.constant 0 : index
    %c128_130 = arith.constant 128 : index
    %281 = vector.load %arg7[%c0_129, %c128_130] : memref<1x256xbf16, #tpu.memory_space<vmem>>, vector<1x128xbf16>
    tpu.vector_store %arg7[%c0_129, %c128_130], %280 {strides = array<i32>} : memref<1x256xbf16, #tpu.memory_space<vmem>>, vector<1x128xbf16>,
    %c0_131 = arith.constant 0 : index
    %c0_132 = arith.constant 0 : index
    %282 = vector.load %arg7[%c0_131, %c0_132] : memref<1x256xbf16, #tpu.memory_space<vmem>>, vector<1x256xbf16>
    %c0_133 = arith.constant 0 : index
    %c0_134 = arith.constant 0 : index
    %283 = vector.load %arg4[%c0_133, %c0_134] : memref<256x512xbf16, #tpu.memory_space<vmem>>, vector<256x512xbf16>
    %cst_135 = arith.constant dense<0.000000e+00> : vector<1x512xf32>
    %284 = tpu.matmul %282, %283, %cst_135 {dimension_numbers = #tpu.dot_dimension_numbers<[1], [0], [0], [1], [0, 0, 1, 1], [], []>} : vector<1x256xbf16>, vector<256x512xbf16>, vector<1x512xf32> -> vector<1x512xf32>
    %c0_136 = arith.constant 0 : index
    %c0_137 = arith.constant 0 : index
    %285 = vector.load %arg5[%c0_136, %c0_137] : memref<1x512xf32, #tpu.memory_space<vmem>>, vector<1x512xf32>
    %286 = arith.addf %284, %285 : vector<1x512xf32>
    %287 = vector.extract_strided_slice %286 {offsets = [0, 0], sizes = [1, 128], strides = [1, 1]} : vector<1x512xf32> to vector<1x128xf32>
    %288 = arith.negf %287 : vector<1x128xf32>
    %289 = math.exp %288 : vector<1x128xf32>
    %cst_138 = arith.constant 1.000000e+00 : f32
    %290 = vector.broadcast %cst_138 : f32 to vector<1x128xf32>
    %291 = arith.addf %290, %289 : vector<1x128xf32>
    %292 = arith.divf %290, %291 : vector<1x128xf32>
    %293 = vector.extract_strided_slice %286 {offsets = [0, 128], sizes = [1, 128], strides = [1, 1]} : vector<1x512xf32> to vector<1x128xf32>
    %294 = arith.negf %293 : vector<1x128xf32>
    %295 = math.exp %294 : vector<1x128xf32>
    %cst_139 = arith.constant 1.000000e+00 : f32
    %296 = vector.broadcast %cst_139 : f32 to vector<1x128xf32>
    %297 = arith.addf %296, %295 : vector<1x128xf32>
    %298 = arith.divf %296, %297 : vector<1x128xf32>
    %299 = vector.extract_strided_slice %286 {offsets = [0, 256], sizes = [1, 128], strides = [1, 1]} : vector<1x512xf32> to vector<1x128xf32>
    %300 = vector.extract_strided_slice %286 {offsets = [0, 384], sizes = [1, 128], strides = [1, 1]} : vector<1x512xf32> to vector<1x128xf32>
    %301 = arith.mulf %292, %300 : vector<1x128xf32>
    %302 = arith.addf %299, %301 : vector<1x128xf32>
    %303 = math.tanh %302 : vector<1x128xf32>
    %cst_140 = arith.constant 1.000000e+00 : f32
    %304 = vector.broadcast %cst_140 : f32 to vector<1x128xf32>
    %305 = arith.subf %304, %298 : vector<1x128xf32>
    %306 = arith.mulf %305, %303 : vector<1x128xf32>
    %307 = arith.mulf %298, %269 : vector<1x128xf32>
    %308 = arith.addf %306, %307 : vector<1x128xf32>
    %309 = arith.index_cast %c7_i32 : i32 to index
    %c0_141 = arith.constant 0 : index
    %c0_142 = arith.constant 0 : index
    %310 = vector.load %arg6[%309, %c0_141, %c0_142] : memref<8x1x128xf32, #tpu.memory_space<vmem>>, vector<1x1x128xf32>
    %311 = vector.shape_cast %310 : vector<1x1x128xf32> to vector<1x128xf32>
    %312 = vector.shape_cast %308 : vector<1x128xf32> to vector<1x1x128xf32>
    tpu.vector_store %arg6[%309, %c0_141, %c0_142], %312 {strides = array<i32>} : memref<8x1x128xf32, #tpu.memory_space<vmem>>, vector<1x1x128xf32>,
    %c8_i32 = arith.constant 8 : i32
    return
  }
  func.func @transform_0(%arg0: i32, %arg1: memref<8xi32, #tpu.memory_space<smem>>) -> (i32, i32, i32) {
    %c0_i32 = arith.constant 0 : i32
    %c0_i32_0 = arith.constant 0 : i32
    %c0_i32_1 = arith.constant 0 : i32
    %c0_i32_2 = arith.constant 0 : i32
    return %c0_i32, %c0_i32_0, %c0_i32_1 : i32, i32, i32
  }
  func.func @transform_1(%arg0: i32, %arg1: memref<8xi32, #tpu.memory_space<smem>>) -> (i32, i32) {
    %c0_i32 = arith.constant 0 : i32
    %c0_i32_0 = arith.constant 0 : i32
    %c0_i32_1 = arith.constant 0 : i32
    return %c0_i32, %c0_i32_0 : i32, i32
  }
  func.func @transform_2(%arg0: i32, %arg1: memref<8xi32, #tpu.memory_space<smem>>) -> (i32, i32) {
    %c0_i32 = arith.constant 0 : i32
    %c0_i32_0 = arith.constant 0 : i32
    %c0_i32_1 = arith.constant 0 : i32
    return %c0_i32, %c0_i32_0 : i32, i32
  }
  func.func @transform_3(%arg0: i32, %arg1: memref<8xi32, #tpu.memory_space<smem>>) -> (i32, i32) {
    %c0_i32 = arith.constant 0 : i32
    %c0_i32_0 = arith.constant 0 : i32
    %c0_i32_1 = arith.constant 0 : i32
    return %c0_i32, %c0_i32_0 : i32, i32
  }
  func.func @transform_4(%arg0: i32, %arg1: memref<8xi32, #tpu.memory_space<smem>>) -> (i32, i32, i32) {
    %c0_i32 = arith.constant 0 : i32
    %c0_i32_0 = arith.constant 0 : i32
    %c0_i32_1 = arith.constant 0 : i32
    %c0_i32_2 = arith.constant 0 : i32
    return %c0_i32, %c0_i32_0, %c0_i32_1 : i32, i32, i32
  }
}

</mosaic_0001>

<llo_original>
// kernel: tpu_custom_call.1
$region0: #{tpu_custom_call.1}
  #allocation0 [shape = 'u32[]', space=smem, size = 0x4, offset = 0x4, fixed_abs, tag = 'smem constant byte address 0x4 - core index']
  #allocation1 [shape = 'u32[144,128]{1,0:T(1,128)}', space=vmem, size = 0x12000, scoped, tag = 'internal scratch']
  #allocation2 [shape = 'bf16[1,256]{1,0:T(2,128)(2,1)}', space=vmem, size = 0x400, scoped, tag = 'scratch operand']
  #allocation3 [shape = 's32[1]{0}', space=sflag, size = 0x4, scoped, tag = 'scoped memory for tpu_custom_call.1']
  #allocation4 [shape = 'u8[512]{0}', space=smem, size = 0x200, scoped, tag = 'prefetched SMEM operand 0']
  %s0 = inlined_call_operand.vmem [shape: s32[8], index: 0, kind: input, shape index: {}]
  %s1 = inlined_call_operand.vmem [shape: bf16[64,1,128], index: 1, kind: input, shape index: {}]
  %s2 = inlined_call_operand.vmem [shape: f32[1,128], index: 2, kind: input, shape index: {}]
  %s3 = inlined_call_operand.hbm [shape: bf16[256,512], index: 3, kind: input, shape index: {}]
  %s4 = inlined_call_operand.vmem [shape: f32[1,512], index: 4, kind: input, shape index: {}]
  %s5 = inlined_call_operand.hbm [shape: f32[8,1,128], index: 5, kind: output, shape index: {}]
  %s6 = sld [smem:[#allocation0]]
  $region30: #{tpu_custom_call.1} parent=0
    _
  %s8 = ssub.s32 1, %s6
  %s9 = scalar_select 0, %s8, %s6
  %s10 = sshll.u32 %s0, 4
  %s11 = int_to_ptr.vmem [resolvable:$true] %s10
  %13 = dma.vmem_to_smem %s11, 16, [#allocation4], [#allocation3]
  %14 = dma.done [#allocation3], 16
  %15 = sfence
  $region1: #{tpu_custom_call.1} parent=0
    #allocation5 [shape = 'u8[262144]{0}', space=vmem, size = 0x40000, scoped, tag = 'input window, operand 3, single buffered']
    #allocation6 [shape = 's32[1]{0}', space=sflag, size = 0x4, scoped, tag = 'scoped memory for tpu_custom_call.1']
    #allocation7 [shape = 's32[1]{0}', space=sflag, size = 0x4, scoped, tag = 'scoped memory for tpu_custom_call.1']
    #allocation8 [shape = 'u8[4096]{0}', space=vmem, size = 0x1000, scoped, tag = 'output window, operand 0, single buffered']
    %16 = vsyncpa [#allocation6], 0
    %17 = vsyncpa [#allocation7], 0
    // Predicated region
    $region2: #{tpu_custom_call.1} parent=1 // pred_check
      _
    $region3: #{tpu_custom_call.1} parent=1 // pred_check_branch
      %19 = sbr.rel (0) target = $region5
    $region4: #{tpu_custom_call.1} parent=1 // pred_region
      _
    $region5: #{tpu_custom_call.1} parent=1 // pred_fallthru
      _
    // Predicated region
    $region6: #{tpu_custom_call.1} parent=1 // pred_check
      _
    $region7: #{tpu_custom_call.1} parent=1 // pred_check_branch
      %21 = sbr.rel (0) target = $region9
    $region8: #{tpu_custom_call.1} parent=1 // pred_region
      _
    $region9: #{tpu_custom_call.1} parent=1 // pred_fallthru
      _
    // Predicated region
    $region10: #{tpu_custom_call.1} parent=1 // pred_check
      _
    $region11: #{tpu_custom_call.1} parent=1 // pred_check_branch
      %23 = sbr.rel (0) target = $region13
    $region12: #{tpu_custom_call.1} parent=1 // pred_region
      %s25 = ssub.s32 8192, 8192
      %26 = vsyncadd [#allocation6], %s25
      %s27 = sshll.u32 [#allocation5], 4
      %s28 = int_to_ptr.vmem [resolvable:$true] %s27
      %33 = dma.hbm_to_vmem [thread:$0]  %s3, 8192, %s28, [#allocation6], 256, 256, 16
    $region13: #{tpu_custom_call.1} parent=1 // pred_fallthru
      _
    // Predicated region
    $region14: #{tpu_custom_call.1} parent=1 // pred_check
      _
    $region15: #{tpu_custom_call.1} parent=1 // pred_check_branch
      %35 = sbr.rel (0) target = $region17
    $region16: #{tpu_custom_call.1} parent=1 // pred_region
      _
    $region17: #{tpu_custom_call.1} parent=1 // pred_fallthru
      _
    // Predicated region
    $region18: #{tpu_custom_call.1} parent=1 // pred_check
      _
    $region19: #{tpu_custom_call.1} parent=1 // pred_check_branch
      %37 = sbr.rel (0) target = $region21
    $region20: #{tpu_custom_call.1} parent=1 // pred_region
      %38 = dma.done [#allocation6], 8192
    $region21: #{tpu_custom_call.1} parent=1 // pred_fallthru
      _
    %v39 = vld [vmem:[%s2] sm:$0x1]
    %s40 = sld [smem:[#allocation4]]
    %s41 = scalar_lea.vmem %s1, %s40
    %v42 = vld [vmem:[%s41] sm:$0x1]
    %vm43 = vcmask 1040384
    %vm44 = vsmask.f32 256
    %vm45 = vmand %vm43, %vm44
    %v46 = vld [vmem:[#allocation2] sm:$0x1]
    %v47 = vsel %vm45, %v42, %v46
    %48 = vst [vmem:[#allocation2] sm:$0x1] %v47
    %v49 = vpack.c.bf16 %v39, %v39
    %v50 = vld [vmem:[#allocation2 + $0x1] sm:$0x1]
    %v51 = vsel %vm45, %v49, %v50
    %52 = vst [vmem:[#allocation2 + $0x1] sm:$0x1] %v51
    %v53 = vld [vmem:[#allocation2] sm:$0x3]
    %v54 = vld [vmem:[#allocation5] sm:$0xff]
    %v55 = vld [vmem:[#allocation5 + $0x8] sm:$0xff]
    %v56 = vld [vmem:[#allocation5 + $0x10] sm:$0xff]
    %v57 = vld [vmem:[#allocation5 + $0x18] sm:$0xff]
    %v58 = vld [vmem:[#allocation5 + $0x20] sm:$0xff]
    %v59 = vld [vmem:[#allocation5 + $0x28] sm:$0xff]
    %v60 = vld [vmem:[#allocation5 + $0x30] sm:$0xff]
    %v61 = vld [vmem:[#allocation5 + $0x38] sm:$0xff]
    %v62 = vld [vmem:[#allocation5 + $0x40] sm:$0xff]
    %v63 = vld [vmem:[#allocation5 + $0x48] sm:$0xff]
    %v64 = vld [vmem:[#allocation5 + $0x50] sm:$0xff]
    %v65 = vld [vmem:[#allocation5 + $0x58] sm:$0xff]
    %v66 = vld [vmem:[#allocation5 + $0x60] sm:$0xff]
    %v67 = vld [vmem:[#allocation5 + $0x68] sm:$0xff]
    %v68 = vld [vmem:[#allocation5 + $0x70] sm:$0xff]
    %v69 = vld [vmem:[#allocation5 + $0x78] sm:$0xff]
    %v70 = vld [vmem:[#allocation5 + $0x80] sm:$0xff]
    %v71 = vld [vmem:[#allocation5 + $0x88] sm:$0xff]
    %v72 = vld [vmem:[#allocation5 + $0x90] sm:$0xff]
    %v73 = vld [vmem:[#allocation5 + $0x98] sm:$0xff]
    %v74 = vld [vmem:[#allocation5 + $0xa0] sm:$0xff]
    %v75 = vld [vmem:[#allocation5 + $0xa8] sm:$0xff]
    %v76 = vld [vmem:[#allocation5 + $0xb0] sm:$0xff]
    %v77 = vld [vmem:[#allocation5 + $0xb8] sm:$0xff]
    %v78 = vld [vmem:[#allocation5 + $0xc0] sm:$0xff]
    %v79 = vld [vmem:[#allocation5 + $0xc8] sm:$0xff]
    %v80 = vld [vmem:[#allocation5 + $0xd0] sm:$0xff]
    %v81 = vld [vmem:[#allocation5 + $0xd8] sm:$0xff]
    %v82 = vld [vmem:[#allocation5 + $0xe0] sm:$0xff]
    %v83 = vld [vmem:[#allocation5 + $0xe8] sm:$0xff]
    %v84 = vld [vmem:[#allocation5 + $0xf0] sm:$0xff]
    %v85 = vld [vmem:[#allocation5 + $0xf8] sm:$0xff]
    %v86 = vld [vmem:[#allocation5 + $0x100] sm:$0xff]
    %v87 = vld [vmem:[#allocation5 + $0x108] sm:$0xff]
    %v88 = vld [vmem:[#allocation5 + $0x110] sm:$0xff]
    %v89 = vld [vmem:[#allocation5 + $0x118] sm:$0xff]
    %v90 = vld [vmem:[#allocation5 + $0x120] sm:$0xff]
    %v91 = vld [vmem:[#allocation5 + $0x128] sm:$0xff]
    %v92 = vld [vmem:[#allocation5 + $0x130] sm:$0xff]
    %v93 = vld [vmem:[#allocation5 + $0x138] sm:$0xff]
    %v94 = vld [vmem:[#allocation5 + $0x140] sm:$0xff]
    %v95 = vld [vmem:[#allocation5 + $0x148] sm:$0xff]
    %v96 = vld [vmem:[#allocation5 + $0x150] sm:$0xff]
    %v97 = vld [vmem:[#allocation5 + $0x158] sm:$0xff]
    %v98 = vld [vmem:[#allocation5 + $0x160] sm:$0xff]
    %v99 = vld [vmem:[#allocation5 + $0x168] sm:$0xff]
    %v100 = vld [vmem:[#allocation5 + $0x170] sm:$0xff]
    %v101 = vld [vmem:[#allocation5 + $0x178] sm:$0xff]
    %v102 = vld [vmem:[#allocation5 + $0x180] sm:$0xff]
    %v103 = vld [vmem:[#allocation5 + $0x188] sm:$0xff]
    %v104 = vld [vmem:[#allocation5 + $0x190] sm:$0xff]
    %v105 = vld [vmem:[#allocation5 + $0x198] sm:$0xff]
    %v106 = vld [vmem:[#allocation5 + $0x1a0] sm:$0xff]
    %v107 = vld [vmem:[#allocation5 + $0x1a8] sm:$0xff]
    %v108 = vld [vmem:[#allocation5 + $0x1b0] sm:$0xff]
    %v109 = vld [vmem:[#allocation5 + $0x1b8] sm:$0xff]
    %v110 = vld [vmem:[#allocation5 + $0x1c0] sm:$0xff]
    %v111 = vld [vmem:[#allocation5 + $0x1c8] sm:$0xff]
    %v112 = vld [vmem:[#allocation5 + $0x1d0] sm:$0xff]
    %v113 = vld [vmem:[#allocation5 + $0x1d8] sm:$0xff]
    %v114 = vld [vmem:[#allocation5 + $0x1e0] sm:$0xff]
    %v115 = vld [vmem:[#allocation5 + $0x1e8] sm:$0xff]
    %v116 = vld [vmem:[#allocation5 + $0x1f0] sm:$0xff]
    %v117 = vld [vmem:[#allocation5 + $0x1f8] sm:$0xff]
    %v118 = vld [vmem:[%s4] sm:$0xf]
    %v121 = vunpack.c.l.s4 1966171168
    %v122 = vunpack.c.0.s8 %v121
    %v123 = vlaneseq
    %v124 = vshrl.u32 %v123, 7
    %v125 = vsub.s32 %v122, %v124
    %v126 = vrot.slane %v53, %v125
    %v127 = vcombine.high %v126, %v126
    %v129 = vunpack.c.l.s4 1966171168
    %v130 = vunpack.c.0.s8 %v129
    %v131 = vlaneseq
    %v132 = vshrl.u32 %v131, 7
    %v133 = vsub.s32 %v130, %v132
    %v134 = vrot.slane %v126, %v133
    %v136 = vunpack.c.l.s4 1966171168
    %v137 = vunpack.c.0.s8 %v136
    %v138 = vlaneseq
    %v139 = vshrl.u32 %v138, 7
    %v140 = vsub.s32 %v137, %v139
    %v141 = vrot.slane %v127, %v140
    %v208 = vunpack.c.l.b16 %v54
    %v209 = vunpack.c.h.b16 %v54
    %v210 = vunpack.c.l.b16 %v55
    %v211 = vunpack.c.h.b16 %v55
    %v212 = vunpack.c.l.b16 %v56
    %v213 = vunpack.c.h.b16 %v56
    %v214 = vunpack.c.l.b16 %v57
    %v215 = vunpack.c.h.b16 %v57
    %v216 = vunpack.c.l.b16 %v58
    %v217 = vunpack.c.h.b16 %v58
    %v218 = vunpack.c.l.b16 %v59
    %v219 = vunpack.c.h.b16 %v59
    %v220 = vunpack.c.l.b16 %v60
    %v221 = vunpack.c.h.b16 %v60
    %v222 = vunpack.c.l.b16 %v61
    %v223 = vunpack.c.h.b16 %v61
    %v224 = vunpack.c.l.b16 %v62
    %v225 = vunpack.c.h.b16 %v62
    %v226 = vunpack.c.l.b16 %v63
    %v227 = vunpack.c.h.b16 %v63
    %v228 = vunpack.c.l.b16 %v64
    %v229 = vunpack.c.h.b16 %v64
    %v230 = vunpack.c.l.b16 %v65
    %v231 = vunpack.c.h.b16 %v65
    %v232 = vunpack.c.l.b16 %v66
    %v233 = vunpack.c.h.b16 %v66
    %v234 = vunpack.c.l.b16 %v67
    %v235 = vunpack.c.h.b16 %v67
    %v236 = vunpack.c.l.b16 %v68
    %v237 = vunpack.c.h.b16 %v68
    %v238 = vunpack.c.l.b16 %v69
    %v239 = vunpack.c.h.b16 %v69
    %v240 = vunpack.c.l.b16 %v70
    %v241 = vunpack.c.h.b16 %v70
    %v242 = vunpack.c.l.b16 %v71
    %v243 = vunpack.c.h.b16 %v71
    %v244 = vunpack.c.l.b16 %v72
    %v245 = vunpack.c.h.b16 %v72
    %v246 = vunpack.c.l.b16 %v73
    %v247 = vunpack.c.h.b16 %v73
    %v248 = vunpack.c.l.b16 %v74
    %v249 = vunpack.c.h.b16 %v74
    %v250 = vunpack.c.l.b16 %v75
    %v251 = vunpack.c.h.b16 %v75
    %v252 = vunpack.c.l.b16 %v76
    %v253 = vunpack.c.h.b16 %v76
    %v254 = vunpack.c.l.b16 %v77
    %v255 = vunpack.c.h.b16 %v77
    %v256 = vunpack.c.l.b16 %v78
    %v257 = vunpack.c.h.b16 %v78
    %v258 = vunpack.c.l.b16 %v79
    %v259 = vunpack.c.h.b16 %v79
    %v260 = vunpack.c.l.b16 %v80
    %v261 = vunpack.c.h.b16 %v80
    %v262 = vunpack.c.l.b16 %v81
    %v263 = vunpack.c.h.b16 %v81
    %v264 = vunpack.c.l.b16 %v82
    %v265 = vunpack.c.h.b16 %v82
    %v266 = vunpack.c.l.b16 %v83
    %v267 = vunpack.c.h.b16 %v83
    %v268 = vunpack.c.l.b16 %v84
    %v269 = vunpack.c.h.b16 %v84
    %v270 = vunpack.c.l.b16 %v85
    %v271 = vunpack.c.h.b16 %v85
    %v272 = vunpack.c.l.b16 %v86
    %v273 = vunpack.c.h.b16 %v86
    %v274 = vunpack.c.l.b16 %v87
    %v275 = vunpack.c.h.b16 %v87
    %v276 = vunpack.c.l.b16 %v88
    %v277 = vunpack.c.h.b16 %v88
    %v278 = vunpack.c.l.b16 %v89
    %v279 = vunpack.c.h.b16 %v89
    %v280 = vunpack.c.l.b16 %v90
    %v281 = vunpack.c.h.b16 %v90
    %v282 = vunpack.c.l.b16 %v91
    %v283 = vunpack.c.h.b16 %v91
    %v284 = vunpack.c.l.b16 %v92
    %v285 = vunpack.c.h.b16 %v92
    %v286 = vunpack.c.l.b16 %v93
    %v287 = vunpack.c.h.b16 %v93
    %v288 = vunpack.c.l.b16 %v94
    %v289 = vunpack.c.h.b16 %v94
    %v290 = vunpack.c.l.b16 %v95
    %v291 = vunpack.c.h.b16 %v95
    %v292 = vunpack.c.l.b16 %v96
    %v293 = vunpack.c.h.b16 %v96
    %v294 = vunpack.c.l.b16 %v97
    %v295 = vunpack.c.h.b16 %v97
    %v296 = vunpack.c.l.b16 %v98
    %v297 = vunpack.c.h.b16 %v98
    %v298 = vunpack.c.l.b16 %v99
    %v299 = vunpack.c.h.b16 %v99
    %v300 = vunpack.c.l.b16 %v100
    %v301 = vunpack.c.h.b16 %v100
    %v302 = vunpack.c.l.b16 %v101
    %v303 = vunpack.c.h.b16 %v101
    %v304 = vunpack.c.l.b16 %v102
    %v305 = vunpack.c.h.b16 %v102
    %v306 = vunpack.c.l.b16 %v103
    %v307 = vunpack.c.h.b16 %v103
    %v308 = vunpack.c.l.b16 %v104
    %v309 = vunpack.c.h.b16 %v104
    %v310 = vunpack.c.l.b16 %v105
    %v311 = vunpack.c.h.b16 %v105
    %v312 = vunpack.c.l.b16 %v106
    %v313 = vunpack.c.h.b16 %v106
    %v314 = vunpack.c.l.b16 %v107
    %v315 = vunpack.c.h.b16 %v107
    %v316 = vunpack.c.l.b16 %v108
    %v317 = vunpack.c.h.b16 %v108
    %v318 = vunpack.c.l.b16 %v109
    %v319 = vunpack.c.h.b16 %v109
    %v320 = vunpack.c.l.b16 %v110
    %v321 = vunpack.c.h.b16 %v110
    %v322 = vunpack.c.l.b16 %v111
    %v323 = vunpack.c.h.b16 %v111
    %v324 = vunpack.c.l.b16 %v112
    %v325 = vunpack.c.h.b16 %v112
    %v326 = vunpack.c.l.b16 %v113
    %v327 = vunpack.c.h.b16 %v113
    %v328 = vunpack.c.l.b16 %v114
    %v329 = vunpack.c.h.b16 %v114
    %v330 = vunpack.c.l.b16 %v115
    %v331 = vunpack.c.h.b16 %v115
    %v332 = vunpack.c.l.b16 %v116
    %v333 = vunpack.c.h.b16 %v116
    %v334 = vunpack.c.l.b16 %v117
    %v335 = vunpack.c.h.b16 %v117
    %v336 = vpack.c.b16 %v212, %v208
    %v337 = vpack.c.b16 %v213, %v209
    %v338 = vpack.c.b16 %v214, %v210
    %v339 = vpack.c.b16 %v215, %v211
    %v340 = vpack.c.b16 %v220, %v216
    %v341 = vpack.c.b16 %v221, %v217
    %v342 = vpack.c.b16 %v222, %v218
    %v343 = vpack.c.b16 %v223, %v219
    %v344 = vpack.c.b16 %v228, %v224
    %v345 = vpack.c.b16 %v229, %v225
    %v346 = vpack.c.b16 %v230, %v226
    %v347 = vpack.c.b16 %v231, %v227
    %v348 = vpack.c.b16 %v236, %v232
    %v349 = vpack.c.b16 %v237, %v233
    %v350 = vpack.c.b16 %v238, %v234
    %v351 = vpack.c.b16 %v239, %v235
    %v352 = vpack.c.b16 %v244, %v240
    %v353 = vpack.c.b16 %v245, %v241
    %v354 = vpack.c.b16 %v246, %v242
    %v355 = vpack.c.b16 %v247, %v243
    %v356 = vpack.c.b16 %v252, %v248
    %v357 = vpack.c.b16 %v253, %v249
    %v358 = vpack.c.b16 %v254, %v250
    %v359 = vpack.c.b16 %v255, %v251
    %v360 = vpack.c.b16 %v260, %v256
    %v361 = vpack.c.b16 %v261, %v257
    %v362 = vpack.c.b16 %v262, %v258
    %v363 = vpack.c.b16 %v263, %v259
    %v364 = vpack.c.b16 %v268, %v264
    %v365 = vpack.c.b16 %v269, %v265
    %v366 = vpack.c.b16 %v270, %v266
    %v367 = vpack.c.b16 %v271, %v267
    %v368 = vpack.c.b16 %v276, %v272
    %v369 = vpack.c.b16 %v277, %v273
    %v370 = vpack.c.b16 %v278, %v274
    %v371 = vpack.c.b16 %v279, %v275
    %v372 = vpack.c.b16 %v284, %v280
    %v373 = vpack.c.b16 %v285, %v281
    %v374 = vpack.c.b16 %v286, %v282
    %v375 = vpack.c.b16 %v287, %v283
    %v376 = vpack.c.b16 %v292, %v288
    %v377 = vpack.c.b16 %v293, %v289
    %v378 = vpack.c.b16 %v294, %v290
    %v379 = vpack.c.b16 %v295, %v291
    %v380 = vpack.c.b16 %v300, %v296
    %v381 = vpack.c.b16 %v301, %v297
    %v382 = vpack.c.b16 %v302, %v298
    %v383 = vpack.c.b16 %v303, %v299
    %v384 = vpack.c.b16 %v308, %v304
    %v385 = vpack.c.b16 %v309, %v305
    %v386 = vpack.c.b16 %v310, %v306
    %v387 = vpack.c.b16 %v311, %v307
    %v388 = vpack.c.b16 %v316, %v312
    %v389 = vpack.c.b16 %v317, %v313
    %v390 = vpack.c.b16 %v318, %v314
    %v391 = vpack.c.b16 %v319, %v315
    %v392 = vpack.c.b16 %v324, %v320
    %v393 = vpack.c.b16 %v325, %v321
    %v394 = vpack.c.b16 %v326, %v322
    %v395 = vpack.c.b16 %v327, %v323
    %v396 = vpack.c.b16 %v332, %v328
    %v397 = vpack.c.b16 %v333, %v329
    %v398 = vpack.c.b16 %v334, %v330
    %v399 = vpack.c.b16 %v335, %v331
    %v465 = vlaneseq
    %v466 = vshrl.u32 %v465, 7
    %v467 = vsub.s32 0, %v466
    %v468 = vrot.slane %v118, %v467
    %v469 = vlaneseq
    %v470 = vshrl.u32 %v469, 7
    %v471 = vsub.s32 1, %v470
    %v472 = vrot.slane %v118, %v471
    %v473 = vlaneseq
    %v474 = vshrl.u32 %v473, 7
    %v475 = vsub.s32 2, %v474
    %v476 = vrot.slane %v118, %v475
    %v477 = vlaneseq
    %v478 = vshrl.u32 %v477, 7
    %v479 = vsub.s32 3, %v478
    %v480 = vrot.slane %v118, %v479
    %485 = vmatprep.subr.bf16.mxu0 %v337
    %486 = vmatpush1.bf16.msra.mxu0 %v336
    %487 = vmatprep.subr.bf16.mxu0 %v341
    %488 = vmatpush1.bf16.msra.mxu0 %v340
    %489 = vmatprep.subr.bf16.mxu0 %v345
    %490 = vmatpush1.bf16.msra.mxu0 %v344
    %491 = vmatprep.subr.bf16.mxu0 %v349
    %492 = vmatpush1.bf16.msra.mxu0 %v348
    %493 = vmatprep.subr.bf16.mxu0 %v353
    %494 = vmatpush1.bf16.msra.mxu0 %v352
    %495 = vmatprep.subr.bf16.mxu0 %v357
    %496 = vmatpush1.bf16.msra.mxu0 %v356
    %497 = vmatprep.subr.bf16.mxu0 %v361
    %498 = vmatpush1.bf16.msra.mxu0 %v360
    %499 = vmatprep.subr.bf16.mxu0 %v365
    %500 = vmatpush1.bf16.msra.mxu0 %v364
    %501 = vmatprep.subr.bf16.mxu0 %v369
    %502 = vmatpush1.bf16.msra.mxu0 %v368
    %503 = vmatprep.subr.bf16.mxu0 %v373
    %504 = vmatpush1.bf16.msra.mxu0 %v372
    %505 = vmatprep.subr.bf16.mxu0 %v377
    %506 = vmatpush1.bf16.msra.mxu0 %v376
    %507 = vmatprep.subr.bf16.mxu0 %v381
    %508 = vmatpush1.bf16.msra.mxu0 %v380
    %509 = vmatprep.subr.bf16.mxu0 %v385
    %510 = vmatpush1.bf16.msra.mxu0 %v384
    %511 = vmatprep.subr.bf16.mxu0 %v389
    %512 = vmatpush1.bf16.msra.mxu0 %v388
    %513 = vmatprep.subr.bf16.mxu0 %v393
    %514 = vmatpush1.bf16.msra.mxu0 %v392
    %515 = vmatprep.subr.bf16.mxu0 %v397
    %516 = vmatpush1.bf16.msra.mxu0 %v396
    %517 = vmatprep.mubr.bf16.mxu0 %v141
    %518 = vmatmul.mubr.bf16.gmra.mrb[0].mxu0 %v134
    %v519 = vpop.f32.mrb[0].mxu0
    %v520 = vadd.f32 %v468, %v519
    %v521 = vpop.f32.mrb[0].mxu0
    %v522 = vadd.f32 %v472, %v521
    %v523 = vpop.f32.mrb[0].mxu0
    %v524 = vpop.f32.mrb[0].mxu0
    %525 = vdwg.mxu0
    %526 = vmatprep.subr.bf16.mxu0 %v339
    %527 = vmatpush1.bf16.msra.mxu0 %v338
    %528 = vmatprep.subr.bf16.mxu0 %v343
    %529 = vmatpush1.bf16.msra.mxu0 %v342
    %530 = vmatprep.subr.bf16.mxu0 %v347
    %531 = vmatpush1.bf16.msra.mxu0 %v346
    %532 = vmatprep.subr.bf16.mxu0 %v351
    %533 = vmatpush1.bf16.msra.mxu0 %v350
    %534 = vmatprep.subr.bf16.mxu0 %v355
    %535 = vmatpush1.bf16.msra.mxu0 %v354
    %536 = vmatprep.subr.bf16.mxu0 %v359
    %537 = vmatpush1.bf16.msra.mxu0 %v358
    %538 = vmatprep.subr.bf16.mxu0 %v363
    %539 = vmatpush1.bf16.msra.mxu0 %v362
    %540 = vmatprep.subr.bf16.mxu0 %v367
    %541 = vmatpush1.bf16.msra.mxu0 %v366
    %542 = vmatprep.subr.bf16.mxu0 %v371
    %543 = vmatpush1.bf16.msra.mxu0 %v370
    %544 = vmatprep.subr.bf16.mxu0 %v375
    %545 = vmatpush1.bf16.msra.mxu0 %v374
    %546 = vmatprep.subr.bf16.mxu0 %v379
    %547 = vmatpush1.bf16.msra.mxu0 %v378
    %548 = vmatprep.subr.bf16.mxu0 %v383
    %549 = vmatpush1.bf16.msra.mxu0 %v382
    %550 = vmatprep.subr.bf16.mxu0 %v387
    %551 = vmatpush1.bf16.msra.mxu0 %v386
    %552 = vmatprep.subr.bf16.mxu0 %v391
    %553 = vmatpush1.bf16.msra.mxu0 %v390
    %554 = vmatprep.subr.bf16.mxu0 %v395
    %555 = vmatpush1.bf16.msra.mxu0 %v394
    %556 = vmatprep.subr.bf16.mxu0 %v399
    %557 = vmatpush1.bf16.msra.mxu0 %v398
    %558 = vmatprep.mubr.bf16.mxu0 %v141
    %559 = vmatmul.mubr.bf16.gmra.mrb[0].mxu0 %v134
    %v560 = vpop.f32.mrb[0].mxu0
    %v561 = vadd.f32 %v476, %v560
    %v562 = vpop.f32.mrb[0].mxu0
    %v563 = vadd.f32 %v480, %v562
    %v564 = vpop.f32.mrb[0].mxu0
    %v565 = vpop.f32.mrb[0].mxu0
    %566 = vdwg.mxu0
    %v567 = vxor.u32 %v520, 2147483648
    %v568 = vmul.f32 %v567, 1.442695
    %v569 = vpow.pop %v568
    %v570 = vadd.f32 %v569, 1.0
    %v571 = vrcp.pop %v570
    %v572 = vmul.f32 1.0, %v571
    %v573 = vxor.u32 %v522, 2147483648
    %v574 = vmul.f32 %v573, 1.442695
    %v575 = vpow.pop %v574
    %v576 = vadd.f32 %v575, 1.0
    %v577 = vrcp.pop %v576
    %v578 = vmul.f32 1.0, %v577
    %v579 = vmul.f32 %v572, %v563
    %v580 = vadd.f32 %v561, %v579
    %v581 = vtanh.pop %v580
    %v582 = vsub.f32 1.0, %v578
    %v583 = vmul.f32 %v582, %v581
    %v584 = vmul.f32 %v578, %v39
    %v585 = vadd.f32 %v583, %v584
    %586 = vst [vmem:[#allocation8] sm:$0x1] %v585
    %s587 = sld [smem:[#allocation4 + $0x1]]
    %s588 = scalar_lea.vmem %s1, %s587
    %v589 = vld [vmem:[%s588] sm:$0x1]
    %v590 = vld [vmem:[#allocation2] sm:$0x1]
    %v591 = vsel %vm45, %v589, %v590
    %592 = vst [vmem:[#allocation2] sm:$0x1] %v591
    %v593 = vpack.c.bf16 %v585, %v585
    %v594 = vld [vmem:[#allocation2 + $0x1] sm:$0x1]
    %v595 = vsel %vm45, %v593, %v594
    %596 = vst [vmem:[#allocation2 + $0x1] sm:$0x1] %v595
    %v597 = vld [vmem:[#allocation2] sm:$0x3]
    %v598 = vld [vmem:[#allocation5] sm:$0xff]
    %v599 = vld [vmem:[#allocation5 + $0x8] sm:$0xff]
    %v600 = vld [vmem:[#allocation5 + $0x10] sm:$0xff]
    %v601 = vld [vmem:[#allocation5 + $0x18] sm:$0xff]
    %v602 = vld [vmem:[#allocation5 + $0x20] sm:$0xff]
    %v603 = vld [vmem:[#allocation5 + $0x28] sm:$0xff]
    %v604 = vld [vmem:[#allocation5 + $0x30] sm:$0xff]
    %v605 = vld [vmem:[#allocation5 + $0x38] sm:$0xff]
    %v606 = vld [vmem:[#allocation5 + $0x40] sm:$0xff]
    %v607 = vld [vmem:[#allocation5 + $0x48] sm:$0xff]
    %v608 = vld [vmem:[#allocation5 + $0x50] sm:$0xff]
    %v609 = vld [vmem:[#allocation5 + $0x58] sm:$0xff]
    %v610 = vld [vmem:[#allocation5 + $0x60] sm:$0xff]
    %v611 = vld [vmem:[#allocation5 + $0x68] sm:$0xff]
    %v612 = vld [vmem:[#allocation5 + $0x70] sm:$0xff]
    %v613 = vld [vmem:[#allocation5 + $0x78] sm:$0xff]
    %v614 = vld [vmem:[#allocation5 + $0x80] sm:$0xff]
    %v615 = vld [vmem:[#allocation5 + $0x88] sm:$0xff]
    %v616 = vld [vmem:[#allocation5 + $0x90] sm:$0xff]
    %v617 = vld [vmem:[#allocation5 + $0x98] sm:$0xff]
    %v618 = vld [vmem:[#allocation5 + $0xa0] sm:$0xff]
    %v619 = vld [vmem:[#allocation5 + $0xa8] sm:$0xff]
    %v620 = vld [vmem:[#allocation5 + $0xb0] sm:$0xff]
    %v621 = vld [vmem:[#allocation5 + $0xb8] sm:$0xff]
    %v622 = vld [vmem:[#allocation5 + $0xc0] sm:$0xff]
    %v623 = vld [vmem:[#allocation5 + $0xc8] sm:$0xff]
    %v624 = vld [vmem:[#allocation5 + $0xd0] sm:$0xff]
    %v625 = vld [vmem:[#allocation5 + $0xd8] sm:$0xff]
    %v626 = vld [vmem:[#allocation5 + $0xe0] sm:$0xff]
    %v627 = vld [vmem:[#allocation5 + $0xe8] sm:$0xff]
    %v628 = vld [vmem:[#allocation5 + $0xf0] sm:$0xff]
    %v629 = vld [vmem:[#allocation5 + $0xf8] sm:$0xff]
    %v630 = vld [vmem:[#allocation5 + $0x100] sm:$0xff]
    %v631 = vld [vmem:[#allocation5 + $0x108] sm:$0xff]
    %v632 = vld [vmem:[#allocation5 + $0x110] sm:$0xff]
    %v633 = vld [vmem:[#allocation5 + $0x118] sm:$0xff]
    %v634 = vld [vmem:[#allocation5 + $0x120] sm:$0xff]
    %v635 = vld [vmem:[#allocation5 + $0x128] sm:$0xff]
    %v636 = vld [vmem:[#allocation5 + $0x130] sm:$0xff]
    %v637 = vld [vmem:[#allocation5 + $0x138] sm:$0xff]
    %v638 = vld [vmem:[#allocation5 + $0x140] sm:$0xff]
    %v639 = vld [vmem:[#allocation5 + $0x148] sm:$0xff]
    %v640 = vld [vmem:[#allocation5 + $0x150] sm:$0xff]
    %v641 = vld [vmem:[#allocation5 + $0x158] sm:$0xff]
    %v642 = vld [vmem:[#allocation5 + $0x160] sm:$0xff]
    %v643 = vld [vmem:[#allocation5 + $0x168] sm:$0xff]
    %v644 = vld [vmem:[#allocation5 + $0x170] sm:$0xff]
    %v645 = vld [vmem:[#allocation5 + $0x178] sm:$0xff]
    %v646 = vld [vmem:[#allocation5 + $0x180] sm:$0xff]
    %v647 = vld [vmem:[#allocation5 + $0x188] sm:$0xff]
    %v648 = vld [vmem:[#allocation5 + $0x190] sm:$0xff]
    %v649 = vld [vmem:[#allocation5 + $0x198] sm:$0xff]
    %v650 = vld [vmem:[#allocation5 + $0x1a0] sm:$0xff]
    %v651 = vld [vmem:[#allocation5 + $0x1a8] sm:$0xff]
    %v652 = vld [vmem:[#allocation5 + $0x1b0] sm:$0xff]
    %v653 = vld [vmem:[#allocation5 + $0x1b8] sm:$0xff]
    %v654 = vld [vmem:[#allocation5 + $0x1c0] sm:$0xff]
    %v655 = vld [vmem:[#allocation5 + $0x1c8] sm:$0xff]
    %v656 = vld [vmem:[#allocation5 + $0x1d0] sm:$0xff]
    %v657 = vld [vmem:[#allocation5 + $0x1d8] sm:$0xff]
    %v658 = vld [vmem:[#allocation5 + $0x1e0] sm:$0xff]
    %v659 = vld [vmem:[#allocation5 + $0x1e8] sm:$0xff]
    %v660 = vld [vmem:[#allocation5 + $0x1f0] sm:$0xff]
    %v661 = vld [vmem:[#allocation5 + $0x1f8] sm:$0xff]
    %v662 = vld [vmem:[%s4] sm:$0xf]
    %v665 = vunpack.c.l.s4 1966171168
    %v666 = vunpack.c.0.s8 %v665
    %v667 = vlaneseq
    %v668 = vshrl.u32 %v667, 7
    %v669 = vsub.s32 %v666, %v668
    %v670 = vrot.slane %v597, %v669
    %v671 = vcombine.high %v670, %v670
    %v673 = vunpack.c.l.s4 1966171168
    %v674 = vunpack.c.0.s8 %v673
    %v675 = vlaneseq
    %v676 = vshrl.u32 %v675, 7
    %v677 = vsub.s32 %v674, %v676
    %v678 = vrot.slane %v670, %v677
    %v680 = vunpack.c.l.s4 1966171168
    %v681 = vunpack.c.0.s8 %v680
    %v682 = vlaneseq
    %v683 = vshrl.u32 %v682, 7
    %v684 = vsub.s32 %v681, %v683
    %v685 = vrot.slane %v671, %v684
    %v752 = vunpack.c.l.b16 %v598
    %v753 = vunpack.c.h.b16 %v598
    %v754 = vunpack.c.l.b16 %v599
    %v755 = vunpack.c.h.b16 %v599
    %v756 = vunpack.c.l.b16 %v600
    %v757 = vunpack.c.h.b16 %v600
    %v758 = vunpack.c.l.b16 %v601
    %v759 = vunpack.c.h.b16 %v601
    %v760 = vunpack.c.l.b16 %v602
    %v761 = vunpack.c.h.b16 %v602
    %v762 = vunpack.c.l.b16 %v603
    %v763 = vunpack.c.h.b16 %v603
    %v764 = vunpack.c.l.b16 %v604
    %v765 = vunpack.c.h.b16 %v604
    %v766 = vunpack.c.l.b16 %v605
    %v767 = vunpack.c.h.b16 %v605
    %v768 = vunpack.c.l.b16 %v606
    %v769 = vunpack.c.h.b16 %v606
    %v770 = vunpack.c.l.b16 %v607
    %v771 = vunpack.c.h.b16 %v607
    %v772 = vunpack.c.l.b16 %v608
    %v773 = vunpack.c.h.b16 %v608
    %v774 = vunpack.c.l.b16 %v609
    %v775 = vunpack.c.h.b16 %v609
    %v776 = vunpack.c.l.b16 %v610
    %v777 = vunpack.c.h.b16 %v610
    %v778 = vunpack.c.l.b16 %v611
    %v779 = vunpack.c.h.b16 %v611
    %v780 = vunpack.c.l.b16 %v612
    %v781 = vunpack.c.h.b16 %v612
    %v782 = vunpack.c.l.b16 %v613
    %v783 = vunpack.c.h.b16 %v613
    %v784 = vunpack.c.l.b16 %v614
    %v785 = vunpack.c.h.b16 %v614
    %v786 = vunpack.c.l.b16 %v615
    %v787 = vunpack.c.h.b16 %v615
    %v788 = vunpack.c.l.b16 %v616
    %v789 = vunpack.c.h.b16 %v616
    %v790 = vunpack.c.l.b16 %v617
    %v791 = vunpack.c.h.b16 %v617
    %v792 = vunpack.c.l.b16 %v618
    %v793 = vunpack.c.h.b16 %v618
    %v794 = vunpack.c.l.b16 %v619
    %v795 = vunpack.c.h.b16 %v619
    %v796 = vunpack.c.l.b16 %v620
    %v797 = vunpack.c.h.b16 %v620
    %v798 = vunpack.c.l.b16 %v621
    %v799 = vunpack.c.h.b16 %v621
    %v800 = vunpack.c.l.b16 %v622
    %v801 = vunpack.c.h.b16 %v622
    %v802 = vunpack.c.l.b16 %v623
    %v803 = vunpack.c.h.b16 %v623
    %v804 = vunpack.c.l.b16 %v624
    %v805 = vunpack.c.h.b16 %v624
    %v806 = vunpack.c.l.b16 %v625
    %v807 = vunpack.c.h.b16 %v625
    %v808 = vunpack.c.l.b16 %v626
    %v809 = vunpack.c.h.b16 %v626
    %v810 = vunpack.c.l.b16 %v627
    %v811 = vunpack.c.h.b16 %v627
    %v812 = vunpack.c.l.b16 %v628
    %v813 = vunpack.c.h.b16 %v628
    %v814 = vunpack.c.l.b16 %v629
    %v815 = vunpack.c.h.b16 %v629
    %v816 = vunpack.c.l.b16 %v630
    %v817 = vunpack.c.h.b16 %v630
    %v818 = vunpack.c.l.b16 %v631
    %v819 = vunpack.c.h.b16 %v631
    %v820 = vunpack.c.l.b16 %v632
    %v821 = vunpack.c.h.b16 %v632
    %v822 = vunpack.c.l.b16 %v633
    %v823 = vunpack.c.h.b16 %v633
    %v824 = vunpack.c.l.b16 %v634
    %v825 = vunpack.c.h.b16 %v634
    %v826 = vunpack.c.l.b16 %v635
    %v827 = vunpack.c.h.b16 %v635
    %v828 = vunpack.c.l.b16 %v636
    %v829 = vunpack.c.h.b16 %v636
    %v830 = vunpack.c.l.b16 %v637
    %v831 = vunpack.c.h.b16 %v637
    %v832 = vunpack.c.l.b16 %v638
    %v833 = vunpack.c.h.b16 %v638
    %v834 = vunpack.c.l.b16 %v639
    %v835 = vunpack.c.h.b16 %v639
    %v836 = vunpack.c.l.b16 %v640
    %v837 = vunpack.c.h.b16 %v640
    %v838 = vunpack.c.l.b16 %v641
    %v839 = vunpack.c.h.b16 %v641
    %v840 = vunpack.c.l.b16 %v642
    %v841 = vunpack.c.h.b16 %v642
    %v842 = vunpack.c.l.b16 %v643
    %v843 = vunpack.c.h.b16 %v643
    %v844 = vunpack.c.l.b16 %v644
    %v845 = vunpack.c.h.b16 %v644
    %v846 = vunpack.c.l.b16 %v645
    %v847 = vunpack.c.h.b16 %v645
    %v848 = vunpack.c.l.b16 %v646
    %v849 = vunpack.c.h.b16 %v646
    %v850 = vunpack.c.l.b16 %v647
    %v851 = vunpack.c.h.b16 %v647
    %v852 = vunpack.c.l.b16 %v648
    %v853 = vunpack.c.h.b16 %v648
    %v854 = vunpack.c.l.b16 %v649
    %v855 = vunpack.c.h.b16 %v649
    %v856 = vunpack.c.l.b16 %v650
    %v857 = vunpack.c.h.b16 %v650
    %v858 = vunpack.c.l.b16 %v651
    %v859 = vunpack.c.h.b16 %v651
    %v860 = vunpack.c.l.b16 %v652
    %v861 = vunpack.c.h.b16 %v652
    %v862 = vunpack.c.l.b16 %v653
    %v863 = vunpack.c.h.b16 %v653
    %v864 = vunpack.c.l.b16 %v654
    %v865 = vunpack.c.h.b16 %v654
    %v866 = vunpack.c.l.b16 %v655
    %v867 = vunpack.c.h.b16 %v655
    %v868 = vunpack.c.l.b16 %v656
    %v869 = vunpack.c.h.b16 %v656
    %v870 = vunpack.c.l.b16 %v657
    %v871 = vunpack.c.h.b16 %v657
    %v872 = vunpack.c.l.b16 %v658
    %v873 = vunpack.c.h.b16 %v658
    %v874 = vunpack.c.l.b16 %v659
    %v875 = vunpack.c.h.b16 %v659
    %v876 = vunpack.c.l.b16 %v660
    %v877 = vunpack.c.h.b16 %v660
    %v878 = vunpack.c.l.b16 %v661
    %v879 = vunpack.c.h.b16 %v661
    %v880 = vpack.c.b16 %v756, %v752
    %v881 = vpack.c.b16 %v757, %v753
    %v882 = vpack.c.b16 %v758, %v754
    %v883 = vpack.c.b16 %v759, %v755
    %v884 = vpack.c.b16 %v764, %v760
    %v885 = vpack.c.b16 %v765, %v761
    %v886 = vpack.c.b16 %v766, %v762
    %v887 = vpack.c.b16 %v767, %v763
    %v888 = vpack.c.b16 %v772, %v768
    %v889 = vpack.c.b16 %v773, %v769
    %v890 = vpack.c.b16 %v774, %v770
    %v891 = vpack.c.b16 %v775, %v771
    %v892 = vpack.c.b16 %v780, %v776
    %v893 = vpack.c.b16 %v781, %v777
    %v894 = vpack.c.b16 %v782, %v778
    %v895 = vpack.c.b16 %v783, %v779
    %v896 = vpack.c.b16 %v788, %v784
    %v897 = vpack.c.b16 %v789, %v785
    %v898 = vpack.c.b16 %v790, %v786
    %v899 = vpack.c.b16 %v791, %v787
    %v900 = vpack.c.b16 %v796, %v792
    %v901 = vpack.c.b16 %v797, %v793
    %v902 = vpack.c.b16 %v798, %v794
    %v903 = vpack.c.b16 %v799, %v795
    %v904 = vpack.c.b16 %v804, %v800
    %v905 = vpack.c.b16 %v805, %v801
    %v906 = vpack.c.b16 %v806, %v802
    %v907 = vpack.c.b16 %v807, %v803
    %v908 = vpack.c.b16 %v812, %v808
    %v909 = vpack.c.b16 %v813, %v809
    %v910 = vpack.c.b16 %v814, %v810
    %v911 = vpack.c.b16 %v815, %v811
    %v912 = vpack.c.b16 %v820, %v816
    %v913 = vpack.c.b16 %v821, %v817
    %v914 = vpack.c.b16 %v822, %v818
    %v915 = vpack.c.b16 %v823, %v819
    %v916 = vpack.c.b16 %v828, %v824
    %v917 = vpack.c.b16 %v829, %v825
    %v918 = vpack.c.b16 %v830, %v826
    %v919 = vpack.c.b16 %v831, %v827
    %v920 = vpack.c.b16 %v836, %v832
    %v921 = vpack.c.b16 %v837, %v833
    %v922 = vpack.c.b16 %v838, %v834
    %v923 = vpack.c.b16 %v839, %v835
    %v924 = vpack.c.b16 %v844, %v840
    %v925 = vpack.c.b16 %v845, %v841
    %v926 = vpack.c.b16 %v846, %v842
    %v927 = vpack.c.b16 %v847, %v843
    %v928 = vpack.c.b16 %v852, %v848
    %v929 = vpack.c.b16 %v853, %v849
    %v930 = vpack.c.b16 %v854, %v850
    %v931 = vpack.c.b16 %v855, %v851
    %v932 = vpack.c.b16 %v860, %v856
    %v933 = vpack.c.b16 %v861, %v857
    %v934 = vpack.c.b16 %v862, %v858
    %v935 = vpack.c.b16 %v863, %v859
    %v936 = vpack.c.b16 %v868, %v864
    %v937 = vpack.c.b16 %v869, %v865
    %v938 = vpack.c.b16 %v870, %v866
    %v939 = vpack.c.b16 %v871, %v867
    %v940 = vpack.c.b16 %v876, %v872
    %v941 = vpack.c.b16 %v877, %v873
    %v942 = vpack.c.b16 %v878, %v874
    %v943 = vpack.c.b16 %v879, %v875
    %v1009 = vlaneseq
    %v1010 = vshrl.u32 %v1009, 7
    %v1011 = vsub.s32 0, %v1010
    %v1012 = vrot.slane %v662, %v1011
    %v1013 = vlaneseq
    %v1014 = vshrl.u32 %v1013, 7
    %v1015 = vsub.s32 1, %v1014
    %v1016 = vrot.slane %v662, %v1015
    %v1017 = vlaneseq
    %v1018 = vshrl.u32 %v1017, 7
    %v1019 = vsub.s32 2, %v1018
    %v1020 = vrot.slane %v662, %v1019
    %v1021 = vlaneseq
    %v1022 = vshrl.u32 %v1021, 7
    %v1023 = vsub.s32 3, %v1022
    %v1024 = vrot.slane %v662, %v1023
    %1029 = vmatprep.subr.bf16.mxu0 %v881
    %1030 = vmatpush1.bf16.msra.mxu0 %v880
    %1031 = vmatprep.subr.bf16.mxu0 %v885
    %1032 = vmatpush1.bf16.msra.mxu0 %v884
    %1033 = vmatprep.subr.bf16.mxu0 %v889
    %1034 = vmatpush1.bf16.msra.mxu0 %v888
    %1035 = vmatprep.subr.bf16.mxu0 %v893
    %1036 = vmatpush1.bf16.msra.mxu0 %v892
    %1037 = vmatprep.subr.bf16.mxu0 %v897
    %1038 = vmatpush1.bf16.msra.mxu0 %v896
    %1039 = vmatprep.subr.bf16.mxu0 %v901
    %1040 = vmatpush1.bf16.msra.mxu0 %v900
    %1041 = vmatprep.subr.bf16.mxu0 %v905
    %1042 = vmatpush1.bf16.msra.mxu0 %v904
    %1043 = vmatprep.subr.bf16.mxu0 %v909
    %1044 = vmatpush1.bf16.msra.mxu0 %v908
    %1045 = vmatprep.subr.bf16.mxu0 %v913
    %1046 = vmatpush1.bf16.msra.mxu0 %v912
    %1047 = vmatprep.subr.bf16.mxu0 %v917
    %1048 = vmatpush1.bf16.msra.mxu0 %v916
    %1049 = vmatprep.subr.bf16.mxu0 %v921
    %1050 = vmatpush1.bf16.msra.mxu0 %v920
    %1051 = vmatprep.subr.bf16.mxu0 %v925
    %1052 = vmatpush1.bf16.msra.mxu0 %v924
    %1053 = vmatprep.subr.bf16.mxu0 %v929
    %1054 = vmatpush1.bf16.msra.mxu0 %v928
    %1055 = vmatprep.subr.bf16.mxu0 %v933
    %1056 = vmatpush1.bf16.msra.mxu0 %v932
    %1057 = vmatprep.subr.bf16.mxu0 %v937
    %1058 = vmatpush1.bf16.msra.mxu0 %v936
    %1059 = vmatprep.subr.bf16.mxu0 %v941
    %1060 = vmatpush1.bf16.msra.mxu0 %v940
    %1061 = vmatprep.mubr.bf16.mxu0 %v685
    %1062 = vmatmul.mubr.bf16.gmra.mrb[0].mxu0 %v678
    %v1063 = vpop.f32.mrb[0].mxu0
    %v1064 = vadd.f32 %v1012, %v1063
    %v1065 = vpop.f32.mrb[0].mxu0
    %v1066 = vadd.f32 %v1016, %v1065
    %v1067 = vpop.f32.mrb[0].mxu0
    %v1068 = vpop.f32.mrb[0].mxu0
    %1069 = vdwg.mxu0
    %1070 = vmatprep.subr.bf16.mxu0 %v883
    %1071 = vmatpush1.bf16.msra.mxu0 %v882
    %1072 = vmatprep.subr.bf16.mxu0 %v887
    %1073 = vmatpush1.bf16.msra.mxu0 %v886
    %1074 = vmatprep.subr.bf16.mxu0 %v891
    %1075 = vmatpush1.bf16.msra.mxu0 %v890
    %1076 = vmatprep.subr.bf16.mxu0 %v895
    %1077 = vmatpush1.bf16.msra.mxu0 %v894
    %1078 = vmatprep.subr.bf16.mxu0 %v899
    %1079 = vmatpush1.bf16.msra.mxu0 %v898
    %1080 = vmatprep.subr.bf16.mxu0 %v903
    %1081 = vmatpush1.bf16.msra.mxu0 %v902
    %1082 = vmatprep.subr.bf16.mxu0 %v907
    %1083 = vmatpush1.bf16.msra.mxu0 %v906
    %1084 = vmatprep.subr.bf16.mxu0 %v911
    %1085 = vmatpush1.bf16.msra.mxu0 %v910
    %1086 = vmatprep.subr.bf16.mxu0 %v915
    %1087 = vmatpush1.bf16.msra.mxu0 %v914
    %1088 = vmatprep.subr.bf16.mxu0 %v919
    %1089 = vmatpush1.bf16.msra.mxu0 %v918
    %1090 = vmatprep.subr.bf16.mxu0 %v923
    %1091 = vmatpush1.bf16.msra.mxu0 %v922
    %1092 = vmatprep.subr.bf16.mxu0 %v927
    %1093 = vmatpush1.bf16.msra.mxu0 %v926
    %1094 = vmatprep.subr.bf16.mxu0 %v931
    %1095 = vmatpush1.bf16.msra.mxu0 %v930
    %1096 = vmatprep.subr.bf16.mxu0 %v935
    %1097 = vmatpush1.bf16.msra.mxu0 %v934
    %1098 = vmatprep.subr.bf16.mxu0 %v939
    %1099 = vmatpush1.bf16.msra.mxu0 %v938
    %1100 = vmatprep.subr.bf16.mxu0 %v943
    %1101 = vmatpush1.bf16.msra.mxu0 %v942
    %1102 = vmatprep.mubr.bf16.mxu0 %v685
    %1103 = vmatmul.mubr.bf16.gmra.mrb[0].mxu0 %v678
    %v1104 = vpop.f32.mrb[0].mxu0
    %v1105 = vadd.f32 %v1020, %v1104
    %v1106 = vpop.f32.mrb[0].mxu0
    %v1107 = vadd.f32 %v1024, %v1106
    %v1108 = vpop.f32.mrb[0].mxu0
    %v1109 = vpop.f32.mrb[0].mxu0
    %1110 = vdwg.mxu0
    %v1111 = vxor.u32 %v1064, 2147483648
    %v1112 = vmul.f32 %v1111, 1.442695
    %v1113 = vpow.pop %v1112
    %v1114 = vadd.f32 %v1113, 1.0
    %v1115 = vrcp.pop %v1114
    %v1116 = vmul.f32 1.0, %v1115
    %v1117 = vxor.u32 %v1066, 2147483648
    %v1118 = vmul.f32 %v1117, 1.442695
    %v1119 = vpow.pop %v1118
    %v1120 = vadd.f32 %v1119, 1.0
    %v1121 = vrcp.pop %v1120
    %v1122 = vmul.f32 1.0, %v1121
    %v1123 = vmul.f32 %v1116, %v1107
    %v1124 = vadd.f32 %v1105, %v1123
    %v1125 = vtanh.pop %v1124
    %v1126 = vsub.f32 1.0, %v1122
    %v1127 = vmul.f32 %v1126, %v1125
    %v1128 = vmul.f32 %v1122, %v585
    %v1129 = vadd.f32 %v1127, %v1128
    %s1130 = scalar_lea.vmem [#allocation8], 1
    %1131 = vst [vmem:[%s1130] sm:$0x1] %v1129
    %s1132 = sld [smem:[#allocation4 + $0x2]]
    %s1133 = scalar_lea.vmem %s1, %s1132
    %v1134 = vld [vmem:[%s1133] sm:$0x1]
    %v1135 = vld [vmem:[#allocation2] sm:$0x1]
    %v1136 = vsel %vm45, %v1134, %v1135
    %1137 = vst [vmem:[#allocation2] sm:$0x1] %v1136
    %v1138 = vpack.c.bf16 %v1129, %v1129
    %v1139 = vld [vmem:[#allocation2 + $0x1] sm:$0x1]
    %v1140 = vsel %vm45, %v1138, %v1139
    %1141 = vst [vmem:[#allocation2 + $0x1] sm:$0x1] %v1140
    %v1142 = vld [vmem:[#allocation2] sm:$0x3]
    %v1143 = vld [vmem:[#allocation5] sm:$0xff]
    %v1144 = vld [vmem:[#allocation5 + $0x8] sm:$0xff]
    %v1145 = vld [vmem:[#allocation5 + $0x10] sm:$0xff]
    %v1146 = vld [vmem:[#allocation5 + $0x18] sm:$0xff]
    %v1147 = vld [vmem:[#allocation5 + $0x20] sm:$0xff]
    %v1148 = vld [vmem:[#allocation5 + $0x28] sm:$0xff]
    %v1149 = vld [vmem:[#allocation5 + $0x30] sm:$0xff]
    %v1150 = vld [vmem:[#allocation5 + $0x38] sm:$0xff]
    %v1151 = vld [vmem:[#allocation5 + $0x40] sm:$0xff]
    %v1152 = vld [vmem:[#allocation5 + $0x48] sm:$0xff]
    %v1153 = vld [vmem:[#allocation5 + $0x50] sm:$0xff]
    %v1154 = vld [vmem:[#allocation5 + $0x58] sm:$0xff]
    %v1155 = vld [vmem:[#allocation5 + $0x60] sm:$0xff]
    %v1156 = vld [vmem:[#allocation5 + $0x68] sm:$0xff]
    %v1157 = vld [vmem:[#allocation5 + $0x70] sm:$0xff]
    %v1158 = vld [vmem:[#allocation5 + $0x78] sm:$0xff]
    %v1159 = vld [vmem:[#allocation5 + $0x80] sm:$0xff]
    %v1160 = vld [vmem:[#allocation5 + $0x88] sm:$0xff]
    %v1161 = vld [vmem:[#allocation5 + $0x90] sm:$0xff]
    %v1162 = vld [vmem:[#allocation5 + $0x98] sm:$0xff]
    %v1163 = vld [vmem:[#allocation5 + $0xa0] sm:$0xff]
    %v1164 = vld [vmem:[#allocation5 + $0xa8] sm:$0xff]
    %v1165 = vld [vmem:[#allocation5 + $0xb0] sm:$0xff]
    %v1166 = vld [vmem:[#allocation5 + $0xb8] sm:$0xff]
    %v1167 = vld [vmem:[#allocation5 + $0xc0] sm:$0xff]
    %v1168 = vld [vmem:[#allocation5 + $0xc8] sm:$0xff]
    %v1169 = vld [vmem:[#allocation5 + $0xd0] sm:$0xff]
    %v1170 = vld [vmem:[#allocation5 + $0xd8] sm:$0xff]
    %v1171 = vld [vmem:[#allocation5 + $0xe0] sm:$0xff]
    %v1172 = vld [vmem:[#allocation5 + $0xe8] sm:$0xff]
    %v1173 = vld [vmem:[#allocation5 + $0xf0] sm:$0xff]
    %v1174 = vld [vmem:[#allocation5 + $0xf8] sm:$0xff]
    %v1175 = vld [vmem:[#allocation5 + $0x100] sm:$0xff]
    %v1176 = vld [vmem:[#allocation5 + $0x108] sm:$0xff]
    %v1177 = vld [vmem:[#allocation5 + $0x110] sm:$0xff]
    %v1178 = vld [vmem:[#allocation5 + $0x118] sm:$0xff]
    %v1179 = vld [vmem:[#allocation5 + $0x120] sm:$0xff]
    %v1180 = vld [vmem:[#allocation5 + $0x128] sm:$0xff]
    %v1181 = vld [vmem:[#allocation5 + $0x130] sm:$0xff]
    %v1182 = vld [vmem:[#allocation5 + $0x138] sm:$0xff]
    %v1183 = vld [vmem:[#allocation5 + $0x140] sm:$0xff]
    %v1184 = vld [vmem:[#allocation5 + $0x148] sm:$0xff]
    %v1185 = vld [vmem:[#allocation5 + $0x150] sm:$0xff]
    %v1186 = vld [vmem:[#allocation5 + $0x158] sm:$0xff]
    %v1187 = vld [vmem:[#allocation5 + $0x160] sm:$0xff]
    %v1188 = vld [vmem:[#allocation5 + $0x168] sm:$0xff]
    %v1189 = vld [vmem:[#allocation5 + $0x170] sm:$0xff]
    %v1190 = vld [vmem:[#allocation5 + $0x178] sm:$0xff]
    %v1191 = vld [vmem:[#allocation5 + $0x180] sm:$0xff]
    %v1192 = vld [vmem:[#allocation5 + $0x188] sm:$0xff]
    %v1193 = vld [vmem:[#allocation5 + $0x190] sm:$0xff]
    %v1194 = vld [vmem:[#allocation5 + $0x198] sm:$0xff]
    %v1195 = vld [vmem:[#allocation5 + $0x1a0] sm:$0xff]
    %v1196 = vld [vmem:[#allocation5 + $0x1a8] sm:$0xff]
    %v1197 = vld [vmem:[#allocation5 + $0x1b0] sm:$0xff]
    %v1198 = vld [vmem:[#allocation5 + $0x1b8] sm:$0xff]
    %v1199 = vld [vmem:[#allocation5 + $0x1c0] sm:$0xff]
    %v1200 = vld [vmem:[#allocation5 + $0x1c8] sm:$0xff]
    %v1201 = vld [vmem:[#allocation5 + $0x1d0] sm:$0xff]
    %v1202 = vld [vmem:[#allocation5 + $0x1d8] sm:$0xff]
    %v1203 = vld [vmem:[#allocation5 + $0x1e0] sm:$0xff]
    %v1204 = vld [vmem:[#allocation5 + $0x1e8] sm:$0xff]
    %v1205 = vld [vmem:[#allocation5 + $0x1f0] sm:$0xff]
    %v1206 = vld [vmem:[#allocation5 + $0x1f8] sm:$0xff]
    %v1207 = vld [vmem:[%s4] sm:$0xf]
    %v1210 = vunpack.c.l.s4 1966171168
    %v1211 = vunpack.c.0.s8 %v1210
    %v1212 = vlaneseq
    %v1213 = vshrl.u32 %v1212, 7
    %v1214 = vsub.s32 %v1211, %v1213
    %v1215 = vrot.slane %v1142, %v1214
    %v1216 = vcombine.high %v1215, %v1215
    %v1218 = vunpack.c.l.s4 1966171168
    %v1219 = vunpack.c.0.s8 %v1218
    %v1220 = vlaneseq
    %v1221 = vshrl.u32 %v1220, 7
    %v1222 = vsub.s32 %v1219, %v1221
    %v1223 = vrot.slane %v1215, %v1222
    %v1225 = vunpack.c.l.s4 1966171168
    %v1226 = vunpack.c.0.s8 %v1225
    %v1227 = vlaneseq
    %v1228 = vshrl.u32 %v1227, 7
    %v1229 = vsub.s32 %v1226, %v1228
    %v1230 = vrot.slane %v1216, %v1229
    %v1297 = vunpack.c.l.b16 %v1143
    %v1298 = vunpack.c.h.b16 %v1143
    %v1299 = vunpack.c.l.b16 %v1144
    %v1300 = vunpack.c.h.b16 %v1144
    %v1301 = vunpack.c.l.b16 %v1145
    %v1302 = vunpack.c.h.b16 %v1145
    %v1303 = vunpack.c.l.b16 %v1146
    %v1304 = vunpack.c.h.b16 %v1146
    %v1305 = vunpack.c.l.b16 %v1147
    %v1306 = vunpack.c.h.b16 %v1147
    %v1307 = vunpack.c.l.b16 %v1148
    %v1308 = vunpack.c.h.b16 %v1148
    %v1309 = vunpack.c.l.b16 %v1149
    %v1310 = vunpack.c.h.b16 %v1149
    %v1311 = vunpack.c.l.b16 %v1150
    %v1312 = vunpack.c.h.b16 %v1150
    %v1313 = vunpack.c.l.b16 %v1151
    %v1314 = vunpack.c.h.b16 %v1151
    %v1315 = vunpack.c.l.b16 %v1152
    %v1316 = vunpack.c.h.b16 %v1152
    %v1317 = vunpack.c.l.b16 %v1153
    %v1318 = vunpack.c.h.b16 %v1153
    %v1319 = vunpack.c.l.b16 %v1154
    %v1320 = vunpack.c.h.b16 %v1154
    %v1321 = vunpack.c.l.b16 %v1155
    %v1322 = vunpack.c.h.b16 %v1155
    %v1323 = vunpack.c.l.b16 %v1156
    %v1324 = vunpack.c.h.b16 %v1156
    %v1325 = vunpack.c.l.b16 %v1157
    %v1326 = vunpack.c.h.b16 %v1157
    %v1327 = vunpack.c.l.b16 %v1158
    %v1328 = vunpack.c.h.b16 %v1158
    %v1329 = vunpack.c.l.b16 %v1159
    %v1330 = vunpack.c.h.b16 %v1159
    %v1331 = vunpack.c.l.b16 %v1160
    %v1332 = vunpack.c.h.b16 %v1160
    %v1333 = vunpack.c.l.b16 %v1161
    %v1334 = vunpack.c.h.b16 %v1161
    %v1335 = vunpack.c.l.b16 %v1162
    %v1336 = vunpack.c.h.b16 %v1162
    %v1337 = vunpack.c.l.b16 %v1163
    %v1338 = vunpack.c.h.b16 %v1163
    %v1339 = vunpack.c.l.b16 %v1164
    %v1340 = vunpack.c.h.b16 %v1164
    %v1341 = vunpack.c.l.b16 %v1165
    %v1342 = vunpack.c.h.b16 %v1165
    %v1343 = vunpack.c.l.b16 %v1166
    %v1344 = vunpack.c.h.b16 %v1166
    %v1345 = vunpack.c.l.b16 %v1167
    %v1346 = vunpack.c.h.b16 %v1167
    %v1347 = vunpack.c.l.b16 %v1168
    %v1348 = vunpack.c.h.b16 %v1168
    %v1349 = vunpack.c.l.b16 %v1169
    %v1350 = vunpack.c.h.b16 %v1169
    %v1351 = vunpack.c.l.b16 %v1170
    %v1352 = vunpack.c.h.b16 %v1170
    %v1353 = vunpack.c.l.b16 %v1171
    %v1354 = vunpack.c.h.b16 %v1171
    %v1355 = vunpack.c.l.b16 %v1172
    %v1356 = vunpack.c.h.b16 %v1172
    %v1357 = vunpack.c.l.b16 %v1173
    %v1358 = vunpack.c.h.b16 %v1173
    %v1359 = vunpack.c.l.b16 %v1174
    %v1360 = vunpack.c.h.b16 %v1174
    %v1361 = vunpack.c.l.b16 %v1175
    %v1362 = vunpack.c.h.b16 %v1175
    %v1363 = vunpack.c.l.b16 %v1176
    %v1364 = vunpack.c.h.b16 %v1176
    %v1365 = vunpack.c.l.b16 %v1177
    %v1366 = vunpack.c.h.b16 %v1177
    %v1367 = vunpack.c.l.b16 %v1178
    %v1368 = vunpack.c.h.b16 %v1178
    %v1369 = vunpack.c.l.b16 %v1179
    %v1370 = vunpack.c.h.b16 %v1179
    %v1371 = vunpack.c.l.b16 %v1180
    %v1372 = vunpack.c.h.b16 %v1180
    %v1373 = vunpack.c.l.b16 %v1181
    %v1374 = vunpack.c.h.b16 %v1181
    %v1375 = vunpack.c.l.b16 %v1182
    %v1376 = vunpack.c.h.b16 %v1182
    %v1377 = vunpack.c.l.b16 %v1183
    %v1378 = vunpack.c.h.b16 %v1183
    %v1379 = vunpack.c.l.b16 %v1184
    %v1380 = vunpack.c.h.b16 %v1184
    %v1381 = vunpack.c.l.b16 %v1185
    %v1382 = vunpack.c.h.b16 %v1185
    %v1383 = vunpack.c.l.b16 %v1186
    %v1384 = vunpack.c.h.b16 %v1186
    %v1385 = vunpack.c.l.b16 %v1187
    %v1386 = vunpack.c.h.b16 %v1187
    %v1387 = vunpack.c.l.b16 %v1188
    %v1388 = vunpack.c.h.b16 %v1188
    %v1389 = vunpack.c.l.b16 %v1189
    %v1390 = vunpack.c.h.b16 %v1189
    %v1391 = vunpack.c.l.b16 %v1190
    %v1392 = vunpack.c.h.b16 %v1190
    %v1393 = vunpack.c.l.b16 %v1191
    %v1394 = vunpack.c.h.b16 %v1191
    %v1395 = vunpack.c.l.b16 %v1192
    %v1396 = vunpack.c.h.b16 %v1192
    %v1397 = vunpack.c.l.b16 %v1193
    %v1398 = vunpack.c.h.b16 %v1193
    %v1399 = vunpack.c.l.b16 %v1194
    %v1400 = vunpack.c.h.b16 %v1194
    %v1401 = vunpack.c.l.b16 %v1195
    %v1402 = vunpack.c.h.b16 %v1195
    %v1403 = vunpack.c.l.b16 %v1196
    %v1404 = vunpack.c.h.b16 %v1196
    %v1405 = vunpack.c.l.b16 %v1197
    %v1406 = vunpack.c.h.b16 %v1197
    %v1407 = vunpack.c.l.b16 %v1198
    %v1408 = vunpack.c.h.b16 %v1198
    %v1409 = vunpack.c.l.b16 %v1199
    %v1410 = vunpack.c.h.b16 %v1199
    %v1411 = vunpack.c.l.b16 %v1200
    %v1412 = vunpack.c.h.b16 %v1200
    %v1413 = vunpack.c.l.b16 %v1201
    %v1414 = vunpack.c.h.b16 %v1201
    %v1415 = vunpack.c.l.b16 %v1202
    %v1416 = vunpack.c.h.b16 %v1202
    %v1417 = vunpack.c.l.b16 %v1203
    %v1418 = vunpack.c.h.b16 %v1203
    %v1419 = vunpack.c.l.b16 %v1204
    %v1420 = vunpack.c.h.b16 %v1204
    %v1421 = vunpack.c.l.b16 %v1205
    %v1422 = vunpack.c.h.b16 %v1205
    %v1423 = vunpack.c.l.b16 %v1206
    %v1424 = vunpack.c.h.b16 %v1206
    %v1425 = vpack.c.b16 %v1301, %v1297
    %v1426 = vpack.c.b16 %v1302, %v1298
    %v1427 = vpack.c.b16 %v1303, %v1299
    %v1428 = vpack.c.b16 %v1304, %v1300
    %v1429 = vpack.c.b16 %v1309, %v1305
    %v1430 = vpack.c.b16 %v1310, %v1306
    %v1431 = vpack.c.b16 %v1311, %v1307
    %v1432 = vpack.c.b16 %v1312, %v1308
    %v1433 = vpack.c.b16 %v1317, %v1313
    %v1434 = vpack.c.b16 %v1318, %v1314
    %v1435 = vpack.c.b16 %v1319, %v1315
    %v1436 = vpack.c.b16 %v1320, %v1316
    %v1437 = vpack.c.b16 %v1325, %v1321
    %v1438 = vpack.c.b16 %v1326, %v1322
    %v1439 = vpack.c.b16 %v1327, %v1323
    %v1440 = vpack.c.b16 %v1328, %v1324
    %v1441 = vpack.c.b16 %v1333, %v1329
    %v1442 = vpack.c.b16 %v1334, %v1330
    %v1443 = vpack.c.b16 %v1335, %v1331
    %v1444 = vpack.c.b16 %v1336, %v1332
    %v1445 = vpack.c.b16 %v1341, %v1337
    %v1446 = vpack.c.b16 %v1342, %v1338
    %v1447 = vpack.c.b16 %v1343, %v1339
    %v1448 = vpack.c.b16 %v1344, %v1340
    %v1449 = vpack.c.b16 %v1349, %v1345
    %v1450 = vpack.c.b16 %v1350, %v1346
    %v1451 = vpack.c.b16 %v1351, %v1347
    %v1452 = vpack.c.b16 %v1352, %v1348
    %v1453 = vpack.c.b16 %v1357, %v1353
    %v1454 = vpack.c.b16 %v1358, %v1354
    %v1455 = vpack.c.b16 %v1359, %v1355
    %v1456 = vpack.c.b16 %v1360, %v1356
    %v1457 = vpack.c.b16 %v1365, %v1361
    %v1458 = vpack.c.b16 %v1366, %v1362
    %v1459 = vpack.c.b16 %v1367, %v1363
    %v1460 = vpack.c.b16 %v1368, %v1364
    %v1461 = vpack.c.b16 %v1373, %v1369
    %v1462 = vpack.c.b16 %v1374, %v1370
    %v1463 = vpack.c.b16 %v1375, %v1371
    %v1464 = vpack.c.b16 %v1376, %v1372
    %v1465 = vpack.c.b16 %v1381, %v1377
    %v1466 = vpack.c.b16 %v1382, %v1378
    %v1467 = vpack.c.b16 %v1383, %v1379
    %v1468 = vpack.c.b16 %v1384, %v1380
    %v1469 = vpack.c.b16 %v1389, %v1385
    %v1470 = vpack.c.b16 %v1390, %v1386
    %v1471 = vpack.c.b16 %v1391, %v1387
    %v1472 = vpack.c.b16 %v1392, %v1388
    %v1473 = vpack.c.b16 %v1397, %v1393
    %v1474 = vpack.c.b16 %v1398, %v1394
    %v1475 = vpack.c.b16 %v1399, %v1395
    %v1476 = vpack.c.b16 %v1400, %v1396
    %v1477 = vpack.c.b16 %v1405, %v1401
    %v1478 = vpack.c.b16 %v1406, %v1402
    %v1479 = vpack.c.b16 %v1407, %v1403
    %v1480 = vpack.c.b16 %v1408, %v1404
    %v1481 = vpack.c.b16 %v1413, %v1409
    %v1482 = vpack.c.b16 %v1414, %v1410
    %v1483 = vpack.c.b16 %v1415, %v1411
    %v1484 = vpack.c.b16 %v1416, %v1412
    %v1485 = vpack.c.b16 %v1421, %v1417
    %v1486 = vpack.c.b16 %v1422, %v1418
    %v1487 = vpack.c.b16 %v1423, %v1419
    %v1488 = vpack.c.b16 %v1424, %v1420
    %v1554 = vlaneseq
    %v1555 = vshrl.u32 %v1554, 7
    %v1556 = vsub.s32 0, %v1555
    %v1557 = vrot.slane %v1207, %v1556
    %v1558 = vlaneseq
    %v1559 = vshrl.u32 %v1558, 7
    %v1560 = vsub.s32 1, %v1559
    %v1561 = vrot.slane %v1207, %v1560
    %v1562 = vlaneseq
    %v1563 = vshrl.u32 %v1562, 7
    %v1564 = vsub.s32 2, %v1563
    %v1565 = vrot.slane %v1207, %v1564
    %v1566 = vlaneseq
    %v1567 = vshrl.u32 %v1566, 7
    %v1568 = vsub.s32 3, %v1567
    %v1569 = vrot.slane %v1207, %v1568
    %1574 = vmatprep.subr.bf16.mxu0 %v1426
    %1575 = vmatpush1.bf16.msra.mxu0 %v1425
    %1576 = vmatprep.subr.bf16.mxu0 %v1430
    %1577 = vmatpush1.bf16.msra.mxu0 %v1429
    %1578 = vmatprep.subr.bf16.mxu0 %v1434
    %1579 = vmatpush1.bf16.msra.mxu0 %v1433
    %1580 = vmatprep.subr.bf16.mxu0 %v1438
    %1581 = vmatpush1.bf16.msra.mxu0 %v1437
    %1582 = vmatprep.subr.bf16.mxu0 %v1442
    %1583 = vmatpush1.bf16.msra.mxu0 %v1441
    %1584 = vmatprep.subr.bf16.mxu0 %v1446
    %1585 = vmatpush1.bf16.msra.mxu0 %v1445
    %1586 = vmatprep.subr.bf16.mxu0 %v1450
    %1587 = vmatpush1.bf16.msra.mxu0 %v1449
    %1588 = vmatprep.subr.bf16.mxu0 %v1454
    %1589 = vmatpush1.bf16.msra.mxu0 %v1453
    %1590 = vmatprep.subr.bf16.mxu0 %v1458
    %1591 = vmatpush1.bf16.msra.mxu0 %v1457
    %1592 = vmatprep.subr.bf16.mxu0 %v1462
    %1593 = vmatpush1.bf16.msra.mxu0 %v1461
    %1594 = vmatprep.subr.bf16.mxu0 %v1466
    %1595 = vmatpush1.bf16.msra.mxu0 %v1465
    %1596 = vmatprep.subr.bf16.mxu0 %v1470
    %1597 = vmatpush1.bf16.msra.mxu0 %v1469
    %1598 = vmatprep.subr.bf16.mxu0 %v1474
    %1599 = vmatpush1.bf16.msra.mxu0 %v1473
    %1600 = vmatprep.subr.bf16.mxu0 %v1478
    %1601 = vmatpush1.bf16.msra.mxu0 %v1477
    %1602 = vmatprep.subr.bf16.mxu0 %v1482
    %1603 = vmatpush1.bf16.msra.mxu0 %v1481
    %1604 = vmatprep.subr.bf16.mxu0 %v1486
    %1605 = vmatpush1.bf16.msra.mxu0 %v1485
    %1606 = vmatprep.mubr.bf16.mxu0 %v1230
    %1607 = vmatmul.mubr.bf16.gmra.mrb[0].mxu0 %v1223
    %v1608 = vpop.f32.mrb[0].mxu0
    %v1609 = vadd.f32 %v1557, %v1608
    %v1610 = vpop.f32.mrb[0].mxu0
    %v1611 = vadd.f32 %v1561, %v1610
    %v1612 = vpop.f32.mrb[0].mxu0
    %v1613 = vpop.f32.mrb[0].mxu0
    %1614 = vdwg.mxu0
    %1615 = vmatprep.subr.bf16.mxu0 %v1428
    %1616 = vmatpush1.bf16.msra.mxu0 %v1427
    %1617 = vmatprep.subr.bf16.mxu0 %v1432
    %1618 = vmatpush1.bf16.msra.mxu0 %v1431
    %1619 = vmatprep.subr.bf16.mxu0 %v1436
    %1620 = vmatpush1.bf16.msra.mxu0 %v1435
    %1621 = vmatprep.subr.bf16.mxu0 %v1440
    %1622 = vmatpush1.bf16.msra.mxu0 %v1439
    %1623 = vmatprep.subr.bf16.mxu0 %v1444
    %1624 = vmatpush1.bf16.msra.mxu0 %v1443
    %1625 = vmatprep.subr.bf16.mxu0 %v1448
    %1626 = vmatpush1.bf16.msra.mxu0 %v1447
    %1627 = vmatprep.subr.bf16.mxu0 %v1452
    %1628 = vmatpush1.bf16.msra.mxu0 %v1451
    %1629 = vmatprep.subr.bf16.mxu0 %v1456
    %1630 = vmatpush1.bf16.msra.mxu0 %v1455
    %1631 = vmatprep.subr.bf16.mxu0 %v1460
    %1632 = vmatpush1.bf16.msra.mxu0 %v1459
    %1633 = vmatprep.subr.bf16.mxu0 %v1464
    %1634 = vmatpush1.bf16.msra.mxu0 %v1463
    %1635 = vmatprep.subr.bf16.mxu0 %v1468
    %1636 = vmatpush1.bf16.msra.mxu0 %v1467
    %1637 = vmatprep.subr.bf16.mxu0 %v1472
    %1638 = vmatpush1.bf16.msra.mxu0 %v1471
    %1639 = vmatprep.subr.bf16.mxu0 %v1476
    %1640 = vmatpush1.bf16.msra.mxu0 %v1475
    %1641 = vmatprep.subr.bf16.mxu0 %v1480
    %1642 = vmatpush1.bf16.msra.mxu0 %v1479
    %1643 = vmatprep.subr.bf16.mxu0 %v1484
    %1644 = vmatpush1.bf16.msra.mxu0 %v1483
    %1645 = vmatprep.subr.bf16.mxu0 %v1488
    %1646 = vmatpush1.bf16.msra.mxu0 %v1487
    %1647 = vmatprep.mubr.bf16.mxu0 %v1230
    %1648 = vmatmul.mubr.bf16.gmra.mrb[0].mxu0 %v1223
    %v1649 = vpop.f32.mrb[0].mxu0
    %v1650 = vadd.f32 %v1565, %v1649
    %v1651 = vpop.f32.mrb[0].mxu0
    %v1652 = vadd.f32 %v1569, %v1651
    %v1653 = vpop.f32.mrb[0].mxu0
    %v1654 = vpop.f32.mrb[0].mxu0
    %1655 = vdwg.mxu0
    %v1656 = vxor.u32 %v1609, 2147483648
    %v1657 = vmul.f32 %v1656, 1.442695
    %v1658 = vpow.pop %v1657
    %v1659 = vadd.f32 %v1658, 1.0
    %v1660 = vrcp.pop %v1659
    %v1661 = vmul.f32 1.0, %v1660
    %v1662 = vxor.u32 %v1611, 2147483648
    %v1663 = vmul.f32 %v1662, 1.442695
    %v1664 = vpow.pop %v1663
    %v1665 = vadd.f32 %v1664, 1.0
    %v1666 = vrcp.pop %v1665
    %v1667 = vmul.f32 1.0, %v1666
    %v1668 = vmul.f32 %v1661, %v1652
    %v1669 = vadd.f32 %v1650, %v1668
    %v1670 = vtanh.pop %v1669
    %v1671 = vsub.f32 1.0, %v1667
    %v1672 = vmul.f32 %v1671, %v1670
    %v1673 = vmul.f32 %v1667, %v1129
    %v1674 = vadd.f32 %v1672, %v1673
    %s1675 = scalar_lea.vmem [#allocation8], 2
    %1676 = vst [vmem:[%s1675] sm:$0x1] %v1674
    %s1677 = sld [smem:[#allocation4 + $0x3]]
    %s1678 = scalar_lea.vmem %s1, %s1677
    %v1679 = vld [vmem:[%s1678] sm:$0x1]
    %v1680 = vld [vmem:[#allocation2] sm:$0x1]
    %v1681 = vsel %vm45, %v1679, %v1680
    %1682 = vst [vmem:[#allocation2] sm:$0x1] %v1681
    %v1683 = vpack.c.bf16 %v1674, %v1674
    %v1684 = vld [vmem:[#allocation2 + $0x1] sm:$0x1]
    %v1685 = vsel %vm45, %v1683, %v1684
    %1686 = vst [vmem:[#allocation2 + $0x1] sm:$0x1] %v1685
    %v1687 = vld [vmem:[#allocation2] sm:$0x3]
    %v1688 = vld [vmem:[#allocation5] sm:$0xff]
    %v1689 = vld [vmem:[#allocation5 + $0x8] sm:$0xff]
    %v1690 = vld [vmem:[#allocation5 + $0x10] sm:$0xff]
    %v1691 = vld [vmem:[#allocation5 + $0x18] sm:$0xff]
    %v1692 = vld [vmem:[#allocation5 + $0x20] sm:$0xff]
    %v1693 = vld [vmem:[#allocation5 + $0x28] sm:$0xff]
    %v1694 = vld [vmem:[#allocation5 + $0x30] sm:$0xff]
    %v1695 = vld [vmem:[#allocation5 + $0x38] sm:$0xff]
    %v1696 = vld [vmem:[#allocation5 + $0x40] sm:$0xff]
    %v1697 = vld [vmem:[#allocation5 + $0x48] sm:$0xff]
    %v1698 = vld [vmem:[#allocation5 + $0x50] sm:$0xff]
    %v1699 = vld [vmem:[#allocation5 + $0x58] sm:$0xff]
    %v1700 = vld [vmem:[#allocation5 + $0x60] sm:$0xff]
    %v1701 = vld [vmem:[#allocation5 + $0x68] sm:$0xff]
    %v1702 = vld [vmem:[#allocation5 + $0x70] sm:$0xff]
    %v1703 = vld [vmem:[#allocation5 + $0x78] sm:$0xff]
    %v1704 = vld [vmem:[#allocation5 + $0x80] sm:$0xff]
    %v1705 = vld [vmem:[#allocation5 + $0x88] sm:$0xff]
    %v1706 = vld [vmem:[#allocation5 + $0x90] sm:$0xff]
    %v1707 = vld [vmem:[#allocation5 + $0x98] sm:$0xff]
    %v1708 = vld [vmem:[#allocation5 + $0xa0] sm:$0xff]
    %v1709 = vld [vmem:[#allocation5 + $0xa8] sm:$0xff]
    %v1710 = vld [vmem:[#allocation5 + $0xb0] sm:$0xff]
    %v1711 = vld [vmem:[#allocation5 + $0xb8] sm:$0xff]
    %v1712 = vld [vmem:[#allocation5 + $0xc0] sm:$0xff]
    %v1713 = vld [vmem:[#allocation5 + $0xc8] sm:$0xff]
    %v1714 = vld [vmem:[#allocation5 + $0xd0] sm:$0xff]
    %v1715 = vld [vmem:[#allocation5 + $0xd8] sm:$0xff]
    %v1716 = vld [vmem:[#allocation5 + $0xe0] sm:$0xff]
    %v1717 = vld [vmem:[#allocation5 + $0xe8] sm:$0xff]
    %v1718 = vld [vmem:[#allocation5 + $0xf0] sm:$0xff]
    %v1719 = vld [vmem:[#allocation5 + $0xf8] sm:$0xff]
    %v1720 = vld [vmem:[#allocation5 + $0x100] sm:$0xff]
    %v1721 = vld [vmem:[#allocation5 + $0x108] sm:$0xff]
    %v1722 = vld [vmem:[#allocation5 + $0x110] sm:$0xff]
    %v1723 = vld [vmem:[#allocation5 + $0x118] sm:$0xff]
    %v1724 = vld [vmem:[#allocation5 + $0x120] sm:$0xff]
    %v1725 = vld [vmem:[#allocation5 + $0x128] sm:$0xff]
    %v1726 = vld [vmem:[#allocation5 + $0x130] sm:$0xff]
    %v1727 = vld [vmem:[#allocation5 + $0x138] sm:$0xff]
    %v1728 = vld [vmem:[#allocation5 + $0x140] sm:$0xff]
    %v1729 = vld [vmem:[#allocation5 + $0x148] sm:$0xff]
    %v1730 = vld [vmem:[#allocation5 + $0x150] sm:$0xff]
    %v1731 = vld [vmem:[#allocation5 + $0x158] sm:$0xff]
    %v1732 = vld [vmem:[#allocation5 + $0x160] sm:$0xff]
    %v1733 = vld [vmem:[#allocation5 + $0x168] sm:$0xff]
    %v1734 = vld [vmem:[#allocation5 + $0x170] sm:$0xff]
    %v1735 = vld [vmem:[#allocation5 + $0x178] sm:$0xff]
    %v1736 = vld [vmem:[#allocation5 + $0x180] sm:$0xff]
    %v1737 = vld [vmem:[#allocation5 + $0x188] sm:$0xff]
    %v1738 = vld [vmem:[#allocation5 + $0x190] sm:$0xff]
    %v1739 = vld [vmem:[#allocation5 + $0x198] sm:$0xff]
    %v1740 = vld [vmem:[#allocation5 + $0x1a0] sm:$0xff]
    %v1741 = vld [vmem:[#allocation5 + $0x1a8] sm:$0xff]
    %v1742 = vld [vmem:[#allocation5 + $0x1b0] sm:$0xff]
    %v1743 = vld [vmem:[#allocation5 + $0x1b8] sm:$0xff]
    %v1744 = vld [vmem:[#allocation5 + $0x1c0] sm:$0xff]
    %v1745 = vld [vmem:[#allocation5 + $0x1c8] sm:$0xff]
    %v1746 = vld [vmem:[#allocation5 + $0x1d0] sm:$0xff]
    %v1747 = vld [vmem:[#allocation5 + $0x1d8] sm:$0xff]
    %v1748 = vld [vmem:[#allocation5 + $0x1e0] sm:$0xff]
    %v1749 = vld [vmem:[#allocation5 + $0x1e8] sm:$0xff]
    %v1750 = vld [vmem:[#allocation5 + $0x1f0] sm:$0xff]
    %v1751 = vld [vmem:[#allocation5 + $0x1f8] sm:$0xff]
    %v1752 = vld [vmem:[%s4] sm:$0xf]
    %v1755 = vunpack.c.l.s4 1966171168
    %v1756 = vunpack.c.0.s8 %v1755
    %v1757 = vlaneseq
    %v1758 = vshrl.u32 %v1757, 7
    %v1759 = vsub.s32 %v1756, %v1758
    %v1760 = vrot.slane %v1687, %v1759
    %v1761 = vcombine.high %v1760, %v1760
    %v1763 = vunpack.c.l.s4 1966171168
    %v1764 = vunpack.c.0.s8 %v1763
    %v1765 = vlaneseq
    %v1766 = vshrl.u32 %v1765, 7
    %v1767 = vsub.s32 %v1764, %v1766
    %v1768 = vrot.slane %v1760, %v1767
    %v1770 = vunpack.c.l.s4 1966171168
    %v1771 = vunpack.c.0.s8 %v1770
    %v1772 = vlaneseq
    %v1773 = vshrl.u32 %v1772, 7
    %v1774 = vsub.s32 %v1771, %v1773
    %v1775 = vrot.slane %v1761, %v1774
    %v1842 = vunpack.c.l.b16 %v1688
    %v1843 = vunpack.c.h.b16 %v1688
    %v1844 = vunpack.c.l.b16 %v1689
    %v1845 = vunpack.c.h.b16 %v1689
    %v1846 = vunpack.c.l.b16 %v1690
    %v1847 = vunpack.c.h.b16 %v1690
    %v1848 = vunpack.c.l.b16 %v1691
    %v1849 = vunpack.c.h.b16 %v1691
    %v1850 = vunpack.c.l.b16 %v1692
    %v1851 = vunpack.c.h.b16 %v1692
    %v1852 = vunpack.c.l.b16 %v1693
    %v1853 = vunpack.c.h.b16 %v1693
    %v1854 = vunpack.c.l.b16 %v1694
    %v1855 = vunpack.c.h.b16 %v1694
    %v1856 = vunpack.c.l.b16 %v1695
    %v1857 = vunpack.c.h.b16 %v1695
    %v1858 = vunpack.c.l.b16 %v1696
    %v1859 = vunpack.c.h.b16 %v1696
    %v1860 = vunpack.c.l.b16 %v1697
    %v1861 = vunpack.c.h.b16 %v1697
    %v1862 = vunpack.c.l.b16 %v1698
    %v1863 = vunpack.c.h.b16 %v1698
    %v1864 = vunpack.c.l.b16 %v1699
    %v1865 = vunpack.c.h.b16 %v1699
    %v1866 = vunpack.c.l.b16 %v1700
    %v1867 = vunpack.c.h.b16 %v1700
    %v1868 = vunpack.c.l.b16 %v1701
    %v1869 = vunpack.c.h.b16 %v1701
    %v1870 = vunpack.c.l.b16 %v1702
    %v1871 = vunpack.c.h.b16 %v1702
    %v1872 = vunpack.c.l.b16 %v1703
    %v1873 = vunpack.c.h.b16 %v1703
    %v1874 = vunpack.c.l.b16 %v1704
    %v1875 = vunpack.c.h.b16 %v1704
    %v1876 = vunpack.c.l.b16 %v1705
    %v1877 = vunpack.c.h.b16 %v1705
    %v1878 = vunpack.c.l.b16 %v1706
    %v1879 = vunpack.c.h.b16 %v1706
    %v1880 = vunpack.c.l.b16 %v1707
    %v1881 = vunpack.c.h.b16 %v1707
    %v1882 = vunpack.c.l.b16 %v1708
    %v1883 = vunpack.c.h.b16 %v1708
    %v1884 = vunpack.c.l.b16 %v1709
    %v1885 = vunpack.c.h.b16 %v1709
    %v1886 = vunpack.c.l.b16 %v1710
    %v1887 = vunpack.c.h.b16 %v1710
    %v1888 = vunpack.c.l.b16 %v1711
    %v1889 = vunpack.c.h.b16 %v1711
    %v1890 = vunpack.c.l.b16 %v1712
    %v1891 = vunpack.c.h.b16 %v1712
    %v1892 = vunpack.c.l.b16 %v1713
    %v1893 = vunpack.c.h.b16 %v1713
    %v1894 = vunpack.c.l.b16 %v1714
    %v1895 = vunpack.c.h.b16 %v1714
    %v1896 = vunpack.c.l.b16 %v1715
    %v1897 = vunpack.c.h.b16 %v1715
    %v1898 = vunpack.c.l.b16 %v1716
    %v1899 = vunpack.c.h.b16 %v1716
    %v1900 = vunpack.c.l.b16 %v1717
    %v1901 = vunpack.c.h.b16 %v1717
    %v1902 = vunpack.c.l.b16 %v1718
    %v1903 = vunpack.c.h.b16 %v1718
    %v1904 = vunpack.c.l.b16 %v1719
    %v1905 = vunpack.c.h.b16 %v1719
    %v1906 = vunpack.c.l.b16 %v1720
    %v1907 = vunpack.c.h.b16 %v1720
    %v1908 = vunpack.c.l.b16 %v1721
    %v1909 = vunpack.c.h.b16 %v1721
    %v1910 = vunpack.c.l.b16 %v1722
    %v1911 = vunpack.c.h.b16 %v1722
    %v1912 = vunpack.c.l.b16 %v1723
    %v1913 = vunpack.c.h.b16 %v1723
    %v1914 = vunpack.c.l.b16 %v1724
    %v1915 = vunpack.c.h.b16 %v1724
    %v1916 = vunpack.c.l.b16 %v1725
    %v1917 = vunpack.c.h.b16 %v1725
    %v1918 = vunpack.c.l.b16 %v1726
    %v1919 = vunpack.c.h.b16 %v1726
    %v1920 = vunpack.c.l.b16 %v1727
    %v1921 = vunpack.c.h.b16 %v1727
    %v1922 = vunpack.c.l.b16 %v1728
    %v1923 = vunpack.c.h.b16 %v1728
    %v1924 = vunpack.c.l.b16 %v1729
    %v1925 = vunpack.c.h.b16 %v1729
    %v1926 = vunpack.c.l.b16 %v1730
    %v1927 = vunpack.c.h.b16 %v1730
    %v1928 = vunpack.c.l.b16 %v1731
    %v1929 = vunpack.c.h.b16 %v1731
    %v1930 = vunpack.c.l.b16 %v1732
    %v1931 = vunpack.c.h.b16 %v1732
    %v1932 = vunpack.c.l.b16 %v1733
    %v1933 = vunpack.c.h.b16 %v1733
    %v1934 = vunpack.c.l.b16 %v1734
    %v1935 = vunpack.c.h.b16 %v1734
    %v1936 = vunpack.c.l.b16 %v1735
    %v1937 = vunpack.c.h.b16 %v1735
    %v1938 = vunpack.c.l.b16 %v1736
    %v1939 = vunpack.c.h.b16 %v1736
    %v1940 = vunpack.c.l.b16 %v1737
    %v1941 = vunpack.c.h.b16 %v1737
    %v1942 = vunpack.c.l.b16 %v1738
    %v1943 = vunpack.c.h.b16 %v1738
    %v1944 = vunpack.c.l.b16 %v1739
    %v1945 = vunpack.c.h.b16 %v1739
    %v1946 = vunpack.c.l.b16 %v1740
    %v1947 = vunpack.c.h.b16 %v1740
    %v1948 = vunpack.c.l.b16 %v1741
    %v1949 = vunpack.c.h.b16 %v1741
    %v1950 = vunpack.c.l.b16 %v1742
    %v1951 = vunpack.c.h.b16 %v1742
    %v1952 = vunpack.c.l.b16 %v1743
    %v1953 = vunpack.c.h.b16 %v1743
    %v1954 = vunpack.c.l.b16 %v1744
    %v1955 = vunpack.c.h.b16 %v1744
    %v1956 = vunpack.c.l.b16 %v1745
    %v1957 = vunpack.c.h.b16 %v1745
    %v1958 = vunpack.c.l.b16 %v1746
    %v1959 = vunpack.c.h.b16 %v1746
    %v1960 = vunpack.c.l.b16 %v1747
    %v1961 = vunpack.c.h.b16 %v1747
    %v1962 = vunpack.c.l.b16 %v1748
    %v1963 = vunpack.c.h.b16 %v1748
    %v1964 = vunpack.c.l.b16 %v1749
    %v1965 = vunpack.c.h.b16 %v1749
    %v1966 = vunpack.c.l.b16 %v1750
    %v1967 = vunpack.c.h.b16 %v1750
    %v1968 = vunpack.c.l.b16 %v1751
    %v1969 = vunpack.c.h.b16 %v1751
    %v1970 = vpack.c.b16 %v1846, %v1842
    %v1971 = vpack.c.b16 %v1847, %v1843
    %v1972 = vpack.c.b16 %v1848, %v1844
    %v1973 = vpack.c.b16 %v1849, %v1845
    %v1974 = vpack.c.b16 %v1854, %v1850
    %v1975 = vpack.c.b16 %v1855, %v1851
    %v1976 = vpack.c.b16 %v1856, %v1852
    %v1977 = vpack.c.b16 %v1857, %v1853
    %v1978 = vpack.c.b16 %v1862, %v1858
    %v1979 = vpack.c.b16 %v1863, %v1859
    %v1980 = vpack.c.b16 %v1864, %v1860
    %v1981 = vpack.c.b16 %v1865, %v1861
    %v1982 = vpack.c.b16 %v1870, %v1866
    %v1983 = vpack.c.b16 %v1871, %v1867
    %v1984 = vpack.c.b16 %v1872, %v1868
    %v1985 = vpack.c.b16 %v1873, %v1869
    %v1986 = vpack.c.b16 %v1878, %v1874
    %v1987 = vpack.c.b16 %v1879, %v1875
    %v1988 = vpack.c.b16 %v1880, %v1876
    %v1989 = vpack.c.b16 %v1881, %v1877
    %v1990 = vpack.c.b16 %v1886, %v1882
    %v1991 = vpack.c.b16 %v1887, %v1883
    %v1992 = vpack.c.b16 %v1888, %v1884
    %v1993 = vpack.c.b16 %v1889, %v1885
    %v1994 = vpack.c.b16 %v1894, %v1890
    %v1995 = vpack.c.b16 %v1895, %v1891
    %v1996 = vpack.c.b16 %v1896, %v1892
    %v1997 = vpack.c.b16 %v1897, %v1893
    %v1998 = vpack.c.b16 %v1902, %v1898
    %v1999 = vpack.c.b16 %v1903, %v1899
    %v2000 = vpack.c.b16 %v1904, %v1900
    %v2001 = vpack.c.b16 %v1905, %v1901
    %v2002 = vpack.c.b16 %v1910, %v1906
    %v2003 = vpack.c.b16 %v1911, %v1907
    %v2004 = vpack.c.b16 %v1912, %v1908
    %v2005 = vpack.c.b16 %v1913, %v1909
    %v2006 = vpack.c.b16 %v1918, %v1914
    %v2007 = vpack.c.b16 %v1919, %v1915
    %v2008 = vpack.c.b16 %v1920, %v1916
    %v2009 = vpack.c.b16 %v1921, %v1917
    %v2010 = vpack.c.b16 %v1926, %v1922
    %v2011 = vpack.c.b16 %v1927, %v1923
    %v2012 = vpack.c.b16 %v1928, %v1924
    %v2013 = vpack.c.b16 %v1929, %v1925
    %v2014 = vpack.c.b16 %v1934, %v1930
    %v2015 = vpack.c.b16 %v1935, %v1931
    %v2016 = vpack.c.b16 %v1936, %v1932
    %v2017 = vpack.c.b16 %v1937, %v1933
    %v2018 = vpack.c.b16 %v1942, %v1938
    %v2019 = vpack.c.b16 %v1943, %v1939
    %v2020 = vpack.c.b16 %v1944, %v1940
    %v2021 = vpack.c.b16 %v1945, %v1941
    %v2022 = vpack.c.b16 %v1950, %v1946
    %v2023 = vpack.c.b16 %v1951, %v1947
    %v2024 = vpack.c.b16 %v1952, %v1948
    %v2025 = vpack.c.b16 %v1953, %v1949
    %v2026 = vpack.c.b16 %v1958, %v1954
    %v2027 = vpack.c.b16 %v1959, %v1955
    %v2028 = vpack.c.b16 %v1960, %v1956
    %v2029 = vpack.c.b16 %v1961, %v1957
    %v2030 = vpack.c.b16 %v1966, %v1962
    %v2031 = vpack.c.b16 %v1967, %v1963
    %v2032 = vpack.c.b16 %v1968, %v1964
    %v2033 = vpack.c.b16 %v1969, %v1965
    %v2099 = vlaneseq
    %v2100 = vshrl.u32 %v2099, 7
    %v2101 = vsub.s32 0, %v2100
    %v2102 = vrot.slane %v1752, %v2101
    %v2103 = vlaneseq
    %v2104 = vshrl.u32 %v2103, 7
    %v2105 = vsub.s32 1, %v2104
    %v2106 = vrot.slane %v1752, %v2105
    %v2107 = vlaneseq
    %v2108 = vshrl.u32 %v2107, 7
    %v2109 = vsub.s32 2, %v2108
    %v2110 = vrot.slane %v1752, %v2109
    %v2111 = vlaneseq
    %v2112 = vshrl.u32 %v2111, 7
    %v2113 = vsub.s32 3, %v2112
    %v2114 = vrot.slane %v1752, %v2113
    %2119 = vmatprep.subr.bf16.mxu0 %v1971
    %2120 = vmatpush1.bf16.msra.mxu0 %v1970
    %2121 = vmatprep.subr.bf16.mxu0 %v1975
    %2122 = vmatpush1.bf16.msra.mxu0 %v1974
    %2123 = vmatprep.subr.bf16.mxu0 %v1979
    %2124 = vmatpush1.bf16.msra.mxu0 %v1978
    %2125 = vmatprep.subr.bf16.mxu0 %v1983
    %2126 = vmatpush1.bf16.msra.mxu0 %v1982
    %2127 = vmatprep.subr.bf16.mxu0 %v1987
    %2128 = vmatpush1.bf16.msra.mxu0 %v1986
    %2129 = vmatprep.subr.bf16.mxu0 %v1991
    %2130 = vmatpush1.bf16.msra.mxu0 %v1990
    %2131 = vmatprep.subr.bf16.mxu0 %v1995
    %2132 = vmatpush1.bf16.msra.mxu0 %v1994
    %2133 = vmatprep.subr.bf16.mxu0 %v1999
    %2134 = vmatpush1.bf16.msra.mxu0 %v1998
    %2135 = vmatprep.subr.bf16.mxu0 %v2003
    %2136 = vmatpush1.bf16.msra.mxu0 %v2002
    %2137 = vmatprep.subr.bf16.mxu0 %v2007
    %2138 = vmatpush1.bf16.msra.mxu0 %v2006
    %2139 = vmatprep.subr.bf16.mxu0 %v2011
    %2140 = vmatpush1.bf16.msra.mxu0 %v2010
    %2141 = vmatprep.subr.bf16.mxu0 %v2015
    %2142 = vmatpush1.bf16.msra.mxu0 %v2014
    %2143 = vmatprep.subr.bf16.mxu0 %v2019
    %2144 = vmatpush1.bf16.msra.mxu0 %v2018
    %2145 = vmatprep.subr.bf16.mxu0 %v2023
    %2146 = vmatpush1.bf16.msra.mxu0 %v2022
    %2147 = vmatprep.subr.bf16.mxu0 %v2027
    %2148 = vmatpush1.bf16.msra.mxu0 %v2026
    %2149 = vmatprep.subr.bf16.mxu0 %v2031
    %2150 = vmatpush1.bf16.msra.mxu0 %v2030
    %2151 = vmatprep.mubr.bf16.mxu0 %v1775
    %2152 = vmatmul.mubr.bf16.gmra.mrb[0].mxu0 %v1768
    %v2153 = vpop.f32.mrb[0].mxu0
    %v2154 = vadd.f32 %v2102, %v2153
    %v2155 = vpop.f32.mrb[0].mxu0
    %v2156 = vadd.f32 %v2106, %v2155
    %v2157 = vpop.f32.mrb[0].mxu0
    %v2158 = vpop.f32.mrb[0].mxu0
    %2159 = vdwg.mxu0
    %2160 = vmatprep.subr.bf16.mxu0 %v1973
    %2161 = vmatpush1.bf16.msra.mxu0 %v1972
    %2162 = vmatprep.subr.bf16.mxu0 %v1977
    %2163 = vmatpush1.bf16.msra.mxu0 %v1976
    %2164 = vmatprep.subr.bf16.mxu0 %v1981
    %2165 = vmatpush1.bf16.msra.mxu0 %v1980
    %2166 = vmatprep.subr.bf16.mxu0 %v1985
    %2167 = vmatpush1.bf16.msra.mxu0 %v1984
    %2168 = vmatprep.subr.bf16.mxu0 %v1989
    %2169 = vmatpush1.bf16.msra.mxu0 %v1988
    %2170 = vmatprep.subr.bf16.mxu0 %v1993
    %2171 = vmatpush1.bf16.msra.mxu0 %v1992
    %2172 = vmatprep.subr.bf16.mxu0 %v1997
    %2173 = vmatpush1.bf16.msra.mxu0 %v1996
    %2174 = vmatprep.subr.bf16.mxu0 %v2001
    %2175 = vmatpush1.bf16.msra.mxu0 %v2000
    %2176 = vmatprep.subr.bf16.mxu0 %v2005
    %2177 = vmatpush1.bf16.msra.mxu0 %v2004
    %2178 = vmatprep.subr.bf16.mxu0 %v2009
    %2179 = vmatpush1.bf16.msra.mxu0 %v2008
    %2180 = vmatprep.subr.bf16.mxu0 %v2013
    %2181 = vmatpush1.bf16.msra.mxu0 %v2012
    %2182 = vmatprep.subr.bf16.mxu0 %v2017
    %2183 = vmatpush1.bf16.msra.mxu0 %v2016
    %2184 = vmatprep.subr.bf16.mxu0 %v2021
    %2185 = vmatpush1.bf16.msra.mxu0 %v2020
    %2186 = vmatprep.subr.bf16.mxu0 %v2025
    %2187 = vmatpush1.bf16.msra.mxu0 %v2024
    %2188 = vmatprep.subr.bf16.mxu0 %v2029
    %2189 = vmatpush1.bf16.msra.mxu0 %v2028
    %2190 = vmatprep.subr.bf16.mxu0 %v2033
    %2191 = vmatpush1.bf16.msra.mxu0 %v2032
    %2192 = vmatprep.mubr.bf16.mxu0 %v1775
    %2193 = vmatmul.mubr.bf16.gmra.mrb[0].mxu0 %v1768
    %v2194 = vpop.f32.mrb[0].mxu0
    %v2195 = vadd.f32 %v2110, %v2194
    %v2196 = vpop.f32.mrb[0].mxu0
    %v2197 = vadd.f32 %v2114, %v2196
    %v2198 = vpop.f32.mrb[0].mxu0
    %v2199 = vpop.f32.mrb[0].mxu0
    %2200 = vdwg.mxu0
    %v2201 = vxor.u32 %v2154, 2147483648
    %v2202 = vmul.f32 %v2201, 1.442695
    %v2203 = vpow.pop %v2202
    %v2204 = vadd.f32 %v2203, 1.0
    %v2205 = vrcp.pop %v2204
    %v2206 = vmul.f32 1.0, %v2205
    %v2207 = vxor.u32 %v2156, 2147483648
    %v2208 = vmul.f32 %v2207, 1.442695
    %v2209 = vpow.pop %v2208
    %v2210 = vadd.f32 %v2209, 1.0
    %v2211 = vrcp.pop %v2210
    %v2212 = vmul.f32 1.0, %v2211
    %v2213 = vmul.f32 %v2206, %v2197
    %v2214 = vadd.f32 %v2195, %v2213
    %v2215 = vtanh.pop %v2214
    %v2216 = vsub.f32 1.0, %v2212
    %v2217 = vmul.f32 %v2216, %v2215
    %v2218 = vmul.f32 %v2212, %v1674
    %v2219 = vadd.f32 %v2217, %v2218
    %s2220 = scalar_lea.vmem [#allocation8], 3
    %2221 = vst [vmem:[%s2220] sm:$0x1] %v2219
    %s2222 = sld [smem:[#allocation4 + $0x4]]
    %s2223 = scalar_lea.vmem %s1, %s2222
    %v2224 = vld [vmem:[%s2223] sm:$0x1]
    %v2225 = vld [vmem:[#allocation2] sm:$0x1]
    %v2226 = vsel %vm45, %v2224, %v2225
    %2227 = vst [vmem:[#allocation2] sm:$0x1] %v2226
    %v2228 = vpack.c.bf16 %v2219, %v2219
    %v2229 = vld [vmem:[#allocation2 + $0x1] sm:$0x1]
    %v2230 = vsel %vm45, %v2228, %v2229
    %2231 = vst [vmem:[#allocation2 + $0x1] sm:$0x1] %v2230
    %v2232 = vld [vmem:[#allocation2] sm:$0x3]
    %v2233 = vld [vmem:[#allocation5] sm:$0xff]
    %v2234 = vld [vmem:[#allocation5 + $0x8] sm:$0xff]
    %v2235 = vld [vmem:[#allocation5 + $0x10] sm:$0xff]
    %v2236 = vld [vmem:[#allocation5 + $0x18] sm:$0xff]
    %v2237 = vld [vmem:[#allocation5 + $0x20] sm:$0xff]
    %v2238 = vld [vmem:[#allocation5 + $0x28] sm:$0xff]
    %v2239 = vld [vmem:[#allocation5 + $0x30] sm:$0xff]
    %v2240 = vld [vmem:[#allocation5 + $0x38] sm:$0xff]
    %v2241 = vld [vmem:[#allocation5 + $0x40] sm:$0xff]
    %v2242 = vld [vmem:[#allocation5 + $0x48] sm:$0xff]
    %v2243 = vld [vmem:[#allocation5 + $0x50] sm:$0xff]
    %v2244 = vld [vmem:[#allocation5 + $0x58] sm:$0xff]
    %v2245 = vld [vmem:[#allocation5 + $0x60] sm:$0xff]
    %v2246 = vld [vmem:[#allocation5 + $0x68] sm:$0xff]
    %v2247 = vld [vmem:[#allocation5 + $0x70] sm:$0xff]
    %v2248 = vld [vmem:[#allocation5 + $0x78] sm:$0xff]
    %v2249 = vld [vmem:[#allocation5 + $0x80] sm:$0xff]
    %v2250 = vld [vmem:[#allocation5 + $0x88] sm:$0xff]
    %v2251 = vld [vmem:[#allocation5 + $0x90] sm:$0xff]
    %v2252 = vld [vmem:[#allocation5 + $0x98] sm:$0xff]
    %v2253 = vld [vmem:[#allocation5 + $0xa0] sm:$0xff]
    %v2254 = vld [vmem:[#allocation5 + $0xa8] sm:$0xff]
    %v2255 = vld [vmem:[#allocation5 + $0xb0] sm:$0xff]
    %v2256 = vld [vmem:[#allocation5 + $0xb8] sm:$0xff]
    %v2257 = vld [vmem:[#allocation5 + $0xc0] sm:$0xff]
    %v2258 = vld [vmem:[#allocation5 + $0xc8] sm:$0xff]
    %v2259 = vld [vmem:[#allocation5 + $0xd0] sm:$0xff]
    %v2260 = vld [vmem:[#allocation5 + $0xd8] sm:$0xff]
    %v2261 = vld [vmem:[#allocation5 + $0xe0] sm:$0xff]
    %v2262 = vld [vmem:[#allocation5 + $0xe8] sm:$0xff]
    %v2263 = vld [vmem:[#allocation5 + $0xf0] sm:$0xff]
    %v2264 = vld [vmem:[#allocation5 + $0xf8] sm:$0xff]
    %v2265 = vld [vmem:[#allocation5 + $0x100] sm:$0xff]
    %v2266 = vld [vmem:[#allocation5 + $0x108] sm:$0xff]
    %v2267 = vld [vmem:[#allocation5 + $0x110] sm:$0xff]
    %v2268 = vld [vmem:[#allocation5 + $0x118] sm:$0xff]
    %v2269 = vld [vmem:[#allocation5 + $0x120] sm:$0xff]
    %v2270 = vld [vmem:[#allocation5 + $0x128] sm:$0xff]
    %v2271 = vld [vmem:[#allocation5 + $0x130] sm:$0xff]
    %v2272 = vld [vmem:[#allocation5 + $0x138] sm:$0xff]
    %v2273 = vld [vmem:[#allocation5 + $0x140] sm:$0xff]
    %v2274 = vld [vmem:[#allocation5 + $0x148] sm:$0xff]
    %v2275 = vld [vmem:[#allocation5 + $0x150] sm:$0xff]
    %v2276 = vld [vmem:[#allocation5 + $0x158] sm:$0xff]
    %v2277 = vld [vmem:[#allocation5 + $0x160] sm:$0xff]
    %v2278 = vld [vmem:[#allocation5 + $0x168] sm:$0xff]
    %v2279 = vld [vmem:[#allocation5 + $0x170] sm:$0xff]
    %v2280 = vld [vmem:[#allocation5 + $0x178] sm:$0xff]
    %v2281 = vld [vmem:[#allocation5 + $0x180] sm:$0xff]
    %v2282 = vld [vmem:[#allocation5 + $0x188] sm:$0xff]
    %v2283 = vld [vmem:[#allocation5 + $0x190] sm:$0xff]
    %v2284 = vld [vmem:[#allocation5 + $0x198] sm:$0xff]
    %v2285 = vld [vmem:[#allocation5 + $0x1a0] sm:$0xff]
    %v2286 = vld [vmem:[#allocation5 + $0x1a8] sm:$0xff]
    %v2287 = vld [vmem:[#allocation5 + $0x1b0] sm:$0xff]
    %v2288 = vld [vmem:[#allocation5 + $0x1b8] sm:$0xff]
    %v2289 = vld [vmem:[#allocation5 + $0x1c0] sm:$0xff]
    %v2290 = vld [vmem:[#allocation5 + $0x1c8] sm:$0xff]
    %v2291 = vld [vmem:[#allocation5 + $0x1d0] sm:$0xff]
    %v2292 = vld [vmem:[#allocation5 + $0x1d8] sm:$0xff]
    %v2293 = vld [vmem:[#allocation5 + $0x1e0] sm:$0xff]
    %v2294 = vld [vmem:[#allocation5 + $0x1e8] sm:$0xff]
    %v2295 = vld [vmem:[#allocation5 + $0x1f0] sm:$0xff]
    %v2296 = vld [vmem:[#allocation5 + $0x1f8] sm:$0xff]
    %v2297 = vld [vmem:[%s4] sm:$0xf]
    %v2300 = vunpack.c.l.s4 1966171168
    %v2301 = vunpack.c.0.s8 %v2300
    %v2302 = vlaneseq
    %v2303 = vshrl.u32 %v2302, 7
    %v2304 = vsub.s32 %v2301, %v2303
    %v2305 = vrot.slane %v2232, %v2304
    %v2306 = vcombine.high %v2305, %v2305
    %v2308 = vunpack.c.l.s4 1966171168
    %v2309 = vunpack.c.0.s8 %v2308
    %v2310 = vlaneseq
    %v2311 = vshrl.u32 %v2310, 7
    %v2312 = vsub.s32 %v2309, %v2311
    %v2313 = vrot.slane %v2305, %v2312
    %v2315 = vunpack.c.l.s4 1966171168
    %v2316 = vunpack.c.0.s8 %v2315
    %v2317 = vlaneseq
    %v2318 = vshrl.u32 %v2317, 7
    %v2319 = vsub.s32 %v2316, %v2318
    %v2320 = vrot.slane %v2306, %v2319
    %v2387 = vunpack.c.l.b16 %v2233
    %v2388 = vunpack.c.h.b16 %v2233
    %v2389 = vunpack.c.l.b16 %v2234
    %v2390 = vunpack.c.h.b16 %v2234
    %v2391 = vunpack.c.l.b16 %v2235
    %v2392 = vunpack.c.h.b16 %v2235
    %v2393 = vunpack.c.l.b16 %v2236
    %v2394 = vunpack.c.h.b16 %v2236
    %v2395 = vunpack.c.l.b16 %v2237
    %v2396 = vunpack.c.h.b16 %v2237
    %v2397 = vunpack.c.l.b16 %v2238
    %v2398 = vunpack.c.h.b16 %v2238
    %v2399 = vunpack.c.l.b16 %v2239
    %v2400 = vunpack.c.h.b16 %v2239
    %v2401 = vunpack.c.l.b16 %v2240
    %v2402 = vunpack.c.h.b16 %v2240
    %v2403 = vunpack.c.l.b16 %v2241
    %v2404 = vunpack.c.h.b16 %v2241
    %v2405 = vunpack.c.l.b16 %v2242
    %v2406 = vunpack.c.h.b16 %v2242
    %v2407 = vunpack.c.l.b16 %v2243
    %v2408 = vunpack.c.h.b16 %v2243
    %v2409 = vunpack.c.l.b16 %v2244
    %v2410 = vunpack.c.h.b16 %v2244
    %v2411 = vunpack.c.l.b16 %v2245
    %v2412 = vunpack.c.h.b16 %v2245
    %v2413 = vunpack.c.l.b16 %v2246
    %v2414 = vunpack.c.h.b16 %v2246
    %v2415 = vunpack.c.l.b16 %v2247
    %v2416 = vunpack.c.h.b16 %v2247
    %v2417 = vunpack.c.l.b16 %v2248
    %v2418 = vunpack.c.h.b16 %v2248
    %v2419 = vunpack.c.l.b16 %v2249
    %v2420 = vunpack.c.h.b16 %v2249
    %v2421 = vunpack.c.l.b16 %v2250
    %v2422 = vunpack.c.h.b16 %v2250
    %v2423 = vunpack.c.l.b16 %v2251
    %v2424 = vunpack.c.h.b16 %v2251
    %v2425 = vunpack.c.l.b16 %v2252
    %v2426 = vunpack.c.h.b16 %v2252
    %v2427 = vunpack.c.l.b16 %v2253
    %v2428 = vunpack.c.h.b16 %v2253
    %v2429 = vunpack.c.l.b16 %v2254
    %v2430 = vunpack.c.h.b16 %v2254
    %v2431 = vunpack.c.l.b16 %v2255
    %v2432 = vunpack.c.h.b16 %v2255
    %v2433 = vunpack.c.l.b16 %v2256
    %v2434 = vunpack.c.h.b16 %v2256
    %v2435 = vunpack.c.l.b16 %v2257
    %v2436 = vunpack.c.h.b16 %v2257
    %v2437 = vunpack.c.l.b16 %v2258
    %v2438 = vunpack.c.h.b16 %v2258
    %v2439 = vunpack.c.l.b16 %v2259
    %v2440 = vunpack.c.h.b16 %v2259
    %v2441 = vunpack.c.l.b16 %v2260
    %v2442 = vunpack.c.h.b16 %v2260
    %v2443 = vunpack.c.l.b16 %v2261
    %v2444 = vunpack.c.h.b16 %v2261
    %v2445 = vunpack.c.l.b16 %v2262
    %v2446 = vunpack.c.h.b16 %v2262
    %v2447 = vunpack.c.l.b16 %v2263
    %v2448 = vunpack.c.h.b16 %v2263
    %v2449 = vunpack.c.l.b16 %v2264
    %v2450 = vunpack.c.h.b16 %v2264
    %v2451 = vunpack.c.l.b16 %v2265
    %v2452 = vunpack.c.h.b16 %v2265
    %v2453 = vunpack.c.l.b16 %v2266
    %v2454 = vunpack.c.h.b16 %v2266
    %v2455 = vunpack.c.l.b16 %v2267
    %v2456 = vunpack.c.h.b16 %v2267
    %v2457 = vunpack.c.l.b16 %v2268
    %v2458 = vunpack.c.h.b16 %v2268
    %v2459 = vunpack.c.l.b16 %v2269
    %v2460 = vunpack.c.h.b16 %v2269
    %v2461 = vunpack.c.l.b16 %v2270
    %v2462 = vunpack.c.h.b16 %v2270
    %v2463 = vunpack.c.l.b16 %v2271
    %v2464 = vunpack.c.h.b16 %v2271
    %v2465 = vunpack.c.l.b16 %v2272
    %v2466 = vunpack.c.h.b16 %v2272
    %v2467 = vunpack.c.l.b16 %v2273
    %v2468 = vunpack.c.h.b16 %v2273
    %v2469 = vunpack.c.l.b16 %v2274
    %v2470 = vunpack.c.h.b16 %v2274
    %v2471 = vunpack.c.l.b16 %v2275
    %v2472 = vunpack.c.h.b16 %v2275
    %v2473 = vunpack.c.l.b16 %v2276
    %v2474 = vunpack.c.h.b16 %v2276
    %v2475 = vunpack.c.l.b16 %v2277
    %v2476 = vunpack.c.h.b16 %v2277
    %v2477 = vunpack.c.l.b16 %v2278
    %v2478 = vunpack.c.h.b16 %v2278
    %v2479 = vunpack.c.l.b16 %v2279
    %v2480 = vunpack.c.h.b16 %v2279
    %v2481 = vunpack.c.l.b16 %v2280
    %v2482 = vunpack.c.h.b16 %v2280
    %v2483 = vunpack.c.l.b16 %v2281
    %v2484 = vunpack.c.h.b16 %v2281
    %v2485 = vunpack.c.l.b16 %v2282
    %v2486 = vunpack.c.h.b16 %v2282
    %v2487 = vunpack.c.l.b16 %v2283
    %v2488 = vunpack.c.h.b16 %v2283
    %v2489 = vunpack.c.l.b16 %v2284
    %v2490 = vunpack.c.h.b16 %v2284
    %v2491 = vunpack.c.l.b16 %v2285
    %v2492 = vunpack.c.h.b16 %v2285
    %v2493 = vunpack.c.l.b16 %v2286
    %v2494 = vunpack.c.h.b16 %v2286
    %v2495 = vunpack.c.l.b16 %v2287
    %v2496 = vunpack.c.h.b16 %v2287
    %v2497 = vunpack.c.l.b16 %v2288
    %v2498 = vunpack.c.h.b16 %v2288
    %v2499 = vunpack.c.l.b16 %v2289
    %v2500 = vunpack.c.h.b16 %v2289
    %v2501 = vunpack.c.l.b16 %v2290
    %v2502 = vunpack.c.h.b16 %v2290
    %v2503 = vunpack.c.l.b16 %v2291
    %v2504 = vunpack.c.h.b16 %v2291
    %v2505 = vunpack.c.l.b16 %v2292
    %v2506 = vunpack.c.h.b16 %v2292
    %v2507 = vunpack.c.l.b16 %v2293
    %v2508 = vunpack.c.h.b16 %v2293
    %v2509 = vunpack.c.l.b16 %v2294
    %v2510 = vunpack.c.h.b16 %v2294
    %v2511 = vunpack.c.l.b16 %v2295
    %v2512 = vunpack.c.h.b16 %v2295
    %v2513 = vunpack.c.l.b16 %v2296
    %v2514 = vunpack.c.h.b16 %v2296
    %v2515 = vpack.c.b16 %v2391, %v2387
    %v2516 = vpack.c.b16 %v2392, %v2388
    %v2517 = vpack.c.b16 %v2393, %v2389
    %v2518 = vpack.c.b16 %v2394, %v2390
    %v2519 = vpack.c.b16 %v2399, %v2395
    %v2520 = vpack.c.b16 %v2400, %v2396
    %v2521 = vpack.c.b16 %v2401, %v2397
    %v2522 = vpack.c.b16 %v2402, %v2398
    %v2523 = vpack.c.b16 %v2407, %v2403
    %v2524 = vpack.c.b16 %v2408, %v2404
    %v2525 = vpack.c.b16 %v2409, %v2405
    %v2526 = vpack.c.b16 %v2410, %v2406
    %v2527 = vpack.c.b16 %v2415, %v2411
    %v2528 = vpack.c.b16 %v2416, %v2412
    %v2529 = vpack.c.b16 %v2417, %v2413
    %v2530 = vpack.c.b16 %v2418, %v2414
    %v2531 = vpack.c.b16 %v2423, %v2419
    %v2532 = vpack.c.b16 %v2424, %v2420
    %v2533 = vpack.c.b16 %v2425, %v2421
    %v2534 = vpack.c.b16 %v2426, %v2422
    %v2535 = vpack.c.b16 %v2431, %v2427
    %v2536 = vpack.c.b16 %v2432, %v2428
    %v2537 = vpack.c.b16 %v2433, %v2429
    %v2538 = vpack.c.b16 %v2434, %v2430
    %v2539 = vpack.c.b16 %v2439, %v2435
    %v2540 = vpack.c.b16 %v2440, %v2436
    %v2541 = vpack.c.b16 %v2441, %v2437
    %v2542 = vpack.c.b16 %v2442, %v2438
    %v2543 = vpack.c.b16 %v2447, %v2443
    %v2544 = vpack.c.b16 %v2448, %v2444
    %v2545 = vpack.c.b16 %v2449, %v2445
    %v2546 = vpack.c.b16 %v2450, %v2446
    %v2547 = vpack.c.b16 %v2455, %v2451
    %v2548 = vpack.c.b16 %v2456, %v2452
    %v2549 = vpack.c.b16 %v2457, %v2453
    %v2550 = vpack.c.b16 %v2458, %v2454
    %v2551 = vpack.c.b16 %v2463, %v2459
    %v2552 = vpack.c.b16 %v2464, %v2460
    %v2553 = vpack.c.b16 %v2465, %v2461
    %v2554 = vpack.c.b16 %v2466, %v2462
    %v2555 = vpack.c.b16 %v2471, %v2467
    %v2556 = vpack.c.b16 %v2472, %v2468
    %v2557 = vpack.c.b16 %v2473, %v2469
    %v2558 = vpack.c.b16 %v2474, %v2470
    %v2559 = vpack.c.b16 %v2479, %v2475
    %v2560 = vpack.c.b16 %v2480, %v2476
    %v2561 = vpack.c.b16 %v2481, %v2477
    %v2562 = vpack.c.b16 %v2482, %v2478
    %v2563 = vpack.c.b16 %v2487, %v2483
    %v2564 = vpack.c.b16 %v2488, %v2484
    %v2565 = vpack.c.b16 %v2489, %v2485
    %v2566 = vpack.c.b16 %v2490, %v2486
    %v2567 = vpack.c.b16 %v2495, %v2491
    %v2568 = vpack.c.b16 %v2496, %v2492
    %v2569 = vpack.c.b16 %v2497, %v2493
    %v2570 = vpack.c.b16 %v2498, %v2494
    %v2571 = vpack.c.b16 %v2503, %v2499
    %v2572 = vpack.c.b16 %v2504, %v2500
    %v2573 = vpack.c.b16 %v2505, %v2501
    %v2574 = vpack.c.b16 %v2506, %v2502
    %v2575 = vpack.c.b16 %v2511, %v2507
    %v2576 = vpack.c.b16 %v2512, %v2508
    %v2577 = vpack.c.b16 %v2513, %v2509
    %v2578 = vpack.c.b16 %v2514, %v2510
    %v2644 = vlaneseq
    %v2645 = vshrl.u32 %v2644, 7
    %v2646 = vsub.s32 0, %v2645
    %v2647 = vrot.slane %v2297, %v2646
    %v2648 = vlaneseq
    %v2649 = vshrl.u32 %v2648, 7
    %v2650 = vsub.s32 1, %v2649
    %v2651 = vrot.slane %v2297, %v2650
    %v2652 = vlaneseq
    %v2653 = vshrl.u32 %v2652, 7
    %v2654 = vsub.s32 2, %v2653
    %v2655 = vrot.slane %v2297, %v2654
    %v2656 = vlaneseq
    %v2657 = vshrl.u32 %v2656, 7
    %v2658 = vsub.s32 3, %v2657
    %v2659 = vrot.slane %v2297, %v2658
    %2664 = vmatprep.subr.bf16.mxu0 %v2516
    %2665 = vmatpush1.bf16.msra.mxu0 %v2515
    %2666 = vmatprep.subr.bf16.mxu0 %v2520
    %2667 = vmatpush1.bf16.msra.mxu0 %v2519
    %2668 = vmatprep.subr.bf16.mxu0 %v2524
    %2669 = vmatpush1.bf16.msra.mxu0 %v2523
    %2670 = vmatprep.subr.bf16.mxu0 %v2528
    %2671 = vmatpush1.bf16.msra.mxu0 %v2527
    %2672 = vmatprep.subr.bf16.mxu0 %v2532
    %2673 = vmatpush1.bf16.msra.mxu0 %v2531
    %2674 = vmatprep.subr.bf16.mxu0 %v2536
    %2675 = vmatpush1.bf16.msra.mxu0 %v2535
    %2676 = vmatprep.subr.bf16.mxu0 %v2540
    %2677 = vmatpush1.bf16.msra.mxu0 %v2539
    %2678 = vmatprep.subr.bf16.mxu0 %v2544
    %2679 = vmatpush1.bf16.msra.mxu0 %v2543
    %2680 = vmatprep.subr.bf16.mxu0 %v2548
    %2681 = vmatpush1.bf16.msra.mxu0 %v2547
    %2682 = vmatprep.subr.bf16.mxu0 %v2552
    %2683 = vmatpush1.bf16.msra.mxu0 %v2551
    %2684 = vmatprep.subr.bf16.mxu0 %v2556
    %2685 = vmatpush1.bf16.msra.mxu0 %v2555
    %2686 = vmatprep.subr.bf16.mxu0 %v2560
    %2687 = vmatpush1.bf16.msra.mxu0 %v2559
    %2688 = vmatprep.subr.bf16.mxu0 %v2564
    %2689 = vmatpush1.bf16.msra.mxu0 %v2563
    %2690 = vmatprep.subr.bf16.mxu0 %v2568
    %2691 = vmatpush1.bf16.msra.mxu0 %v2567
    %2692 = vmatprep.subr.bf16.mxu0 %v2572
    %2693 = vmatpush1.bf16.msra.mxu0 %v2571
    %2694 = vmatprep.subr.bf16.mxu0 %v2576
    %2695 = vmatpush1.bf16.msra.mxu0 %v2575
    %2696 = vmatprep.mubr.bf16.mxu0 %v2320
    %2697 = vmatmul.mubr.bf16.gmra.mrb[0].mxu0 %v2313
    %v2698 = vpop.f32.mrb[0].mxu0
    %v2699 = vadd.f32 %v2647, %v2698
    %v2700 = vpop.f32.mrb[0].mxu0
    %v2701 = vadd.f32 %v2651, %v2700
    %v2702 = vpop.f32.mrb[0].mxu0
    %v2703 = vpop.f32.mrb[0].mxu0
    %2704 = vdwg.mxu0
    %2705 = vmatprep.subr.bf16.mxu0 %v2518
    %2706 = vmatpush1.bf16.msra.mxu0 %v2517
    %2707 = vmatprep.subr.bf16.mxu0 %v2522
    %2708 = vmatpush1.bf16.msra.mxu0 %v2521
    %2709 = vmatprep.subr.bf16.mxu0 %v2526
    %2710 = vmatpush1.bf16.msra.mxu0 %v2525
    %2711 = vmatprep.subr.bf16.mxu0 %v2530
    %2712 = vmatpush1.bf16.msra.mxu0 %v2529
    %2713 = vmatprep.subr.bf16.mxu0 %v2534
    %2714 = vmatpush1.bf16.msra.mxu0 %v2533
    %2715 = vmatprep.subr.bf16.mxu0 %v2538
    %2716 = vmatpush1.bf16.msra.mxu0 %v2537
    %2717 = vmatprep.subr.bf16.mxu0 %v2542
    %2718 = vmatpush1.bf16.msra.mxu0 %v2541
    %2719 = vmatprep.subr.bf16.mxu0 %v2546
    %2720 = vmatpush1.bf16.msra.mxu0 %v2545
    %2721 = vmatprep.subr.bf16.mxu0 %v2550
    %2722 = vmatpush1.bf16.msra.mxu0 %v2549
    %2723 = vmatprep.subr.bf16.mxu0 %v2554
    %2724 = vmatpush1.bf16.msra.mxu0 %v2553
    %2725 = vmatprep.subr.bf16.mxu0 %v2558
    %2726 = vmatpush1.bf16.msra.mxu0 %v2557
    %2727 = vmatprep.subr.bf16.mxu0 %v2562
    %2728 = vmatpush1.bf16.msra.mxu0 %v2561
    %2729 = vmatprep.subr.bf16.mxu0 %v2566
    %2730 = vmatpush1.bf16.msra.mxu0 %v2565
    %2731 = vmatprep.subr.bf16.mxu0 %v2570
    %2732 = vmatpush1.bf16.msra.mxu0 %v2569
    %2733 = vmatprep.subr.bf16.mxu0 %v2574
    %2734 = vmatpush1.bf16.msra.mxu0 %v2573
    %2735 = vmatprep.subr.bf16.mxu0 %v2578
    %2736 = vmatpush1.bf16.msra.mxu0 %v2577
    %2737 = vmatprep.mubr.bf16.mxu0 %v2320
    %2738 = vmatmul.mubr.bf16.gmra.mrb[0].mxu0 %v2313
    %v2739 = vpop.f32.mrb[0].mxu0
    %v2740 = vadd.f32 %v2655, %v2739
    %v2741 = vpop.f32.mrb[0].mxu0
    %v2742 = vadd.f32 %v2659, %v2741
    %v2743 = vpop.f32.mrb[0].mxu0
    %v2744 = vpop.f32.mrb[0].mxu0
    %2745 = vdwg.mxu0
    %v2746 = vxor.u32 %v2699, 2147483648
    %v2747 = vmul.f32 %v2746, 1.442695
    %v2748 = vpow.pop %v2747
    %v2749 = vadd.f32 %v2748, 1.0
    %v2750 = vrcp.pop %v2749
    %v2751 = vmul.f32 1.0, %v2750
    %v2752 = vxor.u32 %v2701, 2147483648
    %v2753 = vmul.f32 %v2752, 1.442695
    %v2754 = vpow.pop %v2753
    %v2755 = vadd.f32 %v2754, 1.0
    %v2756 = vrcp.pop %v2755
    %v2757 = vmul.f32 1.0, %v2756
    %v2758 = vmul.f32 %v2751, %v2742
    %v2759 = vadd.f32 %v2740, %v2758
    %v2760 = vtanh.pop %v2759
    %v2761 = vsub.f32 1.0, %v2757
    %v2762 = vmul.f32 %v2761, %v2760
    %v2763 = vmul.f32 %v2757, %v2219
    %v2764 = vadd.f32 %v2762, %v2763
    %s2765 = scalar_lea.vmem [#allocation8], 4
    %2766 = vst [vmem:[%s2765] sm:$0x1] %v2764
    %s2767 = sld [smem:[#allocation4 + $0x5]]
    %s2768 = scalar_lea.vmem %s1, %s2767
    %v2769 = vld [vmem:[%s2768] sm:$0x1]
    %v2770 = vld [vmem:[#allocation2] sm:$0x1]
    %v2771 = vsel %vm45, %v2769, %v2770
    %2772 = vst [vmem:[#allocation2] sm:$0x1] %v2771
    %v2773 = vpack.c.bf16 %v2764, %v2764
    %v2774 = vld [vmem:[#allocation2 + $0x1] sm:$0x1]
    %v2775 = vsel %vm45, %v2773, %v2774
    %2776 = vst [vmem:[#allocation2 + $0x1] sm:$0x1] %v2775
    %v2777 = vld [vmem:[#allocation2] sm:$0x3]
    %v2778 = vld [vmem:[#allocation5] sm:$0xff]
    %v2779 = vld [vmem:[#allocation5 + $0x8] sm:$0xff]
    %v2780 = vld [vmem:[#allocation5 + $0x10] sm:$0xff]
    %v2781 = vld [vmem:[#allocation5 + $0x18] sm:$0xff]
    %v2782 = vld [vmem:[#allocation5 + $0x20] sm:$0xff]
    %v2783 = vld [vmem:[#allocation5 + $0x28] sm:$0xff]
    %v2784 = vld [vmem:[#allocation5 + $0x30] sm:$0xff]
    %v2785 = vld [vmem:[#allocation5 + $0x38] sm:$0xff]
    %v2786 = vld [vmem:[#allocation5 + $0x40] sm:$0xff]
    %v2787 = vld [vmem:[#allocation5 + $0x48] sm:$0xff]
    %v2788 = vld [vmem:[#allocation5 + $0x50] sm:$0xff]
    %v2789 = vld [vmem:[#allocation5 + $0x58] sm:$0xff]
    %v2790 = vld [vmem:[#allocation5 + $0x60] sm:$0xff]
    %v2791 = vld [vmem:[#allocation5 + $0x68] sm:$0xff]
    %v2792 = vld [vmem:[#allocation5 + $0x70] sm:$0xff]
    %v2793 = vld [vmem:[#allocation5 + $0x78] sm:$0xff]
    %v2794 = vld [vmem:[#allocation5 + $0x80] sm:$0xff]
    %v2795 = vld [vmem:[#allocation5 + $0x88] sm:$0xff]
    %v2796 = vld [vmem:[#allocation5 + $0x90] sm:$0xff]
    %v2797 = vld [vmem:[#allocation5 + $0x98] sm:$0xff]
    %v2798 = vld [vmem:[#allocation5 + $0xa0] sm:$0xff]
    %v2799 = vld [vmem:[#allocation5 + $0xa8] sm:$0xff]
    %v2800 = vld [vmem:[#allocation5 + $0xb0] sm:$0xff]
    %v2801 = vld [vmem:[#allocation5 + $0xb8] sm:$0xff]
    %v2802 = vld [vmem:[#allocation5 + $0xc0] sm:$0xff]
    %v2803 = vld [vmem:[#allocation5 + $0xc8] sm:$0xff]
    %v2804 = vld [vmem:[#allocation5 + $0xd0] sm:$0xff]
    %v2805 = vld [vmem:[#allocation5 + $0xd8] sm:$0xff]
    %v2806 = vld [vmem:[#allocation5 + $0xe0] sm:$0xff]
    %v2807 = vld [vmem:[#allocation5 + $0xe8] sm:$0xff]
    %v2808 = vld [vmem:[#allocation5 + $0xf0] sm:$0xff]
    %v2809 = vld [vmem:[#allocation5 + $0xf8] sm:$0xff]
    %v2810 = vld [vmem:[#allocation5 + $0x100] sm:$0xff]
    %v2811 = vld [vmem:[#allocation5 + $0x108] sm:$0xff]
    %v2812 = vld [vmem:[#allocation5 + $0x110] sm:$0xff]
    %v2813 = vld [vmem:[#allocation5 + $0x118] sm:$0xff]
    %v2814 = vld [vmem:[#allocation5 + $0x120] sm:$0xff]
    %v2815 = vld [vmem:[#allocation5 + $0x128] sm:$0xff]
    %v2816 = vld [vmem:[#allocation5 + $0x130] sm:$0xff]
    %v2817 = vld [vmem:[#allocation5 + $0x138] sm:$0xff]
    %v2818 = vld [vmem:[#allocation5 + $0x140] sm:$0xff]
    %v2819 = vld [vmem:[#allocation5 + $0x148] sm:$0xff]
    %v2820 = vld [vmem:[#allocation5 + $0x150] sm:$0xff]
    %v2821 = vld [vmem:[#allocation5 + $0x158] sm:$0xff]
    %v2822 = vld [vmem:[#allocation5 + $0x160] sm:$0xff]
    %v2823 = vld [vmem:[#allocation5 + $0x168] sm:$0xff]
    %v2824 = vld [vmem:[#allocation5 + $0x170] sm:$0xff]
    %v2825 = vld [vmem:[#allocation5 + $0x178] sm:$0xff]
    %v2826 = vld [vmem:[#allocation5 + $0x180] sm:$0xff]
    %v2827 = vld [vmem:[#allocation5 + $0x188] sm:$0xff]
    %v2828 = vld [vmem:[#allocation5 + $0x190] sm:$0xff]
    %v2829 = vld [vmem:[#allocation5 + $0x198] sm:$0xff]
    %v2830 = vld [vmem:[#allocation5 + $0x1a0] sm:$0xff]
    %v2831 = vld [vmem:[#allocation5 + $0x1a8] sm:$0xff]
    %v2832 = vld [vmem:[#allocation5 + $0x1b0] sm:$0xff]
    %v2833 = vld [vmem:[#allocation5 + $0x1b8] sm:$0xff]
    %v2834 = vld [vmem:[#allocation5 + $0x1c0] sm:$0xff]
    %v2835 = vld [vmem:[#allocation5 + $0x1c8] sm:$0xff]
    %v2836 = vld [vmem:[#allocation5 + $0x1d0] sm:$0xff]
    %v2837 = vld [vmem:[#allocation5 + $0x1d8] sm:$0xff]
    %v2838 = vld [vmem:[#allocation5 + $0x1e0] sm:$0xff]
    %v2839 = vld [vmem:[#allocation5 + $0x1e8] sm:$0xff]
    %v2840 = vld [vmem:[#allocation5 + $0x1f0] sm:$0xff]
    %v2841 = vld [vmem:[#allocation5 + $0x1f8] sm:$0xff]
    %v2842 = vld [vmem:[%s4] sm:$0xf]
    %v2845 = vunpack.c.l.s4 1966171168
    %v2846 = vunpack.c.0.s8 %v2845
    %v2847 = vlaneseq
    %v2848 = vshrl.u32 %v2847, 7
    %v2849 = vsub.s32 %v2846, %v2848
    %v2850 = vrot.slane %v2777, %v2849
    %v2851 = vcombine.high %v2850, %v2850
    %v2853 = vunpack.c.l.s4 1966171168
    %v2854 = vunpack.c.0.s8 %v2853
    %v2855 = vlaneseq
    %v2856 = vshrl.u32 %v2855, 7
    %v2857 = vsub.s32 %v2854, %v2856
    %v2858 = vrot.slane %v2850, %v2857
    %v2860 = vunpack.c.l.s4 1966171168
    %v2861 = vunpack.c.0.s8 %v2860
    %v2862 = vlaneseq
    %v2863 = vshrl.u32 %v2862, 7
    %v2864 = vsub.s32 %v2861, %v2863
    %v2865 = vrot.slane %v2851, %v2864
    %v2932 = vunpack.c.l.b16 %v2778
    %v2933 = vunpack.c.h.b16 %v2778
    %v2934 = vunpack.c.l.b16 %v2779
    %v2935 = vunpack.c.h.b16 %v2779
    %v2936 = vunpack.c.l.b16 %v2780
    %v2937 = vunpack.c.h.b16 %v2780
    %v2938 = vunpack.c.l.b16 %v2781
    %v2939 = vunpack.c.h.b16 %v2781
    %v2940 = vunpack.c.l.b16 %v2782
    %v2941 = vunpack.c.h.b16 %v2782
    %v2942 = vunpack.c.l.b16 %v2783
    %v2943 = vunpack.c.h.b16 %v2783
    %v2944 = vunpack.c.l.b16 %v2784
    %v2945 = vunpack.c.h.b16 %v2784
    %v2946 = vunpack.c.l.b16 %v2785
    %v2947 = vunpack.c.h.b16 %v2785
    %v2948 = vunpack.c.l.b16 %v2786
    %v2949 = vunpack.c.h.b16 %v2786
    %v2950 = vunpack.c.l.b16 %v2787
    %v2951 = vunpack.c.h.b16 %v2787
    %v2952 = vunpack.c.l.b16 %v2788
    %v2953 = vunpack.c.h.b16 %v2788
    %v2954 = vunpack.c.l.b16 %v2789
    %v2955 = vunpack.c.h.b16 %v2789
    %v2956 = vunpack.c.l.b16 %v2790
    %v2957 = vunpack.c.h.b16 %v2790
    %v2958 = vunpack.c.l.b16 %v2791
    %v2959 = vunpack.c.h.b16 %v2791
    %v2960 = vunpack.c.l.b16 %v2792
    %v2961 = vunpack.c.h.b16 %v2792
    %v2962 = vunpack.c.l.b16 %v2793
    %v2963 = vunpack.c.h.b16 %v2793
    %v2964 = vunpack.c.l.b16 %v2794
    %v2965 = vunpack.c.h.b16 %v2794
    %v2966 = vunpack.c.l.b16 %v2795
    %v2967 = vunpack.c.h.b16 %v2795
    %v2968 = vunpack.c.l.b16 %v2796
    %v2969 = vunpack.c.h.b16 %v2796
    %v2970 = vunpack.c.l.b16 %v2797
    %v2971 = vunpack.c.h.b16 %v2797
    %v2972 = vunpack.c.l.b16 %v2798
    %v2973 = vunpack.c.h.b16 %v2798
    %v2974 = vunpack.c.l.b16 %v2799
    %v2975 = vunpack.c.h.b16 %v2799
    %v2976 = vunpack.c.l.b16 %v2800
    %v2977 = vunpack.c.h.b16 %v2800
    %v2978 = vunpack.c.l.b16 %v2801
    %v2979 = vunpack.c.h.b16 %v2801
    %v2980 = vunpack.c.l.b16 %v2802
    %v2981 = vunpack.c.h.b16 %v2802
    %v2982 = vunpack.c.l.b16 %v2803
    %v2983 = vunpack.c.h.b16 %v2803
    %v2984 = vunpack.c.l.b16 %v2804
    %v2985 = vunpack.c.h.b16 %v2804
    %v2986 = vunpack.c.l.b16 %v2805
    %v2987 = vunpack.c.h.b16 %v2805
    %v2988 = vunpack.c.l.b16 %v2806
    %v2989 = vunpack.c.h.b16 %v2806
    %v2990 = vunpack.c.l.b16 %v2807
    %v2991 = vunpack.c.h.b16 %v2807
    %v2992 = vunpack.c.l.b16 %v2808
    %v2993 = vunpack.c.h.b16 %v2808
    %v2994 = vunpack.c.l.b16 %v2809
    %v2995 = vunpack.c.h.b16 %v2809
    %v2996 = vunpack.c.l.b16 %v2810
    %v2997 = vunpack.c.h.b16 %v2810
    %v2998 = vunpack.c.l.b16 %v2811
    %v2999 = vunpack.c.h.b16 %v2811
    %v3000 = vunpack.c.l.b16 %v2812
    %v3001 = vunpack.c.h.b16 %v2812
    %v3002 = vunpack.c.l.b16 %v2813
    %v3003 = vunpack.c.h.b16 %v2813
    %v3004 = vunpack.c.l.b16 %v2814
    %v3005 = vunpack.c.h.b16 %v2814
    %v3006 = vunpack.c.l.b16 %v2815
    %v3007 = vunpack.c.h.b16 %v2815
    %v3008 = vunpack.c.l.b16 %v2816
    %v3009 = vunpack.c.h.b16 %v2816
    %v3010 = vunpack.c.l.b16 %v2817
    %v3011 = vunpack.c.h.b16 %v2817
    %v3012 = vunpack.c.l.b16 %v2818
    %v3013 = vunpack.c.h.b16 %v2818
    %v3014 = vunpack.c.l.b16 %v2819
    %v3015 = vunpack.c.h.b16 %v2819
    %v3016 = vunpack.c.l.b16 %v2820
    %v3017 = vunpack.c.h.b16 %v2820
    %v3018 = vunpack.c.l.b16 %v2821
    %v3019 = vunpack.c.h.b16 %v2821
    %v3020 = vunpack.c.l.b16 %v2822
    %v3021 = vunpack.c.h.b16 %v2822
    %v3022 = vunpack.c.l.b16 %v2823
    %v3023 = vunpack.c.h.b16 %v2823
    %v3024 = vunpack.c.l.b16 %v2824
    %v3025 = vunpack.c.h.b16 %v2824
    %v3026 = vunpack.c.l.b16 %v2825
    %v3027 = vunpack.c.h.b16 %v2825
    %v3028 = vunpack.c.l.b16 %v2826
    %v3029 = vunpack.c.h.b16 %v2826
    %v3030 = vunpack.c.l.b16 %v2827
    %v3031 = vunpack.c.h.b16 %v2827
    %v3032 = vunpack.c.l.b16 %v2828
    %v3033 = vunpack.c.h.b16 %v2828
    %v3034 = vunpack.c.l.b16 %v2829
    %v3035 = vunpack.c.h.b16 %v2829
    %v3036 = vunpack.c.l.b16 %v2830
    %v3037 = vunpack.c.h.b16 %v2830
    %v3038 = vunpack.c.l.b16 %v2831
    %v3039 = vunpack.c.h.b16 %v2831
    %v3040 = vunpack.c.l.b16 %v2832
    %v3041 = vunpack.c.h.b16 %v2832
    %v3042 = vunpack.c.l.b16 %v2833
    %v3043 = vunpack.c.h.b16 %v2833
    %v3044 = vunpack.c.l.b16 %v2834
    %v3045 = vunpack.c.h.b16 %v2834
    %v3046 = vunpack.c.l.b16 %v2835
    %v3047 = vunpack.c.h.b16 %v2835
    %v3048 = vunpack.c.l.b16 %v2836
    %v3049 = vunpack.c.h.b16 %v2836
    %v3050 = vunpack.c.l.b16 %v2837
    %v3051 = vunpack.c.h.b16 %v2837
    %v3052 = vunpack.c.l.b16 %v2838
    %v3053 = vunpack.c.h.b16 %v2838
    %v3054 = vunpack.c.l.b16 %v2839
    %v3055 = vunpack.c.h.b16 %v2839
    %v3056 = vunpack.c.l.b16 %v2840
    %v3057 = vunpack.c.h.b16 %v2840
    %v3058 = vunpack.c.l.b16 %v2841
    %v3059 = vunpack.c.h.b16 %v2841
    %v3060 = vpack.c.b16 %v2936, %v2932
    %v3061 = vpack.c.b16 %v2937, %v2933
    %v3062 = vpack.c.b16 %v2938, %v2934
    %v3063 = vpack.c.b16 %v2939, %v2935
    %v3064 = vpack.c.b16 %v2944, %v2940
    %v3065 = vpack.c.b16 %v2945, %v2941
    %v3066 = vpack.c.b16 %v2946, %v2942
    %v3067 = vpack.c.b16 %v2947, %v2943
    %v3068 = vpack.c.b16 %v2952, %v2948
    %v3069 = vpack.c.b16 %v2953, %v2949
    %v3070 = vpack.c.b16 %v2954, %v2950
    %v3071 = vpack.c.b16 %v2955, %v2951
    %v3072 = vpack.c.b16 %v2960, %v2956
    %v3073 = vpack.c.b16 %v2961, %v2957
    %v3074 = vpack.c.b16 %v2962, %v2958
    %v3075 = vpack.c.b16 %v2963, %v2959
    %v3076 = vpack.c.b16 %v2968, %v2964
    %v3077 = vpack.c.b16 %v2969, %v2965
    %v3078 = vpack.c.b16 %v2970, %v2966
    %v3079 = vpack.c.b16 %v2971, %v2967
    %v3080 = vpack.c.b16 %v2976, %v2972
    %v3081 = vpack.c.b16 %v2977, %v2973
    %v3082 = vpack.c.b16 %v2978, %v2974
    %v3083 = vpack.c.b16 %v2979, %v2975
    %v3084 = vpack.c.b16 %v2984, %v2980
    %v3085 = vpack.c.b16 %v2985, %v2981
    %v3086 = vpack.c.b16 %v2986, %v2982
    %v3087 = vpack.c.b16 %v2987, %v2983
    %v3088 = vpack.c.b16 %v2992, %v2988
    %v3089 = vpack.c.b16 %v2993, %v2989
    %v3090 = vpack.c.b16 %v2994, %v2990
    %v3091 = vpack.c.b16 %v2995, %v2991
    %v3092 = vpack.c.b16 %v3000, %v2996
    %v3093 = vpack.c.b16 %v3001, %v2997
    %v3094 = vpack.c.b16 %v3002, %v2998
    %v3095 = vpack.c.b16 %v3003, %v2999
    %v3096 = vpack.c.b16 %v3008, %v3004
    %v3097 = vpack.c.b16 %v3009, %v3005
    %v3098 = vpack.c.b16 %v3010, %v3006
    %v3099 = vpack.c.b16 %v3011, %v3007
    %v3100 = vpack.c.b16 %v3016, %v3012
    %v3101 = vpack.c.b16 %v3017, %v3013
    %v3102 = vpack.c.b16 %v3018, %v3014
    %v3103 = vpack.c.b16 %v3019, %v3015
    %v3104 = vpack.c.b16 %v3024, %v3020
    %v3105 = vpack.c.b16 %v3025, %v3021
    %v3106 = vpack.c.b16 %v3026, %v3022
    %v3107 = vpack.c.b16 %v3027, %v3023
    %v3108 = vpack.c.b16 %v3032, %v3028
    %v3109 = vpack.c.b16 %v3033, %v3029
    %v3110 = vpack.c.b16 %v3034, %v3030
    %v3111 = vpack.c.b16 %v3035, %v3031
    %v3112 = vpack.c.b16 %v3040, %v3036
    %v3113 = vpack.c.b16 %v3041, %v3037
    %v3114 = vpack.c.b16 %v3042, %v3038
    %v3115 = vpack.c.b16 %v3043, %v3039
    %v3116 = vpack.c.b16 %v3048, %v3044
    %v3117 = vpack.c.b16 %v3049, %v3045
    %v3118 = vpack.c.b16 %v3050, %v3046
    %v3119 = vpack.c.b16 %v3051, %v3047
    %v3120 = vpack.c.b16 %v3056, %v3052
    %v3121 = vpack.c.b16 %v3057, %v3053
    %v3122 = vpack.c.b16 %v3058, %v3054
    %v3123 = vpack.c.b16 %v3059, %v3055
    %v3189 = vlaneseq
    %v3190 = vshrl.u32 %v3189, 7
    %v3191 = vsub.s32 0, %v3190
    %v3192 = vrot.slane %v2842, %v3191
    %v3193 = vlaneseq
    %v3194 = vshrl.u32 %v3193, 7
    %v3195 = vsub.s32 1, %v3194
    %v3196 = vrot.slane %v2842, %v3195
    %v3197 = vlaneseq
    %v3198 = vshrl.u32 %v3197, 7
    %v3199 = vsub.s32 2, %v3198
    %v3200 = vrot.slane %v2842, %v3199
    %v3201 = vlaneseq
    %v3202 = vshrl.u32 %v3201, 7
    %v3203 = vsub.s32 3, %v3202
    %v3204 = vrot.slane %v2842, %v3203
    %3209 = vmatprep.subr.bf16.mxu0 %v3061
    %3210 = vmatpush1.bf16.msra.mxu0 %v3060
    %3211 = vmatprep.subr.bf16.mxu0 %v3065
    %3212 = vmatpush1.bf16.msra.mxu0 %v3064
    %3213 = vmatprep.subr.bf16.mxu0 %v3069
    %3214 = vmatpush1.bf16.msra.mxu0 %v3068
    %3215 = vmatprep.subr.bf16.mxu0 %v3073
    %3216 = vmatpush1.bf16.msra.mxu0 %v3072
    %3217 = vmatprep.subr.bf16.mxu0 %v3077
    %3218 = vmatpush1.bf16.msra.mxu0 %v3076
    %3219 = vmatprep.subr.bf16.mxu0 %v3081
    %3220 = vmatpush1.bf16.msra.mxu0 %v3080
    %3221 = vmatprep.subr.bf16.mxu0 %v3085
    %3222 = vmatpush1.bf16.msra.mxu0 %v3084
    %3223 = vmatprep.subr.bf16.mxu0 %v3089
    %3224 = vmatpush1.bf16.msra.mxu0 %v3088
    %3225 = vmatprep.subr.bf16.mxu0 %v3093
    %3226 = vmatpush1.bf16.msra.mxu0 %v3092
    %3227 = vmatprep.subr.bf16.mxu0 %v3097
    %3228 = vmatpush1.bf16.msra.mxu0 %v3096
    %3229 = vmatprep.subr.bf16.mxu0 %v3101
    %3230 = vmatpush1.bf16.msra.mxu0 %v3100
    %3231 = vmatprep.subr.bf16.mxu0 %v3105
    %3232 = vmatpush1.bf16.msra.mxu0 %v3104
    %3233 = vmatprep.subr.bf16.mxu0 %v3109
    %3234 = vmatpush1.bf16.msra.mxu0 %v3108
    %3235 = vmatprep.subr.bf16.mxu0 %v3113
    %3236 = vmatpush1.bf16.msra.mxu0 %v3112
    %3237 = vmatprep.subr.bf16.mxu0 %v3117
    %3238 = vmatpush1.bf16.msra.mxu0 %v3116
    %3239 = vmatprep.subr.bf16.mxu0 %v3121
    %3240 = vmatpush1.bf16.msra.mxu0 %v3120
    %3241 = vmatprep.mubr.bf16.mxu0 %v2865
    %3242 = vmatmul.mubr.bf16.gmra.mrb[0].mxu0 %v2858
    %v3243 = vpop.f32.mrb[0].mxu0
    %v3244 = vadd.f32 %v3192, %v3243
    %v3245 = vpop.f32.mrb[0].mxu0
    %v3246 = vadd.f32 %v3196, %v3245
    %v3247 = vpop.f32.mrb[0].mxu0
    %v3248 = vpop.f32.mrb[0].mxu0
    %3249 = vdwg.mxu0
    %3250 = vmatprep.subr.bf16.mxu0 %v3063
    %3251 = vmatpush1.bf16.msra.mxu0 %v3062
    %3252 = vmatprep.subr.bf16.mxu0 %v3067
    %3253 = vmatpush1.bf16.msra.mxu0 %v3066
    %3254 = vmatprep.subr.bf16.mxu0 %v3071
    %3255 = vmatpush1.bf16.msra.mxu0 %v3070
    %3256 = vmatprep.subr.bf16.mxu0 %v3075
    %3257 = vmatpush1.bf16.msra.mxu0 %v3074
    %3258 = vmatprep.subr.bf16.mxu0 %v3079
    %3259 = vmatpush1.bf16.msra.mxu0 %v3078
    %3260 = vmatprep.subr.bf16.mxu0 %v3083
    %3261 = vmatpush1.bf16.msra.mxu0 %v3082
    %3262 = vmatprep.subr.bf16.mxu0 %v3087
    %3263 = vmatpush1.bf16.msra.mxu0 %v3086
    %3264 = vmatprep.subr.bf16.mxu0 %v3091
    %3265 = vmatpush1.bf16.msra.mxu0 %v3090
    %3266 = vmatprep.subr.bf16.mxu0 %v3095
    %3267 = vmatpush1.bf16.msra.mxu0 %v3094
    %3268 = vmatprep.subr.bf16.mxu0 %v3099
    %3269 = vmatpush1.bf16.msra.mxu0 %v3098
    %3270 = vmatprep.subr.bf16.mxu0 %v3103
    %3271 = vmatpush1.bf16.msra.mxu0 %v3102
    %3272 = vmatprep.subr.bf16.mxu0 %v3107
    %3273 = vmatpush1.bf16.msra.mxu0 %v3106
    %3274 = vmatprep.subr.bf16.mxu0 %v3111
    %3275 = vmatpush1.bf16.msra.mxu0 %v3110
    %3276 = vmatprep.subr.bf16.mxu0 %v3115
    %3277 = vmatpush1.bf16.msra.mxu0 %v3114
    %3278 = vmatprep.subr.bf16.mxu0 %v3119
    %3279 = vmatpush1.bf16.msra.mxu0 %v3118
    %3280 = vmatprep.subr.bf16.mxu0 %v3123
    %3281 = vmatpush1.bf16.msra.mxu0 %v3122
    %3282 = vmatprep.mubr.bf16.mxu0 %v2865
    %3283 = vmatmul.mubr.bf16.gmra.mrb[0].mxu0 %v2858
    %v3284 = vpop.f32.mrb[0].mxu0
    %v3285 = vadd.f32 %v3200, %v3284
    %v3286 = vpop.f32.mrb[0].mxu0
    %v3287 = vadd.f32 %v3204, %v3286
    %v3288 = vpop.f32.mrb[0].mxu0
    %v3289 = vpop.f32.mrb[0].mxu0
    %3290 = vdwg.mxu0
    %v3291 = vxor.u32 %v3244, 2147483648
    %v3292 = vmul.f32 %v3291, 1.442695
    %v3293 = vpow.pop %v3292
    %v3294 = vadd.f32 %v3293, 1.0
    %v3295 = vrcp.pop %v3294
    %v3296 = vmul.f32 1.0, %v3295
    %v3297 = vxor.u32 %v3246, 2147483648
    %v3298 = vmul.f32 %v3297, 1.442695
    %v3299 = vpow.pop %v3298
    %v3300 = vadd.f32 %v3299, 1.0
    %v3301 = vrcp.pop %v3300
    %v3302 = vmul.f32 1.0, %v3301
    %v3303 = vmul.f32 %v3296, %v3287
    %v3304 = vadd.f32 %v3285, %v3303
    %v3305 = vtanh.pop %v3304
    %v3306 = vsub.f32 1.0, %v3302
    %v3307 = vmul.f32 %v3306, %v3305
    %v3308 = vmul.f32 %v3302, %v2764
    %v3309 = vadd.f32 %v3307, %v3308
    %s3310 = scalar_lea.vmem [#allocation8], 5
    %3311 = vst [vmem:[%s3310] sm:$0x1] %v3309
    %s3312 = sld [smem:[#allocation4 + $0x6]]
    %s3313 = scalar_lea.vmem %s1, %s3312
    %v3314 = vld [vmem:[%s3313] sm:$0x1]
    %v3315 = vld [vmem:[#allocation2] sm:$0x1]
    %v3316 = vsel %vm45, %v3314, %v3315
    %3317 = vst [vmem:[#allocation2] sm:$0x1] %v3316
    %v3318 = vpack.c.bf16 %v3309, %v3309
    %v3319 = vld [vmem:[#allocation2 + $0x1] sm:$0x1]
    %v3320 = vsel %vm45, %v3318, %v3319
    %3321 = vst [vmem:[#allocation2 + $0x1] sm:$0x1] %v3320
    %v3322 = vld [vmem:[#allocation2] sm:$0x3]
    %v3323 = vld [vmem:[#allocation5] sm:$0xff]
    %v3324 = vld [vmem:[#allocation5 + $0x8] sm:$0xff]
    %v3325 = vld [vmem:[#allocation5 + $0x10] sm:$0xff]
    %v3326 = vld [vmem:[#allocation5 + $0x18] sm:$0xff]
    %v3327 = vld [vmem:[#allocation5 + $0x20] sm:$0xff]
    %v3328 = vld [vmem:[#allocation5 + $0x28] sm:$0xff]
    %v3329 = vld [vmem:[#allocation5 + $0x30] sm:$0xff]
    %v3330 = vld [vmem:[#allocation5 + $0x38] sm:$0xff]
    %v3331 = vld [vmem:[#allocation5 + $0x40] sm:$0xff]
    %v3332 = vld [vmem:[#allocation5 + $0x48] sm:$0xff]
    %v3333 = vld [vmem:[#allocation5 + $0x50] sm:$0xff]
    %v3334 = vld [vmem:[#allocation5 + $0x58] sm:$0xff]
    %v3335 = vld [vmem:[#allocation5 + $0x60] sm:$0xff]
    %v3336 = vld [vmem:[#allocation5 + $0x68] sm:$0xff]
    %v3337 = vld [vmem:[#allocation5 + $0x70] sm:$0xff]
    %v3338 = vld [vmem:[#allocation5 + $0x78] sm:$0xff]
    %v3339 = vld [vmem:[#allocation5 + $0x80] sm:$0xff]
    %v3340 = vld [vmem:[#allocation5 + $0x88] sm:$0xff]
    %v3341 = vld [vmem:[#allocation5 + $0x90] sm:$0xff]
    %v3342 = vld [vmem:[#allocation5 + $0x98] sm:$0xff]
    %v3343 = vld [vmem:[#allocation5 + $0xa0] sm:$0xff]
    %v3344 = vld [vmem:[#allocation5 + $0xa8] sm:$0xff]
    %v3345 = vld [vmem:[#allocation5 + $0xb0] sm:$0xff]
    %v3346 = vld [vmem:[#allocation5 + $0xb8] sm:$0xff]
    %v3347 = vld [vmem:[#allocation5 + $0xc0] sm:$0xff]
    %v3348 = vld [vmem:[#allocation5 + $0xc8] sm:$0xff]
    %v3349 = vld [vmem:[#allocation5 + $0xd0] sm:$0xff]
    %v3350 = vld [vmem:[#allocation5 + $0xd8] sm:$0xff]
    %v3351 = vld [vmem:[#allocation5 + $0xe0] sm:$0xff]
    %v3352 = vld [vmem:[#allocation5 + $0xe8] sm:$0xff]
    %v3353 = vld [vmem:[#allocation5 + $0xf0] sm:$0xff]
    %v3354 = vld [vmem:[#allocation5 + $0xf8] sm:$0xff]
    %v3355 = vld [vmem:[#allocation5 + $0x100] sm:$0xff]
    %v3356 = vld [vmem:[#allocation5 + $0x108] sm:$0xff]
    %v3357 = vld [vmem:[#allocation5 + $0x110] sm:$0xff]
    %v3358 = vld [vmem:[#allocation5 + $0x118] sm:$0xff]
    %v3359 = vld [vmem:[#allocation5 + $0x120] sm:$0xff]
    %v3360 = vld [vmem:[#allocation5 + $0x128] sm:$0xff]
    %v3361 = vld [vmem:[#allocation5 + $0x130] sm:$0xff]
    %v3362 = vld [vmem:[#allocation5 + $0x138] sm:$0xff]
    %v3363 = vld [vmem:[#allocation5 + $0x140] sm:$0xff]
    %v3364 = vld [vmem:[#allocation5 + $0x148] sm:$0xff]
    %v3365 = vld [vmem:[#allocation5 + $0x150] sm:$0xff]
    %v3366 = vld [vmem:[#allocation5 + $0x158] sm:$0xff]
    %v3367 = vld [vmem:[#allocation5 + $0x160] sm:$0xff]
    %v3368 = vld [vmem:[#allocation5 + $0x168] sm:$0xff]
    %v3369 = vld [vmem:[#allocation5 + $0x170] sm:$0xff]
    %v3370 = vld [vmem:[#allocation5 + $0x178] sm:$0xff]
    %v3371 = vld [vmem:[#allocation5 + $0x180] sm:$0xff]
    %v3372 = vld [vmem:[#allocation5 + $0x188] sm:$0xff]
    %v3373 = vld [vmem:[#allocation5 + $0x190] sm:$0xff]
    %v3374 = vld [vmem:[#allocation5 + $0x198] sm:$0xff]
    %v3375 = vld [vmem:[#allocation5 + $0x1a0] sm:$0xff]
    %v3376 = vld [vmem:[#allocation5 + $0x1a8] sm:$0xff]
    %v3377 = vld [vmem:[#allocation5 + $0x1b0] sm:$0xff]
    %v3378 = vld [vmem:[#allocation5 + $0x1b8] sm:$0xff]
    %v3379 = vld [vmem:[#allocation5 + $0x1c0] sm:$0xff]
    %v3380 = vld [vmem:[#allocation5 + $0x1c8] sm:$0xff]
    %v3381 = vld [vmem:[#allocation5 + $0x1d0] sm:$0xff]
    %v3382 = vld [vmem:[#allocation5 + $0x1d8] sm:$0xff]
    %v3383 = vld [vmem:[#allocation5 + $0x1e0] sm:$0xff]
    %v3384 = vld [vmem:[#allocation5 + $0x1e8] sm:$0xff]
    %v3385 = vld [vmem:[#allocation5 + $0x1f0] sm:$0xff]
    %v3386 = vld [vmem:[#allocation5 + $0x1f8] sm:$0xff]
    %v3387 = vld [vmem:[%s4] sm:$0xf]
    %v3390 = vunpack.c.l.s4 1966171168
    %v3391 = vunpack.c.0.s8 %v3390
    %v3392 = vlaneseq
    %v3393 = vshrl.u32 %v3392, 7
    %v3394 = vsub.s32 %v3391, %v3393
    %v3395 = vrot.slane %v3322, %v3394
    %v3396 = vcombine.high %v3395, %v3395
    %v3398 = vunpack.c.l.s4 1966171168
    %v3399 = vunpack.c.0.s8 %v3398
    %v3400 = vlaneseq
    %v3401 = vshrl.u32 %v3400, 7
    %v3402 = vsub.s32 %v3399, %v3401
    %v3403 = vrot.slane %v3395, %v3402
    %v3405 = vunpack.c.l.s4 1966171168
    %v3406 = vunpack.c.0.s8 %v3405
    %v3407 = vlaneseq
    %v3408 = vshrl.u32 %v3407, 7
    %v3409 = vsub.s32 %v3406, %v3408
    %v3410 = vrot.slane %v3396, %v3409
    %v3477 = vunpack.c.l.b16 %v3323
    %v3478 = vunpack.c.h.b16 %v3323
    %v3479 = vunpack.c.l.b16 %v3324
    %v3480 = vunpack.c.h.b16 %v3324
    %v3481 = vunpack.c.l.b16 %v3325
    %v3482 = vunpack.c.h.b16 %v3325
    %v3483 = vunpack.c.l.b16 %v3326
    %v3484 = vunpack.c.h.b16 %v3326
    %v3485 = vunpack.c.l.b16 %v3327
    %v3486 = vunpack.c.h.b16 %v3327
    %v3487 = vunpack.c.l.b16 %v3328
    %v3488 = vunpack.c.h.b16 %v3328
    %v3489 = vunpack.c.l.b16 %v3329
    %v3490 = vunpack.c.h.b16 %v3329
    %v3491 = vunpack.c.l.b16 %v3330
    %v3492 = vunpack.c.h.b16 %v3330
    %v3493 = vunpack.c.l.b16 %v3331
    %v3494 = vunpack.c.h.b16 %v3331
    %v3495 = vunpack.c.l.b16 %v3332
    %v3496 = vunpack.c.h.b16 %v3332
    %v3497 = vunpack.c.l.b16 %v3333
    %v3498 = vunpack.c.h.b16 %v3333
    %v3499 = vunpack.c.l.b16 %v3334
    %v3500 = vunpack.c.h.b16 %v3334
    %v3501 = vunpack.c.l.b16 %v3335
    %v3502 = vunpack.c.h.b16 %v3335
    %v3503 = vunpack.c.l.b16 %v3336
    %v3504 = vunpack.c.h.b16 %v3336
    %v3505 = vunpack.c.l.b16 %v3337
    %v3506 = vunpack.c.h.b16 %v3337
    %v3507 = vunpack.c.l.b16 %v3338
    %v3508 = vunpack.c.h.b16 %v3338
    %v3509 = vunpack.c.l.b16 %v3339
    %v3510 = vunpack.c.h.b16 %v3339
    %v3511 = vunpack.c.l.b16 %v3340
    %v3512 = vunpack.c.h.b16 %v3340
    %v3513 = vunpack.c.l.b16 %v3341
    %v3514 = vunpack.c.h.b16 %v3341
    %v3515 = vunpack.c.l.b16 %v3342
    %v3516 = vunpack.c.h.b16 %v3342
    %v3517 = vunpack.c.l.b16 %v3343
    %v3518 = vunpack.c.h.b16 %v3343
    %v3519 = vunpack.c.l.b16 %v3344
    %v3520 = vunpack.c.h.b16 %v3344
    %v3521 = vunpack.c.l.b16 %v3345
    %v3522 = vunpack.c.h.b16 %v3345
    %v3523 = vunpack.c.l.b16 %v3346
    %v3524 = vunpack.c.h.b16 %v3346
    %v3525 = vunpack.c.l.b16 %v3347
    %v3526 = vunpack.c.h.b16 %v3347
    %v3527 = vunpack.c.l.b16 %v3348
    %v3528 = vunpack.c.h.b16 %v3348
    %v3529 = vunpack.c.l.b16 %v3349
    %v3530 = vunpack.c.h.b16 %v3349
    %v3531 = vunpack.c.l.b16 %v3350
    %v3532 = vunpack.c.h.b16 %v3350
    %v3533 = vunpack.c.l.b16 %v3351
    %v3534 = vunpack.c.h.b16 %v3351
    %v3535 = vunpack.c.l.b16 %v3352
    %v3536 = vunpack.c.h.b16 %v3352
    %v3537 = vunpack.c.l.b16 %v3353
    %v3538 = vunpack.c.h.b16 %v3353
    %v3539 = vunpack.c.l.b16 %v3354
    %v3540 = vunpack.c.h.b16 %v3354
    %v3541 = vunpack.c.l.b16 %v3355
    %v3542 = vunpack.c.h.b16 %v3355
    %v3543 = vunpack.c.l.b16 %v3356
    %v3544 = vunpack.c.h.b16 %v3356
    %v3545 = vunpack.c.l.b16 %v3357
    %v3546 = vunpack.c.h.b16 %v3357
    %v3547 = vunpack.c.l.b16 %v3358
    %v3548 = vunpack.c.h.b16 %v3358
    %v3549 = vunpack.c.l.b16 %v3359
    %v3550 = vunpack.c.h.b16 %v3359
    %v3551 = vunpack.c.l.b16 %v3360
    %v3552 = vunpack.c.h.b16 %v3360
    %v3553 = vunpack.c.l.b16 %v3361
    %v3554 = vunpack.c.h.b16 %v3361
    %v3555 = vunpack.c.l.b16 %v3362
    %v3556 = vunpack.c.h.b16 %v3362
    %v3557 = vunpack.c.l.b16 %v3363
    %v3558 = vunpack.c.h.b16 %v3363
    %v3559 = vunpack.c.l.b16 %v3364
    %v3560 = vunpack.c.h.b16 %v3364
    %v3561 = vunpack.c.l.b16 %v3365
    %v3562 = vunpack.c.h.b16 %v3365
    %v3563 = vunpack.c.l.b16 %v3366
    %v3564 = vunpack.c.h.b16 %v3366
    %v3565 = vunpack.c.l.b16 %v3367
    %v3566 = vunpack.c.h.b16 %v3367
    %v3567 = vunpack.c.l.b16 %v3368
    %v3568 = vunpack.c.h.b16 %v3368
    %v3569 = vunpack.c.l.b16 %v3369
    %v3570 = vunpack.c.h.b16 %v3369
    %v3571 = vunpack.c.l.b16 %v3370
    %v3572 = vunpack.c.h.b16 %v3370
    %v3573 = vunpack.c.l.b16 %v3371
    %v3574 = vunpack.c.h.b16 %v3371
    %v3575 = vunpack.c.l.b16 %v3372
    %v3576 = vunpack.c.h.b16 %v3372
    %v3577 = vunpack.c.l.b16 %v3373
    %v3578 = vunpack.c.h.b16 %v3373
    %v3579 = vunpack.c.l.b16 %v3374
    %v3580 = vunpack.c.h.b16 %v3374
    %v3581 = vunpack.c.l.b16 %v3375
    %v3582 = vunpack.c.h.b16 %v3375
    %v3583 = vunpack.c.l.b16 %v3376
    %v3584 = vunpack.c.h.b16 %v3376
    %v3585 = vunpack.c.l.b16 %v3377
    %v3586 = vunpack.c.h.b16 %v3377
    %v3587 = vunpack.c.l.b16 %v3378
    %v3588 = vunpack.c.h.b16 %v3378
    %v3589 = vunpack.c.l.b16 %v3379
    %v3590 = vunpack.c.h.b16 %v3379
    %v3591 = vunpack.c.l.b16 %v3380
    %v3592 = vunpack.c.h.b16 %v3380
    %v3593 = vunpack.c.l.b16 %v3381
    %v3594 = vunpack.c.h.b16 %v3381
    %v3595 = vunpack.c.l.b16 %v3382
    %v3596 = vunpack.c.h.b16 %v3382
    %v3597 = vunpack.c.l.b16 %v3383
    %v3598 = vunpack.c.h.b16 %v3383
    %v3599 = vunpack.c.l.b16 %v3384
    %v3600 = vunpack.c.h.b16 %v3384
    %v3601 = vunpack.c.l.b16 %v3385
    %v3602 = vunpack.c.h.b16 %v3385
    %v3603 = vunpack.c.l.b16 %v3386
    %v3604 = vunpack.c.h.b16 %v3386
    %v3605 = vpack.c.b16 %v3481, %v3477
    %v3606 = vpack.c.b16 %v3482, %v3478
    %v3607 = vpack.c.b16 %v3483, %v3479
    %v3608 = vpack.c.b16 %v3484, %v3480
    %v3609 = vpack.c.b16 %v3489, %v3485
    %v3610 = vpack.c.b16 %v3490, %v3486
    %v3611 = vpack.c.b16 %v3491, %v3487
    %v3612 = vpack.c.b16 %v3492, %v3488
    %v3613 = vpack.c.b16 %v3497, %v3493
    %v3614 = vpack.c.b16 %v3498, %v3494
    %v3615 = vpack.c.b16 %v3499, %v3495
    %v3616 = vpack.c.b16 %v3500, %v3496
    %v3617 = vpack.c.b16 %v3505, %v3501
    %v3618 = vpack.c.b16 %v3506, %v3502
    %v3619 = vpack.c.b16 %v3507, %v3503
    %v3620 = vpack.c.b16 %v3508, %v3504
    %v3621 = vpack.c.b16 %v3513, %v3509
    %v3622 = vpack.c.b16 %v3514, %v3510
    %v3623 = vpack.c.b16 %v3515, %v3511
    %v3624 = vpack.c.b16 %v3516, %v3512
    %v3625 = vpack.c.b16 %v3521, %v3517
    %v3626 = vpack.c.b16 %v3522, %v3518
    %v3627 = vpack.c.b16 %v3523, %v3519
    %v3628 = vpack.c.b16 %v3524, %v3520
    %v3629 = vpack.c.b16 %v3529, %v3525
    %v3630 = vpack.c.b16 %v3530, %v3526
    %v3631 = vpack.c.b16 %v3531, %v3527
    %v3632 = vpack.c.b16 %v3532, %v3528
    %v3633 = vpack.c.b16 %v3537, %v3533
    %v3634 = vpack.c.b16 %v3538, %v3534
    %v3635 = vpack.c.b16 %v3539, %v3535
    %v3636 = vpack.c.b16 %v3540, %v3536
    %v3637 = vpack.c.b16 %v3545, %v3541
    %v3638 = vpack.c.b16 %v3546, %v3542
    %v3639 = vpack.c.b16 %v3547, %v3543
    %v3640 = vpack.c.b16 %v3548, %v3544
    %v3641 = vpack.c.b16 %v3553, %v3549
    %v3642 = vpack.c.b16 %v3554, %v3550
    %v3643 = vpack.c.b16 %v3555, %v3551
    %v3644 = vpack.c.b16 %v3556, %v3552
    %v3645 = vpack.c.b16 %v3561, %v3557
    %v3646 = vpack.c.b16 %v3562, %v3558
    %v3647 = vpack.c.b16 %v3563, %v3559
    %v3648 = vpack.c.b16 %v3564, %v3560
    %v3649 = vpack.c.b16 %v3569, %v3565
    %v3650 = vpack.c.b16 %v3570, %v3566
    %v3651 = vpack.c.b16 %v3571, %v3567
    %v3652 = vpack.c.b16 %v3572, %v3568
    %v3653 = vpack.c.b16 %v3577, %v3573
    %v3654 = vpack.c.b16 %v3578, %v3574
    %v3655 = vpack.c.b16 %v3579, %v3575
    %v3656 = vpack.c.b16 %v3580, %v3576
    %v3657 = vpack.c.b16 %v3585, %v3581
    %v3658 = vpack.c.b16 %v3586, %v3582
    %v3659 = vpack.c.b16 %v3587, %v3583
    %v3660 = vpack.c.b16 %v3588, %v3584
    %v3661 = vpack.c.b16 %v3593, %v3589
    %v3662 = vpack.c.b16 %v3594, %v3590
    %v3663 = vpack.c.b16 %v3595, %v3591
    %v3664 = vpack.c.b16 %v3596, %v3592
    %v3665 = vpack.c.b16 %v3601, %v3597
    %v3666 = vpack.c.b16 %v3602, %v3598
    %v3667 = vpack.c.b16 %v3603, %v3599
    %v3668 = vpack.c.b16 %v3604, %v3600
    %v3734 = vlaneseq
    %v3735 = vshrl.u32 %v3734, 7
    %v3736 = vsub.s32 0, %v3735
    %v3737 = vrot.slane %v3387, %v3736
    %v3738 = vlaneseq
    %v3739 = vshrl.u32 %v3738, 7
    %v3740 = vsub.s32 1, %v3739
    %v3741 = vrot.slane %v3387, %v3740
    %v3742 = vlaneseq
    %v3743 = vshrl.u32 %v3742, 7
    %v3744 = vsub.s32 2, %v3743
    %v3745 = vrot.slane %v3387, %v3744
    %v3746 = vlaneseq
    %v3747 = vshrl.u32 %v3746, 7
    %v3748 = vsub.s32 3, %v3747
    %v3749 = vrot.slane %v3387, %v3748
    %3754 = vmatprep.subr.bf16.mxu0 %v3606
    %3755 = vmatpush1.bf16.msra.mxu0 %v3605
    %3756 = vmatprep.subr.bf16.mxu0 %v3610
    %3757 = vmatpush1.bf16.msra.mxu0 %v3609
    %3758 = vmatprep.subr.bf16.mxu0 %v3614
    %3759 = vmatpush1.bf16.msra.mxu0 %v3613
    %3760 = vmatprep.subr.bf16.mxu0 %v3618
    %3761 = vmatpush1.bf16.msra.mxu0 %v3617
    %3762 = vmatprep.subr.bf16.mxu0 %v3622
    %3763 = vmatpush1.bf16.msra.mxu0 %v3621
    %3764 = vmatprep.subr.bf16.mxu0 %v3626
    %3765 = vmatpush1.bf16.msra.mxu0 %v3625
    %3766 = vmatprep.subr.bf16.mxu0 %v3630
    %3767 = vmatpush1.bf16.msra.mxu0 %v3629
    %3768 = vmatprep.subr.bf16.mxu0 %v3634
    %3769 = vmatpush1.bf16.msra.mxu0 %v3633
    %3770 = vmatprep.subr.bf16.mxu0 %v3638
    %3771 = vmatpush1.bf16.msra.mxu0 %v3637
    %3772 = vmatprep.subr.bf16.mxu0 %v3642
    %3773 = vmatpush1.bf16.msra.mxu0 %v3641
    %3774 = vmatprep.subr.bf16.mxu0 %v3646
    %3775 = vmatpush1.bf16.msra.mxu0 %v3645
    %3776 = vmatprep.subr.bf16.mxu0 %v3650
    %3777 = vmatpush1.bf16.msra.mxu0 %v3649
    %3778 = vmatprep.subr.bf16.mxu0 %v3654
    %3779 = vmatpush1.bf16.msra.mxu0 %v3653
    %3780 = vmatprep.subr.bf16.mxu0 %v3658
    %3781 = vmatpush1.bf16.msra.mxu0 %v3657
    %3782 = vmatprep.subr.bf16.mxu0 %v3662
    %3783 = vmatpush1.bf16.msra.mxu0 %v3661
    %3784 = vmatprep.subr.bf16.mxu0 %v3666
    %3785 = vmatpush1.bf16.msra.mxu0 %v3665
    %3786 = vmatprep.mubr.bf16.mxu0 %v3410
    %3787 = vmatmul.mubr.bf16.gmra.mrb[0].mxu0 %v3403
    %v3788 = vpop.f32.mrb[0].mxu0
    %v3789 = vadd.f32 %v3737, %v3788
    %v3790 = vpop.f32.mrb[0].mxu0
    %v3791 = vadd.f32 %v3741, %v3790
    %v3792 = vpop.f32.mrb[0].mxu0
    %v3793 = vpop.f32.mrb[0].mxu0
    %3794 = vdwg.mxu0
    %3795 = vmatprep.subr.bf16.mxu0 %v3608
    %3796 = vmatpush1.bf16.msra.mxu0 %v3607
    %3797 = vmatprep.subr.bf16.mxu0 %v3612
    %3798 = vmatpush1.bf16.msra.mxu0 %v3611
    %3799 = vmatprep.subr.bf16.mxu0 %v3616
    %3800 = vmatpush1.bf16.msra.mxu0 %v3615
    %3801 = vmatprep.subr.bf16.mxu0 %v3620
    %3802 = vmatpush1.bf16.msra.mxu0 %v3619
    %3803 = vmatprep.subr.bf16.mxu0 %v3624
    %3804 = vmatpush1.bf16.msra.mxu0 %v3623
    %3805 = vmatprep.subr.bf16.mxu0 %v3628
    %3806 = vmatpush1.bf16.msra.mxu0 %v3627
    %3807 = vmatprep.subr.bf16.mxu0 %v3632
    %3808 = vmatpush1.bf16.msra.mxu0 %v3631
    %3809 = vmatprep.subr.bf16.mxu0 %v3636
    %3810 = vmatpush1.bf16.msra.mxu0 %v3635
    %3811 = vmatprep.subr.bf16.mxu0 %v3640
    %3812 = vmatpush1.bf16.msra.mxu0 %v3639
    %3813 = vmatprep.subr.bf16.mxu0 %v3644
    %3814 = vmatpush1.bf16.msra.mxu0 %v3643
    %3815 = vmatprep.subr.bf16.mxu0 %v3648
    %3816 = vmatpush1.bf16.msra.mxu0 %v3647
    %3817 = vmatprep.subr.bf16.mxu0 %v3652
    %3818 = vmatpush1.bf16.msra.mxu0 %v3651
    %3819 = vmatprep.subr.bf16.mxu0 %v3656
    %3820 = vmatpush1.bf16.msra.mxu0 %v3655
    %3821 = vmatprep.subr.bf16.mxu0 %v3660
    %3822 = vmatpush1.bf16.msra.mxu0 %v3659
    %3823 = vmatprep.subr.bf16.mxu0 %v3664
    %3824 = vmatpush1.bf16.msra.mxu0 %v3663
    %3825 = vmatprep.subr.bf16.mxu0 %v3668
    %3826 = vmatpush1.bf16.msra.mxu0 %v3667
    %3827 = vmatprep.mubr.bf16.mxu0 %v3410
    %3828 = vmatmul.mubr.bf16.gmra.mrb[0].mxu0 %v3403
    %v3829 = vpop.f32.mrb[0].mxu0
    %v3830 = vadd.f32 %v3745, %v3829
    %v3831 = vpop.f32.mrb[0].mxu0
    %v3832 = vadd.f32 %v3749, %v3831
    %v3833 = vpop.f32.mrb[0].mxu0
    %v3834 = vpop.f32.mrb[0].mxu0
    %3835 = vdwg.mxu0
    %v3836 = vxor.u32 %v3789, 2147483648
    %v3837 = vmul.f32 %v3836, 1.442695
    %v3838 = vpow.pop %v3837
    %v3839 = vadd.f32 %v3838, 1.0
    %v3840 = vrcp.pop %v3839
    %v3841 = vmul.f32 1.0, %v3840
    %v3842 = vxor.u32 %v3791, 2147483648
    %v3843 = vmul.f32 %v3842, 1.442695
    %v3844 = vpow.pop %v3843
    %v3845 = vadd.f32 %v3844, 1.0
    %v3846 = vrcp.pop %v3845
    %v3847 = vmul.f32 1.0, %v3846
    %v3848 = vmul.f32 %v3841, %v3832
    %v3849 = vadd.f32 %v3830, %v3848
    %v3850 = vtanh.pop %v3849
    %v3851 = vsub.f32 1.0, %v3847
    %v3852 = vmul.f32 %v3851, %v3850
    %v3853 = vmul.f32 %v3847, %v3309
    %v3854 = vadd.f32 %v3852, %v3853
    %s3855 = scalar_lea.vmem [#allocation8], 6
    %3856 = vst [vmem:[%s3855] sm:$0x1] %v3854
    %s3857 = sld [smem:[#allocation4 + $0x7]]
    %s3858 = scalar_lea.vmem %s1, %s3857
    %v3859 = vld [vmem:[%s3858] sm:$0x1]
    %v3860 = vld [vmem:[#allocation2] sm:$0x1]
    %v3861 = vsel %vm45, %v3859, %v3860
    %3862 = vst [vmem:[#allocation2] sm:$0x1] %v3861
    %v3863 = vpack.c.bf16 %v3854, %v3854
    %v3864 = vld [vmem:[#allocation2 + $0x1] sm:$0x1]
    %v3865 = vsel %vm45, %v3863, %v3864
    %3866 = vst [vmem:[#allocation2 + $0x1] sm:$0x1] %v3865
    %v3867 = vld [vmem:[#allocation2] sm:$0x3]
    %v3868 = vld [vmem:[#allocation5] sm:$0xff]
    %v3869 = vld [vmem:[#allocation5 + $0x8] sm:$0xff]
    %v3870 = vld [vmem:[#allocation5 + $0x10] sm:$0xff]
    %v3871 = vld [vmem:[#allocation5 + $0x18] sm:$0xff]
    %v3872 = vld [vmem:[#allocation5 + $0x20] sm:$0xff]
    %v3873 = vld [vmem:[#allocation5 + $0x28] sm:$0xff]
    %v3874 = vld [vmem:[#allocation5 + $0x30] sm:$0xff]
    %v3875 = vld [vmem:[#allocation5 + $0x38] sm:$0xff]
    %v3876 = vld [vmem:[#allocation5 + $0x40] sm:$0xff]
    %v3877 = vld [vmem:[#allocation5 + $0x48] sm:$0xff]
    %v3878 = vld [vmem:[#allocation5 + $0x50] sm:$0xff]
    %v3879 = vld [vmem:[#allocation5 + $0x58] sm:$0xff]
    %v3880 = vld [vmem:[#allocation5 + $0x60] sm:$0xff]
    %v3881 = vld [vmem:[#allocation5 + $0x68] sm:$0xff]
    %v3882 = vld [vmem:[#allocation5 + $0x70] sm:$0xff]
    %v3883 = vld [vmem:[#allocation5 + $0x78] sm:$0xff]
    %v3884 = vld [vmem:[#allocation5 + $0x80] sm:$0xff]
    %v3885 = vld [vmem:[#allocation5 + $0x88] sm:$0xff]
    %v3886 = vld [vmem:[#allocation5 + $0x90] sm:$0xff]
    %v3887 = vld [vmem:[#allocation5 + $0x98] sm:$0xff]
    %v3888 = vld [vmem:[#allocation5 + $0xa0] sm:$0xff]
    %v3889 = vld [vmem:[#allocation5 + $0xa8] sm:$0xff]
    %v3890 = vld [vmem:[#allocation5 + $0xb0] sm:$0xff]
    %v3891 = vld [vmem:[#allocation5 + $0xb8] sm:$0xff]
    %v3892 = vld [vmem:[#allocation5 + $0xc0] sm:$0xff]
    %v3893 = vld [vmem:[#allocation5 + $0xc8] sm:$0xff]
    %v3894 = vld [vmem:[#allocation5 + $0xd0] sm:$0xff]
    %v3895 = vld [vmem:[#allocation5 + $0xd8] sm:$0xff]
    %v3896 = vld [vmem:[#allocation5 + $0xe0] sm:$0xff]
    %v3897 = vld [vmem:[#allocation5 + $0xe8] sm:$0xff]
    %v3898 = vld [vmem:[#allocation5 + $0xf0] sm:$0xff]
    %v3899 = vld [vmem:[#allocation5 + $0xf8] sm:$0xff]
    %v3900 = vld [vmem:[#allocation5 + $0x100] sm:$0xff]
    %v3901 = vld [vmem:[#allocation5 + $0x108] sm:$0xff]
    %v3902 = vld [vmem:[#allocation5 + $0x110] sm:$0xff]
    %v3903 = vld [vmem:[#allocation5 + $0x118] sm:$0xff]
    %v3904 = vld [vmem:[#allocation5 + $0x120] sm:$0xff]
    %v3905 = vld [vmem:[#allocation5 + $0x128] sm:$0xff]
    %v3906 = vld [vmem:[#allocation5 + $0x130] sm:$0xff]
    %v3907 = vld [vmem:[#allocation5 + $0x138] sm:$0xff]
    %v3908 = vld [vmem:[#allocation5 + $0x140] sm:$0xff]
    %v3909 = vld [vmem:[#allocation5 + $0x148] sm:$0xff]
    %v3910 = vld [vmem:[#allocation5 + $0x150] sm:$0xff]
    %v3911 = vld [vmem:[#allocation5 + $0x158] sm:$0xff]
    %v3912 = vld [vmem:[#allocation5 + $0x160] sm:$0xff]
    %v3913 = vld [vmem:[#allocation5 + $0x168] sm:$0xff]
    %v3914 = vld [vmem:[#allocation5 + $0x170] sm:$0xff]
    %v3915 = vld [vmem:[#allocation5 + $0x178] sm:$0xff]
    %v3916 = vld [vmem:[#allocation5 + $0x180] sm:$0xff]
    %v3917 = vld [vmem:[#allocation5 + $0x188] sm:$0xff]
    %v3918 = vld [vmem:[#allocation5 + $0x190] sm:$0xff]
    %v3919 = vld [vmem:[#allocation5 + $0x198] sm:$0xff]
    %v3920 = vld [vmem:[#allocation5 + $0x1a0] sm:$0xff]
    %v3921 = vld [vmem:[#allocation5 + $0x1a8] sm:$0xff]
    %v3922 = vld [vmem:[#allocation5 + $0x1b0] sm:$0xff]
    %v3923 = vld [vmem:[#allocation5 + $0x1b8] sm:$0xff]
    %v3924 = vld [vmem:[#allocation5 + $0x1c0] sm:$0xff]
    %v3925 = vld [vmem:[#allocation5 + $0x1c8] sm:$0xff]
    %v3926 = vld [vmem:[#allocation5 + $0x1d0] sm:$0xff]
    %v3927 = vld [vmem:[#allocation5 + $0x1d8] sm:$0xff]
    %v3928 = vld [vmem:[#allocation5 + $0x1e0] sm:$0xff]
    %v3929 = vld [vmem:[#allocation5 + $0x1e8] sm:$0xff]
    %v3930 = vld [vmem:[#allocation5 + $0x1f0] sm:$0xff]
    %v3931 = vld [vmem:[#allocation5 + $0x1f8] sm:$0xff]
    %v3932 = vld [vmem:[%s4] sm:$0xf]
    %v3935 = vunpack.c.l.s4 1966171168
    %v3936 = vunpack.c.0.s8 %v3935
    %v3937 = vlaneseq
    %v3938 = vshrl.u32 %v3937, 7
    %v3939 = vsub.s32 %v3936, %v3938
    %v3940 = vrot.slane %v3867, %v3939
    %v3941 = vcombine.high %v3940, %v3940
    %v3943 = vunpack.c.l.s4 1966171168
    %v3944 = vunpack.c.0.s8 %v3943
    %v3945 = vlaneseq
    %v3946 = vshrl.u32 %v3945, 7
    %v3947 = vsub.s32 %v3944, %v3946
    %v3948 = vrot.slane %v3940, %v3947
    %v3950 = vunpack.c.l.s4 1966171168
    %v3951 = vunpack.c.0.s8 %v3950
    %v3952 = vlaneseq
    %v3953 = vshrl.u32 %v3952, 7
    %v3954 = vsub.s32 %v3951, %v3953
    %v3955 = vrot.slane %v3941, %v3954
    %v4022 = vunpack.c.l.b16 %v3868
    %v4023 = vunpack.c.h.b16 %v3868
    %v4024 = vunpack.c.l.b16 %v3869
    %v4025 = vunpack.c.h.b16 %v3869
    %v4026 = vunpack.c.l.b16 %v3870
    %v4027 = vunpack.c.h.b16 %v3870
    %v4028 = vunpack.c.l.b16 %v3871
    %v4029 = vunpack.c.h.b16 %v3871
    %v4030 = vunpack.c.l.b16 %v3872
    %v4031 = vunpack.c.h.b16 %v3872
    %v4032 = vunpack.c.l.b16 %v3873
    %v4033 = vunpack.c.h.b16 %v3873
    %v4034 = vunpack.c.l.b16 %v3874
    %v4035 = vunpack.c.h.b16 %v3874
    %v4036 = vunpack.c.l.b16 %v3875
    %v4037 = vunpack.c.h.b16 %v3875
    %v4038 = vunpack.c.l.b16 %v3876
    %v4039 = vunpack.c.h.b16 %v3876
    %v4040 = vunpack.c.l.b16 %v3877
    %v4041 = vunpack.c.h.b16 %v3877
    %v4042 = vunpack.c.l.b16 %v3878
    %v4043 = vunpack.c.h.b16 %v3878
    %v4044 = vunpack.c.l.b16 %v3879
    %v4045 = vunpack.c.h.b16 %v3879
    %v4046 = vunpack.c.l.b16 %v3880
    %v4047 = vunpack.c.h.b16 %v3880
    %v4048 = vunpack.c.l.b16 %v3881
    %v4049 = vunpack.c.h.b16 %v3881
    %v4050 = vunpack.c.l.b16 %v3882
    %v4051 = vunpack.c.h.b16 %v3882
    %v4052 = vunpack.c.l.b16 %v3883
    %v4053 = vunpack.c.h.b16 %v3883
    %v4054 = vunpack.c.l.b16 %v3884
    %v4055 = vunpack.c.h.b16 %v3884
    %v4056 = vunpack.c.l.b16 %v3885
    %v4057 = vunpack.c.h.b16 %v3885
    %v4058 = vunpack.c.l.b16 %v3886
    %v4059 = vunpack.c.h.b16 %v3886
    %v4060 = vunpack.c.l.b16 %v3887
    %v4061 = vunpack.c.h.b16 %v3887
    %v4062 = vunpack.c.l.b16 %v3888
    %v4063 = vunpack.c.h.b16 %v3888
    %v4064 = vunpack.c.l.b16 %v3889
    %v4065 = vunpack.c.h.b16 %v3889
    %v4066 = vunpack.c.l.b16 %v3890
    %v4067 = vunpack.c.h.b16 %v3890
    %v4068 = vunpack.c.l.b16 %v3891
    %v4069 = vunpack.c.h.b16 %v3891
    %v4070 = vunpack.c.l.b16 %v3892
    %v4071 = vunpack.c.h.b16 %v3892
    %v4072 = vunpack.c.l.b16 %v3893
    %v4073 = vunpack.c.h.b16 %v3893
    %v4074 = vunpack.c.l.b16 %v3894
    %v4075 = vunpack.c.h.b16 %v3894
    %v4076 = vunpack.c.l.b16 %v3895
    %v4077 = vunpack.c.h.b16 %v3895
    %v4078 = vunpack.c.l.b16 %v3896
    %v4079 = vunpack.c.h.b16 %v3896
    %v4080 = vunpack.c.l.b16 %v3897
    %v4081 = vunpack.c.h.b16 %v3897
    %v4082 = vunpack.c.l.b16 %v3898
    %v4083 = vunpack.c.h.b16 %v3898
    %v4084 = vunpack.c.l.b16 %v3899
    %v4085 = vunpack.c.h.b16 %v3899
    %v4086 = vunpack.c.l.b16 %v3900
    %v4087 = vunpack.c.h.b16 %v3900
    %v4088 = vunpack.c.l.b16 %v3901
    %v4089 = vunpack.c.h.b16 %v3901
    %v4090 = vunpack.c.l.b16 %v3902
    %v4091 = vunpack.c.h.b16 %v3902
    %v4092 = vunpack.c.l.b16 %v3903
    %v4093 = vunpack.c.h.b16 %v3903
    %v4094 = vunpack.c.l.b16 %v3904
    %v4095 = vunpack.c.h.b16 %v3904
    %v4096 = vunpack.c.l.b16 %v3905
    %v4097 = vunpack.c.h.b16 %v3905
    %v4098 = vunpack.c.l.b16 %v3906
    %v4099 = vunpack.c.h.b16 %v3906
    %v4100 = vunpack.c.l.b16 %v3907
    %v4101 = vunpack.c.h.b16 %v3907
    %v4102 = vunpack.c.l.b16 %v3908
    %v4103 = vunpack.c.h.b16 %v3908
    %v4104 = vunpack.c.l.b16 %v3909
    %v4105 = vunpack.c.h.b16 %v3909
    %v4106 = vunpack.c.l.b16 %v3910
    %v4107 = vunpack.c.h.b16 %v3910
    %v4108 = vunpack.c.l.b16 %v3911
    %v4109 = vunpack.c.h.b16 %v3911
    %v4110 = vunpack.c.l.b16 %v3912
    %v4111 = vunpack.c.h.b16 %v3912
    %v4112 = vunpack.c.l.b16 %v3913
    %v4113 = vunpack.c.h.b16 %v3913
    %v4114 = vunpack.c.l.b16 %v3914
    %v4115 = vunpack.c.h.b16 %v3914
    %v4116 = vunpack.c.l.b16 %v3915
    %v4117 = vunpack.c.h.b16 %v3915
    %v4118 = vunpack.c.l.b16 %v3916
    %v4119 = vunpack.c.h.b16 %v3916
    %v4120 = vunpack.c.l.b16 %v3917
    %v4121 = vunpack.c.h.b16 %v3917
    %v4122 = vunpack.c.l.b16 %v3918
    %v4123 = vunpack.c.h.b16 %v3918
    %v4124 = vunpack.c.l.b16 %v3919
    %v4125 = vunpack.c.h.b16 %v3919
    %v4126 = vunpack.c.l.b16 %v3920
    %v4127 = vunpack.c.h.b16 %v3920
    %v4128 = vunpack.c.l.b16 %v3921
    %v4129 = vunpack.c.h.b16 %v3921
    %v4130 = vunpack.c.l.b16 %v3922
    %v4131 = vunpack.c.h.b16 %v3922
    %v4132 = vunpack.c.l.b16 %v3923
    %v4133 = vunpack.c.h.b16 %v3923
    %v4134 = vunpack.c.l.b16 %v3924
    %v4135 = vunpack.c.h.b16 %v3924
    %v4136 = vunpack.c.l.b16 %v3925
    %v4137 = vunpack.c.h.b16 %v3925
    %v4138 = vunpack.c.l.b16 %v3926
    %v4139 = vunpack.c.h.b16 %v3926
    %v4140 = vunpack.c.l.b16 %v3927
    %v4141 = vunpack.c.h.b16 %v3927
    %v4142 = vunpack.c.l.b16 %v3928
    %v4143 = vunpack.c.h.b16 %v3928
    %v4144 = vunpack.c.l.b16 %v3929
    %v4145 = vunpack.c.h.b16 %v3929
    %v4146 = vunpack.c.l.b16 %v3930
    %v4147 = vunpack.c.h.b16 %v3930
    %v4148 = vunpack.c.l.b16 %v3931
    %v4149 = vunpack.c.h.b16 %v3931
    %v4150 = vpack.c.b16 %v4026, %v4022
    %v4151 = vpack.c.b16 %v4027, %v4023
    %v4152 = vpack.c.b16 %v4028, %v4024
    %v4153 = vpack.c.b16 %v4029, %v4025
    %v4154 = vpack.c.b16 %v4034, %v4030
    %v4155 = vpack.c.b16 %v4035, %v4031
    %v4156 = vpack.c.b16 %v4036, %v4032
    %v4157 = vpack.c.b16 %v4037, %v4033
    %v4158 = vpack.c.b16 %v4042, %v4038
    %v4159 = vpack.c.b16 %v4043, %v4039
    %v4160 = vpack.c.b16 %v4044, %v4040
    %v4161 = vpack.c.b16 %v4045, %v4041
    %v4162 = vpack.c.b16 %v4050, %v4046
    %v4163 = vpack.c.b16 %v4051, %v4047
    %v4164 = vpack.c.b16 %v4052, %v4048
    %v4165 = vpack.c.b16 %v4053, %v4049
    %v4166 = vpack.c.b16 %v4058, %v4054
    %v4167 = vpack.c.b16 %v4059, %v4055
    %v4168 = vpack.c.b16 %v4060, %v4056
    %v4169 = vpack.c.b16 %v4061, %v4057
    %v4170 = vpack.c.b16 %v4066, %v4062
    %v4171 = vpack.c.b16 %v4067, %v4063
    %v4172 = vpack.c.b16 %v4068, %v4064
    %v4173 = vpack.c.b16 %v4069, %v4065
    %v4174 = vpack.c.b16 %v4074, %v4070
    %v4175 = vpack.c.b16 %v4075, %v4071
    %v4176 = vpack.c.b16 %v4076, %v4072
    %v4177 = vpack.c.b16 %v4077, %v4073
    %v4178 = vpack.c.b16 %v4082, %v4078
    %v4179 = vpack.c.b16 %v4083, %v4079
    %v4180 = vpack.c.b16 %v4084, %v4080
    %v4181 = vpack.c.b16 %v4085, %v4081
    %v4182 = vpack.c.b16 %v4090, %v4086
    %v4183 = vpack.c.b16 %v4091, %v4087
    %v4184 = vpack.c.b16 %v4092, %v4088
    %v4185 = vpack.c.b16 %v4093, %v4089
    %v4186 = vpack.c.b16 %v4098, %v4094
    %v4187 = vpack.c.b16 %v4099, %v4095
    %v4188 = vpack.c.b16 %v4100, %v4096
    %v4189 = vpack.c.b16 %v4101, %v4097
    %v4190 = vpack.c.b16 %v4106, %v4102
    %v4191 = vpack.c.b16 %v4107, %v4103
    %v4192 = vpack.c.b16 %v4108, %v4104
    %v4193 = vpack.c.b16 %v4109, %v4105
    %v4194 = vpack.c.b16 %v4114, %v4110
    %v4195 = vpack.c.b16 %v4115, %v4111
    %v4196 = vpack.c.b16 %v4116, %v4112
    %v4197 = vpack.c.b16 %v4117, %v4113
    %v4198 = vpack.c.b16 %v4122, %v4118
    %v4199 = vpack.c.b16 %v4123, %v4119
    %v4200 = vpack.c.b16 %v4124, %v4120
    %v4201 = vpack.c.b16 %v4125, %v4121
    %v4202 = vpack.c.b16 %v4130, %v4126
    %v4203 = vpack.c.b16 %v4131, %v4127
    %v4204 = vpack.c.b16 %v4132, %v4128
    %v4205 = vpack.c.b16 %v4133, %v4129
    %v4206 = vpack.c.b16 %v4138, %v4134
    %v4207 = vpack.c.b16 %v4139, %v4135
    %v4208 = vpack.c.b16 %v4140, %v4136
    %v4209 = vpack.c.b16 %v4141, %v4137
    %v4210 = vpack.c.b16 %v4146, %v4142
    %v4211 = vpack.c.b16 %v4147, %v4143
    %v4212 = vpack.c.b16 %v4148, %v4144
    %v4213 = vpack.c.b16 %v4149, %v4145
    %v4279 = vlaneseq
    %v4280 = vshrl.u32 %v4279, 7
    %v4281 = vsub.s32 0, %v4280
    %v4282 = vrot.slane %v3932, %v4281
    %v4283 = vlaneseq
    %v4284 = vshrl.u32 %v4283, 7
    %v4285 = vsub.s32 1, %v4284
    %v4286 = vrot.slane %v3932, %v4285
    %v4287 = vlaneseq
    %v4288 = vshrl.u32 %v4287, 7
    %v4289 = vsub.s32 2, %v4288
    %v4290 = vrot.slane %v3932, %v4289
    %v4291 = vlaneseq
    %v4292 = vshrl.u32 %v4291, 7
    %v4293 = vsub.s32 3, %v4292
    %v4294 = vrot.slane %v3932, %v4293
    %4299 = vmatprep.subr.bf16.mxu0 %v4151
    %4300 = vmatpush1.bf16.msra.mxu0 %v4150
    %4301 = vmatprep.subr.bf16.mxu0 %v4155
    %4302 = vmatpush1.bf16.msra.mxu0 %v4154
    %4303 = vmatprep.subr.bf16.mxu0 %v4159
    %4304 = vmatpush1.bf16.msra.mxu0 %v4158
    %4305 = vmatprep.subr.bf16.mxu0 %v4163
    %4306 = vmatpush1.bf16.msra.mxu0 %v4162
    %4307 = vmatprep.subr.bf16.mxu0 %v4167
    %4308 = vmatpush1.bf16.msra.mxu0 %v4166
    %4309 = vmatprep.subr.bf16.mxu0 %v4171
    %4310 = vmatpush1.bf16.msra.mxu0 %v4170
    %4311 = vmatprep.subr.bf16.mxu0 %v4175
    %4312 = vmatpush1.bf16.msra.mxu0 %v4174
    %4313 = vmatprep.subr.bf16.mxu0 %v4179
    %4314 = vmatpush1.bf16.msra.mxu0 %v4178
    %4315 = vmatprep.subr.bf16.mxu0 %v4183
    %4316 = vmatpush1.bf16.msra.mxu0 %v4182
    %4317 = vmatprep.subr.bf16.mxu0 %v4187
    %4318 = vmatpush1.bf16.msra.mxu0 %v4186
    %4319 = vmatprep.subr.bf16.mxu0 %v4191
    %4320 = vmatpush1.bf16.msra.mxu0 %v4190
    %4321 = vmatprep.subr.bf16.mxu0 %v4195
    %4322 = vmatpush1.bf16.msra.mxu0 %v4194
    %4323 = vmatprep.subr.bf16.mxu0 %v4199
    %4324 = vmatpush1.bf16.msra.mxu0 %v4198
    %4325 = vmatprep.subr.bf16.mxu0 %v4203
    %4326 = vmatpush1.bf16.msra.mxu0 %v4202
    %4327 = vmatprep.subr.bf16.mxu0 %v4207
    %4328 = vmatpush1.bf16.msra.mxu0 %v4206
    %4329 = vmatprep.subr.bf16.mxu0 %v4211
    %4330 = vmatpush1.bf16.msra.mxu0 %v4210
    %4331 = vmatprep.mubr.bf16.mxu0 %v3955
    %4332 = vmatmul.mubr.bf16.gmra.mrb[0].mxu0 %v3948
    %v4333 = vpop.f32.mrb[0].mxu0
    %v4334 = vadd.f32 %v4282, %v4333
    %v4335 = vpop.f32.mrb[0].mxu0
    %v4336 = vadd.f32 %v4286, %v4335
    %v4337 = vpop.f32.mrb[0].mxu0
    %v4338 = vpop.f32.mrb[0].mxu0
    %4339 = vdwg.mxu0
    %4340 = vmatprep.subr.bf16.mxu0 %v4153
    %4341 = vmatpush1.bf16.msra.mxu0 %v4152
    %4342 = vmatprep.subr.bf16.mxu0 %v4157
    %4343 = vmatpush1.bf16.msra.mxu0 %v4156
    %4344 = vmatprep.subr.bf16.mxu0 %v4161
    %4345 = vmatpush1.bf16.msra.mxu0 %v4160
    %4346 = vmatprep.subr.bf16.mxu0 %v4165
    %4347 = vmatpush1.bf16.msra.mxu0 %v4164
    %4348 = vmatprep.subr.bf16.mxu0 %v4169
    %4349 = vmatpush1.bf16.msra.mxu0 %v4168
    %4350 = vmatprep.subr.bf16.mxu0 %v4173
    %4351 = vmatpush1.bf16.msra.mxu0 %v4172
    %4352 = vmatprep.subr.bf16.mxu0 %v4177
    %4353 = vmatpush1.bf16.msra.mxu0 %v4176
    %4354 = vmatprep.subr.bf16.mxu0 %v4181
    %4355 = vmatpush1.bf16.msra.mxu0 %v4180
    %4356 = vmatprep.subr.bf16.mxu0 %v4185
    %4357 = vmatpush1.bf16.msra.mxu0 %v4184
    %4358 = vmatprep.subr.bf16.mxu0 %v4189
    %4359 = vmatpush1.bf16.msra.mxu0 %v4188
    %4360 = vmatprep.subr.bf16.mxu0 %v4193
    %4361 = vmatpush1.bf16.msra.mxu0 %v4192
    %4362 = vmatprep.subr.bf16.mxu0 %v4197
    %4363 = vmatpush1.bf16.msra.mxu0 %v4196
    %4364 = vmatprep.subr.bf16.mxu0 %v4201
    %4365 = vmatpush1.bf16.msra.mxu0 %v4200
    %4366 = vmatprep.subr.bf16.mxu0 %v4205
    %4367 = vmatpush1.bf16.msra.mxu0 %v4204
    %4368 = vmatprep.subr.bf16.mxu0 %v4209
    %4369 = vmatpush1.bf16.msra.mxu0 %v4208
    %4370 = vmatprep.subr.bf16.mxu0 %v4213
    %4371 = vmatpush1.bf16.msra.mxu0 %v4212
    %4372 = vmatprep.mubr.bf16.mxu0 %v3955
    %4373 = vmatmul.mubr.bf16.gmra.mrb[0].mxu0 %v3948
    %v4374 = vpop.f32.mrb[0].mxu0
    %v4375 = vadd.f32 %v4290, %v4374
    %v4376 = vpop.f32.mrb[0].mxu0
    %v4377 = vadd.f32 %v4294, %v4376
    %v4378 = vpop.f32.mrb[0].mxu0
    %v4379 = vpop.f32.mrb[0].mxu0
    %4380 = vdwg.mxu0
    %v4381 = vxor.u32 %v4334, 2147483648
    %v4382 = vmul.f32 %v4381, 1.442695
    %v4383 = vpow.pop %v4382
    %v4384 = vadd.f32 %v4383, 1.0
    %v4385 = vrcp.pop %v4384
    %v4386 = vmul.f32 1.0, %v4385
    %v4387 = vxor.u32 %v4336, 2147483648
    %v4388 = vmul.f32 %v4387, 1.442695
    %v4389 = vpow.pop %v4388
    %v4390 = vadd.f32 %v4389, 1.0
    %v4391 = vrcp.pop %v4390
    %v4392 = vmul.f32 1.0, %v4391
    %v4393 = vmul.f32 %v4386, %v4377
    %v4394 = vadd.f32 %v4375, %v4393
    %v4395 = vtanh.pop %v4394
    %v4396 = vsub.f32 1.0, %v4392
    %v4397 = vmul.f32 %v4396, %v4395
    %v4398 = vmul.f32 %v4392, %v3854
    %v4399 = vadd.f32 %v4397, %v4398
    %s4400 = scalar_lea.vmem [#allocation8], 7
    %4401 = vst [vmem:[%s4400] sm:$0x1] %v4399
    // Predicated region
    $region22: #{tpu_custom_call.1} parent=1 // pred_check
      _
    $region23: #{tpu_custom_call.1} parent=1 // pred_check_branch
      %4403 = sbr.rel (0) target = $region25
    $region24: #{tpu_custom_call.1} parent=1 // pred_region
      %s4405 = ssub.s32 128, 128
      %4406 = vsyncadd [#allocation7], %s4405
      %s4407 = sshll.u32 [#allocation8], 4
      %s4408 = int_to_ptr.vmem [resolvable:$true] %s4407
      %4413 = dma.vmem_to_hbm [thread:$0]  %s4408, 128, %s5, [#allocation7], 16, 16, 1
    $region25: #{tpu_custom_call.1} parent=1 // pred_fallthru
      _
    // Predicated region
    $region26: #{tpu_custom_call.1} parent=1 // pred_check
      _
    $region27: #{tpu_custom_call.1} parent=1 // pred_check_branch
      %4415 = sbr.rel (0) target = $region29
    $region28: #{tpu_custom_call.1} parent=1 // pred_region
      %4416 = dma.done [#allocation7], 128
    $region29: #{tpu_custom_call.1} parent=1 // pred_fallthru
      _
    %4417 = vsyncpa [#allocation6], 1
    %4418 = vsyncpa [#allocation7], 1

</llo_original>
